<compile_context>
chip_gen: v5e
topology: v5e:2x2
jax: 0.10.0
libtpu: 0.0.40
codegen_flags: <defaults>
</compile_context>

<pallas_src>
import jax
import jax.numpy as jnp
from jax import lax
from jax.experimental import pallas as pl
from jax.experimental.pallas import tpu as pltpu

# ---- configuration: SingleStageModel(com_factor=16, dim=8, out_f_maps=4) ----
#      Mamba(d_model=16, d_state=16, d_conv=4, expand=2) -> d_inner=32, dt_rank=1
DIM     = 8
COM     = 16
BASE    = COM // 8            # 2
OUT_F   = 4
D_MODEL = COM
D_STATE = 16
D_CONV  = 4
EXPAND  = 2
D_INNER = EXPAND * D_MODEL    # 32
DT_RANK = -(-D_MODEL // 16)   # ceil(d_model/16) = 1
BATCH   = 2
SEQ     = 16

F32 = jnp.float32

# ---- raw (module) parameter shapes: weights channel-major, biases as columns --
RAW_SHAPES = {
    "w1": (COM, DIM), "b1": (COM, 1),
    "wc1_0": (BASE, COM), "wc1_1": (BASE, COM), "wc1_2": (BASE, COM), "bc1": (BASE, 1),
    "wc2_0": (BASE, BASE), "wc2_1": (BASE, BASE), "wc2_2": (BASE, BASE), "bc2": (BASE, 1),
    "wc3_0": (BASE, BASE), "wc3_1": (BASE, BASE), "wc3_2": (BASE, BASE), "bc3": (BASE, 1),
    "w1o_a": (COM, COM), "w1o_b": (COM, BASE), "w1o_c": (COM, BASE),
    "w1o_d": (COM, BASE), "b1o": (COM, 1),
    "w_in_x": (D_INNER, D_MODEL), "w_in_z": (D_INNER, D_MODEL),
    "w_cv": (D_INNER, D_CONV), "b_cv": (D_INNER, 1),
    "w_xp_dt": (DT_RANK, D_INNER), "w_xp_B": (D_STATE, D_INNER), "w_xp_C": (D_STATE, D_INNER),
    "w_dt": (D_INNER, DT_RANK), "b_dt": (D_INNER, 1),
    "A": (D_INNER, D_STATE), "Dskip": (D_INNER, 1),
    "w_op": (D_MODEL, D_INNER),
    "w_co": (OUT_F, COM), "b_co": (OUT_F, 1),
}

# ---- packed-slab entries: in_proj and x_proj weights pre-stacked along M -----
# (exact fusion: one matmul each instead of 2/3, no numeric reassociation)
PACK_SHAPES = dict(RAW_SHAPES)
for _n in ("w_in_x", "w_in_z", "w_xp_dt", "w_xp_B", "w_xp_C"):
    del PACK_SHAPES[_n]
PACK_SHAPES["w_inz"] = (2 * D_INNER, D_MODEL)               # [w_in_x ; w_in_z]
PACK_SHAPES["w_xp"]  = (2 * D_STATE + DT_RANK, D_INNER)     # [w_xp_B ; w_xp_C ; w_xp_dt]

# ---- lane-dense slab layout: 4 columns x 32 lanes, 8-row-aligned blocks ------
SLAB_LANES = 128
COL_W = 32
N_COLS = SLAB_LANES // COL_W


def _pad8(r):
    return -(-r // 8) * 8


def _build_layout():
    # first-fit-decreasing into N_COLS columns; stable sort -> deterministic.
    items = sorted(PACK_SHAPES.items(), key=lambda kv: -_pad8(kv[1][0]))
    col_rows = [0] * N_COLS
    layout = {}
    for name, (r, c) in items:
        assert c <= COL_W
        j = min(range(N_COLS), key=lambda k: col_rows[k])
        layout[name] = (col_rows[j], j * COL_W, r, c)      # (row_off, col_off, r, c)
        col_rows[j] += _pad8(r)
    return layout, _pad8(max(col_rows))


LAYOUT, SLAB_ROWS = _build_layout()                         # (136, 128) f32 ~ 70 KB


def pack_params(p):
    q = dict(p)
    q["w_inz"] = jnp.concatenate([p["w_in_x"], p["w_in_z"]], axis=0)
    q["w_xp"] = jnp.concatenate([p["w_xp_B"], p["w_xp_C"], p["w_xp_dt"]], axis=0)
    slab = jnp.zeros((SLAB_ROWS, SLAB_LANES), F32)
    for name, (ro, co, r, c) in LAYOUT.items():
        slab = slab.at[ro:ro + r, co:co + c].set(q[name].astype(F32))
    return slab


# ---------------- shared math helpers (pure jnp; kernel & reference) ----------
def _mm(a, b):
    return jnp.dot(a, b, preferred_element_type=F32)


def _silu(v):
    return v * (1.0 / (1.0 + jnp.exp(-v)))


def _softplus(v):
    return jnp.maximum(v, 0.0) + jnp.log(1.0 + jnp.exp(-jnp.abs(v)))


def _shift_l(v, d):
    # v: (C, L);  returns s with s[:, t] = v[:, t - d], zero padded (static d).
    if d == 0:
        return v
    c, l = v.shape
    z = jnp.zeros((c, abs(d)), v.dtype)
    if d > 0:
        return jnp.concatenate([z, v[:, : l - d]], axis=1)
    return jnp.concatenate([v[:, -d:], z], axis=1)


# ------------------------------ Pallas kernel ---------------------------------
def single_stage_kernel(x_ref, w_ref, o_ref, da_ref):
    # Static slab slicing (row/col offsets are compile-time constants).
    def g(name):
        ro, co, r, c = LAYOUT[name]
        return w_ref[ro:ro + r, co:co + c]

    x = x_ref[0]                                           # (DIM, SEQ)

    # ---- conv_1x1 + dilated TCN convs (k=3, pad=dil) + fused 1x1 -------------
    out0 = _mm(g("w1"), x) + g("b1")                       # (COM, SEQ)

    def dil_conv(v, w0, w1, w2, bias, dil):
        # y[:, t] = W0 x[t-dil] + W1 x[t] + W2 x[t+dil] + b   (zero padded)
        return (_mm(w0, _shift_l(v, dil)) + _mm(w1, v)
                + _mm(w2, _shift_l(v, -dil)) + bias)

    x1 = dil_conv(out0, g("wc1_0"), g("wc1_1"), g("wc1_2"), g("bc1"), 2)
    x2 = dil_conv(x1,   g("wc2_0"), g("wc2_1"), g("wc2_2"), g("bc2"), 4)
    x3 = dil_conv(x2,   g("wc3_0"), g("wc3_1"), g("wc3_2"), g("bc3"), 8)

    # channel concat fused into the 1x1 output conv (split weight)
    feat = (_mm(g("w1o_a"), out0) + _mm(g("w1o_b"), x1)
            + _mm(g("w1o_c"), x2) + _mm(g("w1o_d"), x3) + g("b1o"))   # (D_MODEL, SEQ)

    # ---- Mamba block ---------------------------------------------------------
    # in_proj: x and z paths fused into one stacked matmul (64, SEQ)
    inz = _mm(g("w_inz"), feat)
    xi = inz[:D_INNER]                                     # (D_INNER, SEQ)
    z = inz[D_INNER:]                                      # (D_INNER, SEQ)

    # depthwise causal conv, kernel=4
    wcv = g("w_cv")                                        # (D_INNER, D_CONV)
    conv = wcv[:, D_CONV - 1:D_CONV] * xi                  # tap k=3 (no shift)
    for k in range(D_CONV - 1):
        conv = conv + wcv[:, k:k + 1] * _shift_l(xi, D_CONV - 1 - k)
    x_act = _silu(conv + g("b_cv"))                        # (D_INNER, SEQ)

    # x_proj: B, C and dt fused into one stacked matmul; 8-aligned row slices
    bcd = _mm(g("w_xp"), x_act)                            # (33, SEQ)
    Bm = bcd[:D_STATE]                                     # (D_STATE, SEQ)
    Cm = bcd[D_STATE:2 * D_STATE]                          # (D_STATE, SEQ)
    dtl = bcd[2 * D_STATE:2 * D_STATE + DT_RANK]           # (1, SEQ)

    # dt_proj is rank-1 -> VPU broadcast outer product (no MXU)
    delta = _softplus(g("w_dt") * dtl + g("b_dt"))         # (D_INNER, SEQ)

    A = g("A")                                             # (D_INNER, D_STATE)
    du = delta * x_act                                     # (D_INNER, SEQ)
    Bm_T = Bm.T                                            # (SEQ, D_STATE), one XLU transpose
    Cm_T = Cm.T                                            # (SEQ, D_STATE)

    # ---- hoisted exp: dA for all steps, staged through VMEM (off the h-chain)
    for t in range(SEQ):
        da_ref[t] = jnp.exp(delta[:, t:t + 1] * A)         # (D_INNER, D_STATE)

    # ---- selective scan: pure VPU fma chain, no MXU, no narrow stores --------
    #   h_t = dA_t * h_{t-1} + (dt_t*u_t) (x) B_t ;  y_t = <h_t, C_t>  (XLU reduce)
    lane_t = lax.broadcasted_iota(jnp.int32, (1, SEQ), 1)
    h = jnp.zeros((D_INNER, D_STATE), F32)
    Y = jnp.zeros((D_INNER, SEQ), F32)
    for t in range(SEQ):                                   # SEQ static -> unrolled
        dBu = du[:, t:t + 1] * Bm_T[t:t + 1, :]            # VPU broadcast outer product
        h = da_ref[t] * h + dBu                            # serial chain: load + fma
        y_col = jnp.sum(h * Cm_T[t:t + 1, :], axis=1, keepdims=True)  # XLU reduce, off-chain
        Y = jnp.where(lane_t == t, y_col, Y)               # assemble Y in registers

    y = (Y + g("Dskip") * x_act) * _silu(z)                # (D_INNER, SEQ)
    mo = _mm(g("w_op"), y)                                 # (D_MODEL, SEQ)

    # ---- final conv_out (1x1) ------------------------------------------------
    o_ref[0] = _mm(g("w_co"), mo) + g("b_co")              # (OUT_F, SEQ)


# ------------------------------- wrapper --------------------------------------
def single_stage_forward(x, params):
    # layout: x (B, DIM, SEQ) = PyTorch NCL; returns (B, OUT_F, SEQ).
    b, dim, seq = x.shape
    slab = pack_params(params)                             # single lane-dense weight slab
    return pl.pallas_call(
        single_stage_kernel,
        out_shape=jax.ShapeDtypeStruct((b, OUT_F, seq), F32),
        grid_spec=pltpu.PrefetchScalarGridSpec(
            num_scalar_prefetch=0,
            grid=(b,),
            in_specs=[
                pl.BlockSpec((1, dim, seq), lambda i: (i, 0, 0)),
                pl.BlockSpec((SLAB_ROWS, SLAB_LANES), lambda i: (0, 0)),
            ],
            out_specs=pl.BlockSpec((1, OUT_F, seq), lambda i: (i, 0, 0)),
            scratch_shapes=[pltpu.VMEM((SEQ, D_INNER, D_STATE), F32)],  # staged dA
        ),
        compiler_params=pltpu.CompilerParams(
            dimension_semantics=("parallel",)),            # batch elems independent (2 TCs on v7x)
    )(x, slab)


# ------------------------ deterministic parameter init ------------------------
def init_params(key):
    params = {}
    names = sorted(n for n in RAW_SHAPES if n not in ("A", "Dskip"))
    keys = jax.random.split(key, len(names))
    for k, name in zip(keys, names):
        params[name] = 0.1 * jax.random.normal(k, RAW_SHAPES[name], F32)
    # Mamba S4D-real init: A = -[1..d_state] per channel, D (skip) = 1.
    params["A"] = -jnp.tile(jnp.arange(1, D_STATE + 1, dtype=F32)[None, :], (D_INNER, 1))
    params["Dskip"] = jnp.ones((D_INNER, 1), F32)
    return params


# ------------------------- pure-JAX reference (same math) ---------------------
def _rmm(a, b):
    # full-precision f32 matmul (avoid XLA's default bf16 demotion on TPU)
    return jnp.dot(a, b, precision=lax.Precision.HIGHEST)


def reference_forward(x, p):
    outs = []
    for bi in range(x.shape[0]):
        v = x[bi]
        out0 = _rmm(p["w1"], v) + p["b1"]

        def dconv(u, w0, w1_, w2, bias, dil):
            return (_rmm(w0, _shift_l(u, dil)) + _rmm(w1_, u)
                    + _rmm(w2, _shift_l(u, -dil)) + bias)

        x1 = dconv(out0, p["wc1_0"], p["wc1_1"], p["wc1_2"], p["bc1"], 2)
        x2 = dconv(x1, p["wc2_0"], p["wc2_1"], p["wc2_2"], p["bc2"], 4)
        x3 = dconv(x2, p["wc3_0"], p["wc3_1"], p["wc3_2"], p["bc3"], 8)
        feat = (_rmm(p["w1o_a"], out0) + _rmm(p["w1o_b"], x1) + _rmm(p["w1o_c"], x2)
                + _rmm(p["w1o_d"], x3) + p["b1o"])
        xi = _rmm(p["w_in_x"], feat)
        z = _rmm(p["w_in_z"], feat)
        conv = sum(p["w_cv"][:, k:k + 1] * _shift_l(xi, D_CONV - 1 - k)
                   for k in range(D_CONV)) + p["b_cv"]
        x_act = _silu(conv)
        dtl = _rmm(p["w_xp_dt"], x_act)
        Bm = _rmm(p["w_xp_B"], x_act)
        Cm = _rmm(p["w_xp_C"], x_act)
        delta = _softplus(_rmm(p["w_dt"], dtl) + p["b_dt"])
        A = p["A"]
        h = jnp.zeros((D_INNER, D_STATE), F32)
        ys = []
        for t in range(SEQ):
            dA = jnp.exp(delta[:, t:t + 1] * A)
            dBu = _rmm(delta[:, t:t + 1] * x_act[:, t:t + 1], Bm[:, t:t + 1].T)
            h = dA * h + dBu
            ys.append(_rmm(h, Cm[:, t:t + 1]))
        Y = jnp.concatenate(ys, axis=1)
        y = (Y + p["Dskip"] * x_act) * _silu(z)
        mo = _rmm(p["w_op"], y)
        outs.append(_rmm(p["w_co"], mo) + p["b_co"])
    return jnp.stack(outs, axis=0)


if __name__ == "__main__":
    key = jax.random.PRNGKey(0)
    kx, kp = jax.random.split(key)
    x = jax.random.normal(kx, (BATCH, DIM, SEQ), F32)      # PyTorch NCL layout
    params = init_params(kp)

    out = jax.block_until_ready(single_stage_forward(x, params))
    assert out.shape == (BATCH, OUT_F, SEQ), out.shape

    ref = reference_forward(x, params)
    max_err = float(jnp.max(jnp.abs(out - ref)))
    # 5e-3 gate: headroom for MXU f32-emulation vs XLA HIGHEST-dot rounding on
    # v6e/v7x (review flagged 2e-3 as potentially flaky); the scan is MXU-free.
    assert jnp.allclose(out, ref, rtol=5e-3, atol=5e-3), f"max_err={max_err}"

    print("KERNEL_OK")
</pallas_src>

<mosaic_0001>
module attributes {stable_mosaic.version = 11 : i64} {
  func.func @single_stage_kernel(%arg0: i32, %arg1: memref<1x8x16xf32, #tpu.memory_space<vmem>>, %arg2: memref<136x128xf32, #tpu.memory_space<vmem>>, %arg3: memref<1x4x16xf32, #tpu.memory_space<vmem>>, %arg4: memref<16x32x16xf32, #tpu.memory_space<vmem>>) attributes {dimension_semantics = [#tpu.dimension_semantics<parallel>], iteration_bounds = array<i64: 2>, scalar_prefetch = 0 : i64, scratch_operands = 1 : i64, tpu.core_type = #tpu.core_type<tc>, window_params = [{transform_indices = @transform_0, window_bounds = array<i64: 1, 8, 16>}, {pipeline_mode = #tpu.pipeline_mode<synchronous>, transform_indices = @transform_1, window_bounds = array<i64: 136, 128>}, {transform_indices = @transform_2, window_bounds = array<i64: 1, 4, 16>}]} {
    %c0 = arith.constant 0 : index
    %c0_0 = arith.constant 0 : index
    %c0_1 = arith.constant 0 : index
    %0 = vector.load %arg1[%c0, %c0_0, %c0_1] : memref<1x8x16xf32, #tpu.memory_space<vmem>>, vector<1x8x16xf32>
    %1 = vector.shape_cast %0 : vector<1x8x16xf32> to vector<8x16xf32>
    %c64 = arith.constant 64 : index
    %c64_2 = arith.constant 64 : index
    %2 = vector.load %arg2[%c64, %c64_2] : memref<136x128xf32, #tpu.memory_space<vmem>>, vector<16x8xf32>
    %cst = arith.constant dense<0.000000e+00> : vector<16x16xf32>
    %3 = tpu.matmul %2, %1, %cst {dimension_numbers = #tpu.dot_dimension_numbers<[1], [0], [0], [1], [0, 0, 1, 1], [], []>} : vector<16x8xf32>, vector<8x16xf32>, vector<16x16xf32> -> vector<16x16xf32>
    %c64_3 = arith.constant 64 : index
    %c96 = arith.constant 96 : index
    %4 = vector.load %arg2[%c64_3, %c96] : memref<136x128xf32, #tpu.memory_space<vmem>>, vector<16x1xf32>
    %5 = vector.broadcast %4 : vector<16x1xf32> to vector<16x16xf32>
    %6 = arith.addf %3, %5 : vector<16x16xf32>
    %c96_4 = arith.constant 96 : index
    %c96_5 = arith.constant 96 : index
    %7 = vector.load %arg2[%c96_4, %c96_5] : memref<136x128xf32, #tpu.memory_space<vmem>>, vector<2x16xf32>
    %c104 = arith.constant 104 : index
    %c32 = arith.constant 32 : index
    %8 = vector.load %arg2[%c104, %c32] : memref<136x128xf32, #tpu.memory_space<vmem>>, vector<2x16xf32>
    %c104_6 = arith.constant 104 : index
    %c96_7 = arith.constant 96 : index
    %9 = vector.load %arg2[%c104_6, %c96_7] : memref<136x128xf32, #tpu.memory_space<vmem>>, vector<2x16xf32>
    %c112 = arith.constant 112 : index
    %c0_8 = arith.constant 0 : index
    %10 = vector.load %arg2[%c112, %c0_8] : memref<136x128xf32, #tpu.memory_space<vmem>>, vector<2x1xf32>
    %cst_9 = arith.constant 0.000000e+00 : f32
    %11 = vector.broadcast %cst_9 : f32 to vector<16x2xf32>
    %12 = vector.extract_strided_slice %6 {offsets = [0, 0], sizes = [16, 14], strides = [1, 1]} : vector<16x16xf32> to vector<16x14xf32>
    %13 = tpu.concatenate %11, %12 in 1 : vector<16x2xf32>, vector<16x14xf32> -> vector<16x16xf32>
    %cst_10 = arith.constant dense<0.000000e+00> : vector<2x16xf32>
    %14 = tpu.matmul %7, %13, %cst_10 {dimension_numbers = #tpu.dot_dimension_numbers<[1], [0], [0], [1], [0, 0, 1, 1], [], []>} : vector<2x16xf32>, vector<16x16xf32>, vector<2x16xf32> -> vector<2x16xf32>
    %cst_11 = arith.constant dense<0.000000e+00> : vector<2x16xf32>
    %15 = tpu.matmul %8, %6, %cst_11 {dimension_numbers = #tpu.dot_dimension_numbers<[1], [0], [0], [1], [0, 0, 1, 1], [], []>} : vector<2x16xf32>, vector<16x16xf32>, vector<2x16xf32> -> vector<2x16xf32>
    %16 = arith.addf %14, %15 : vector<2x16xf32>
    %cst_12 = arith.constant 0.000000e+00 : f32
    %17 = vector.broadcast %cst_12 : f32 to vector<16x2xf32>
    %18 = vector.extract_strided_slice %6 {offsets = [0, 2], sizes = [16, 14], strides = [1, 1]} : vector<16x16xf32> to vector<16x14xf32>
    %19 = tpu.concatenate %18, %17 in 1 : vector<16x14xf32>, vector<16x2xf32> -> vector<16x16xf32>
    %cst_13 = arith.constant dense<0.000000e+00> : vector<2x16xf32>
    %20 = tpu.matmul %9, %19, %cst_13 {dimension_numbers = #tpu.dot_dimension_numbers<[1], [0], [0], [1], [0, 0, 1, 1], [], []>} : vector<2x16xf32>, vector<16x16xf32>, vector<2x16xf32> -> vector<2x16xf32>
    %21 = arith.addf %16, %20 : vector<2x16xf32>
    %22 = vector.broadcast %10 : vector<2x1xf32> to vector<2x16xf32>
    %23 = arith.addf %21, %22 : vector<2x16xf32>
    %c112_14 = arith.constant 112 : index
    %c32_15 = arith.constant 32 : index
    %24 = vector.load %arg2[%c112_14, %c32_15] : memref<136x128xf32, #tpu.memory_space<vmem>>, vector<2x2xf32>
    %c112_16 = arith.constant 112 : index
    %c64_17 = arith.constant 64 : index
    %25 = vector.load %arg2[%c112_16, %c64_17] : memref<136x128xf32, #tpu.memory_space<vmem>>, vector<2x2xf32>
    %c112_18 = arith.constant 112 : index
    %c96_19 = arith.constant 96 : index
    %26 = vector.load %arg2[%c112_18, %c96_19] : memref<136x128xf32, #tpu.memory_space<vmem>>, vector<2x2xf32>
    %c120 = arith.constant 120 : index
    %c0_20 = arith.constant 0 : index
    %27 = vector.load %arg2[%c120, %c0_20] : memref<136x128xf32, #tpu.memory_space<vmem>>, vector<2x1xf32>
    %cst_21 = arith.constant 0.000000e+00 : f32
    %28 = vector.broadcast %cst_21 : f32 to vector<2x4xf32>
    %29 = vector.extract_strided_slice %23 {offsets = [0, 0], sizes = [2, 12], strides = [1, 1]} : vector<2x16xf32> to vector<2x12xf32>
    %30 = tpu.concatenate %28, %29 in 1 : vector<2x4xf32>, vector<2x12xf32> -> vector<2x16xf32>
    %cst_22 = arith.constant dense<0.000000e+00> : vector<2x16xf32>
    %31 = tpu.matmul %24, %30, %cst_22 {dimension_numbers = #tpu.dot_dimension_numbers<[1], [0], [0], [1], [0, 0, 1, 1], [], []>} : vector<2x2xf32>, vector<2x16xf32>, vector<2x16xf32> -> vector<2x16xf32>
    %cst_23 = arith.constant dense<0.000000e+00> : vector<2x16xf32>
    %32 = tpu.matmul %25, %23, %cst_23 {dimension_numbers = #tpu.dot_dimension_numbers<[1], [0], [0], [1], [0, 0, 1, 1], [], []>} : vector<2x2xf32>, vector<2x16xf32>, vector<2x16xf32> -> vector<2x16xf32>
    %33 = arith.addf %31, %32 : vector<2x16xf32>
    %cst_24 = arith.constant 0.000000e+00 : f32
    %34 = vector.broadcast %cst_24 : f32 to vector<2x4xf32>
    %35 = vector.extract_strided_slice %23 {offsets = [0, 4], sizes = [2, 12], strides = [1, 1]} : vector<2x16xf32> to vector<2x12xf32>
    %36 = tpu.concatenate %35, %34 in 1 : vector<2x12xf32>, vector<2x4xf32> -> vector<2x16xf32>
    %cst_25 = arith.constant dense<0.000000e+00> : vector<2x16xf32>
    %37 = tpu.matmul %26, %36, %cst_25 {dimension_numbers = #tpu.dot_dimension_numbers<[1], [0], [0], [1], [0, 0, 1, 1], [], []>} : vector<2x2xf32>, vector<2x16xf32>, vector<2x16xf32> -> vector<2x16xf32>
    %38 = arith.addf %33, %37 : vector<2x16xf32>
    %39 = vector.broadcast %27 : vector<2x1xf32> to vector<2x16xf32>
    %40 = arith.addf %38, %39 : vector<2x16xf32>
    %c120_26 = arith.constant 120 : index
    %c32_27 = arith.constant 32 : index
    %41 = vector.load %arg2[%c120_26, %c32_27] : memref<136x128xf32, #tpu.memory_space<vmem>>, vector<2x2xf32>
    %c120_28 = arith.constant 120 : index
    %c64_29 = arith.constant 64 : index
    %42 = vector.load %arg2[%c120_28, %c64_29] : memref<136x128xf32, #tpu.memory_space<vmem>>, vector<2x2xf32>
    %c120_30 = arith.constant 120 : index
    %c96_31 = arith.constant 96 : index
    %43 = vector.load %arg2[%c120_30, %c96_31] : memref<136x128xf32, #tpu.memory_space<vmem>>, vector<2x2xf32>
    %c128 = arith.constant 128 : index
    %c0_32 = arith.constant 0 : index
    %44 = vector.load %arg2[%c128, %c0_32] : memref<136x128xf32, #tpu.memory_space<vmem>>, vector<2x1xf32>
    %cst_33 = arith.constant 0.000000e+00 : f32
    %45 = vector.broadcast %cst_33 : f32 to vector<2x8xf32>
    %46 = vector.extract_strided_slice %40 {offsets = [0, 0], sizes = [2, 8], strides = [1, 1]} : vector<2x16xf32> to vector<2x8xf32>
    %47 = tpu.concatenate %45, %46 in 1 : vector<2x8xf32>, vector<2x8xf32> -> vector<2x16xf32>
    %cst_34 = arith.constant dense<0.000000e+00> : vector<2x16xf32>
    %48 = tpu.matmul %41, %47, %cst_34 {dimension_numbers = #tpu.dot_dimension_numbers<[1], [0], [0], [1], [0, 0, 1, 1], [], []>} : vector<2x2xf32>, vector<2x16xf32>, vector<2x16xf32> -> vector<2x16xf32>
    %cst_35 = arith.constant dense<0.000000e+00> : vector<2x16xf32>
    %49 = tpu.matmul %42, %40, %cst_35 {dimension_numbers = #tpu.dot_dimension_numbers<[1], [0], [0], [1], [0, 0, 1, 1], [], []>} : vector<2x2xf32>, vector<2x16xf32>, vector<2x16xf32> -> vector<2x16xf32>
    %50 = arith.addf %48, %49 : vector<2x16xf32>
    %cst_36 = arith.constant 0.000000e+00 : f32
    %51 = vector.broadcast %cst_36 : f32 to vector<2x8xf32>
    %52 = vector.extract_strided_slice %40 {offsets = [0, 8], sizes = [2, 8], strides = [1, 1]} : vector<2x16xf32> to vector<2x8xf32>
    %53 = tpu.concatenate %52, %51 in 1 : vector<2x8xf32>, vector<2x8xf32> -> vector<2x16xf32>
    %cst_37 = arith.constant dense<0.000000e+00> : vector<2x16xf32>
    %54 = tpu.matmul %43, %53, %cst_37 {dimension_numbers = #tpu.dot_dimension_numbers<[1], [0], [0], [1], [0, 0, 1, 1], [], []>} : vector<2x2xf32>, vector<2x16xf32>, vector<2x16xf32> -> vector<2x16xf32>
    %55 = arith.addf %50, %54 : vector<2x16xf32>
    %56 = vector.broadcast %44 : vector<2x1xf32> to vector<2x16xf32>
    %57 = arith.addf %55, %56 : vector<2x16xf32>
    %c72 = arith.constant 72 : index
    %c32_38 = arith.constant 32 : index
    %58 = vector.load %arg2[%c72, %c32_38] : memref<136x128xf32, #tpu.memory_space<vmem>>, vector<16x16xf32>
    %cst_39 = arith.constant dense<0.000000e+00> : vector<16x16xf32>
    %59 = tpu.matmul %58, %6, %cst_39 {dimension_numbers = #tpu.dot_dimension_numbers<[1], [0], [0], [1], [0, 0, 1, 1], [], []>} : vector<16x16xf32>, vector<16x16xf32>, vector<16x16xf32> -> vector<16x16xf32>
    %c80 = arith.constant 80 : index
    %c64_40 = arith.constant 64 : index
    %60 = vector.load %arg2[%c80, %c64_40] : memref<136x128xf32, #tpu.memory_space<vmem>>, vector<16x2xf32>
    %cst_41 = arith.constant dense<0.000000e+00> : vector<16x16xf32>
    %61 = tpu.matmul %60, %23, %cst_41 {dimension_numbers = #tpu.dot_dimension_numbers<[1], [0], [0], [1], [0, 0, 1, 1], [], []>} : vector<16x2xf32>, vector<2x16xf32>, vector<16x16xf32> -> vector<16x16xf32>
    %62 = arith.addf %59, %61 : vector<16x16xf32>
    %c80_42 = arith.constant 80 : index
    %c96_43 = arith.constant 96 : index
    %63 = vector.load %arg2[%c80_42, %c96_43] : memref<136x128xf32, #tpu.memory_space<vmem>>, vector<16x2xf32>
    %cst_44 = arith.constant dense<0.000000e+00> : vector<16x16xf32>
    %64 = tpu.matmul %63, %40, %cst_44 {dimension_numbers = #tpu.dot_dimension_numbers<[1], [0], [0], [1], [0, 0, 1, 1], [], []>} : vector<16x2xf32>, vector<2x16xf32>, vector<16x16xf32> -> vector<16x16xf32>
    %65 = arith.addf %62, %64 : vector<16x16xf32>
    %c88 = arith.constant 88 : index
    %c32_45 = arith.constant 32 : index
    %66 = vector.load %arg2[%c88, %c32_45] : memref<136x128xf32, #tpu.memory_space<vmem>>, vector<16x2xf32>
    %cst_46 = arith.constant dense<0.000000e+00> : vector<16x16xf32>
    %67 = tpu.matmul %66, %57, %cst_46 {dimension_numbers = #tpu.dot_dimension_numbers<[1], [0], [0], [1], [0, 0, 1, 1], [], []>} : vector<16x2xf32>, vector<2x16xf32>, vector<16x16xf32> -> vector<16x16xf32>
    %68 = arith.addf %65, %67 : vector<16x16xf32>
    %c96_47 = arith.constant 96 : index
    %c0_48 = arith.constant 0 : index
    %69 = vector.load %arg2[%c96_47, %c0_48] : memref<136x128xf32, #tpu.memory_space<vmem>>, vector<16x1xf32>
    %70 = vector.broadcast %69 : vector<16x1xf32> to vector<16x16xf32>
    %71 = arith.addf %68, %70 : vector<16x16xf32>
    %c0_49 = arith.constant 0 : index
    %c0_50 = arith.constant 0 : index
    %72 = vector.load %arg2[%c0_49, %c0_50] : memref<136x128xf32, #tpu.memory_space<vmem>>, vector<64x16xf32>
    %cst_51 = arith.constant dense<0.000000e+00> : vector<64x16xf32>
    %73 = tpu.matmul %72, %71, %cst_51 {dimension_numbers = #tpu.dot_dimension_numbers<[1], [0], [0], [1], [0, 0, 1, 1], [], []>} : vector<64x16xf32>, vector<16x16xf32>, vector<64x16xf32> -> vector<64x16xf32>
    %74 = vector.extract_strided_slice %73 {offsets = [0, 0], sizes = [32, 16], strides = [1, 1]} : vector<64x16xf32> to vector<32x16xf32>
    %75 = vector.extract_strided_slice %73 {offsets = [32, 0], sizes = [32, 16], strides = [1, 1]} : vector<64x16xf32> to vector<32x16xf32>
    %c0_52 = arith.constant 0 : index
    %c64_53 = arith.constant 64 : index
    %76 = vector.load %arg2[%c0_52, %c64_53] : memref<136x128xf32, #tpu.memory_space<vmem>>, vector<32x4xf32>
    %77 = vector.extract_strided_slice %76 {offsets = [0, 3], sizes = [32, 1], strides = [1, 1]} : vector<32x4xf32> to vector<32x1xf32>
    %78 = vector.broadcast %77 : vector<32x1xf32> to vector<32x16xf32>
    %79 = arith.mulf %78, %74 : vector<32x16xf32>
    %80 = vector.extract_strided_slice %76 {offsets = [0, 0], sizes = [32, 1], strides = [1, 1]} : vector<32x4xf32> to vector<32x1xf32>
    %cst_54 = arith.constant 0.000000e+00 : f32
    %81 = vector.broadcast %cst_54 : f32 to vector<32x3xf32>
    %82 = vector.extract_strided_slice %74 {offsets = [0, 0], sizes = [32, 13], strides = [1, 1]} : vector<32x16xf32> to vector<32x13xf32>
    %83 = tpu.concatenate %81, %82 in 1 : vector<32x3xf32>, vector<32x13xf32> -> vector<32x16xf32>
    %84 = vector.broadcast %80 : vector<32x1xf32> to vector<32x16xf32>
    %85 = arith.mulf %84, %83 : vector<32x16xf32>
    %86 = arith.addf %79, %85 : vector<32x16xf32>
    %87 = vector.extract_strided_slice %76 {offsets = [0, 1], sizes = [32, 1], strides = [1, 1]} : vector<32x4xf32> to vector<32x1xf32>
    %cst_55 = arith.constant 0.000000e+00 : f32
    %88 = vector.broadcast %cst_55 : f32 to vector<32x2xf32>
    %89 = vector.extract_strided_slice %74 {offsets = [0, 0], sizes = [32, 14], strides = [1, 1]} : vector<32x16xf32> to vector<32x14xf32>
    %90 = tpu.concatenate %88, %89 in 1 : vector<32x2xf32>, vector<32x14xf32> -> vector<32x16xf32>
    %91 = vector.broadcast %87 : vector<32x1xf32> to vector<32x16xf32>
    %92 = arith.mulf %91, %90 : vector<32x16xf32>
    %93 = arith.addf %86, %92 : vector<32x16xf32>
    %94 = vector.extract_strided_slice %76 {offsets = [0, 2], sizes = [32, 1], strides = [1, 1]} : vector<32x4xf32> to vector<32x1xf32>
    %cst_56 = arith.constant 0.000000e+00 : f32
    %95 = vector.broadcast %cst_56 : f32 to vector<32x1xf32>
    %96 = vector.extract_strided_slice %74 {offsets = [0, 0], sizes = [32, 15], strides = [1, 1]} : vector<32x16xf32> to vector<32x15xf32>
    %97 = tpu.concatenate %95, %96 in 1 : vector<32x1xf32>, vector<32x15xf32> -> vector<32x16xf32>
    %98 = vector.broadcast %94 : vector<32x1xf32> to vector<32x16xf32>
    %99 = arith.mulf %98, %97 : vector<32x16xf32>
    %100 = arith.addf %93, %99 : vector<32x16xf32>
    %c0_57 = arith.constant 0 : index
    %c96_58 = arith.constant 96 : index
    %101 = vector.load %arg2[%c0_57, %c96_58] : memref<136x128xf32, #tpu.memory_space<vmem>>, vector<32x1xf32>
    %102 = vector.broadcast %101 : vector<32x1xf32> to vector<32x16xf32>
    %103 = arith.addf %100, %102 : vector<32x16xf32>
    %cst_59 = arith.constant 0.000000e+00 : f32
    %104 = vector.broadcast %cst_59 : f32 to vector<32x16xf32>
    %105 = arith.subf %104, %103 : vector<32x16xf32>
    %106 = math.exp %105 : vector<32x16xf32>
    %cst_60 = arith.constant 1.000000e+00 : f32
    %107 = vector.broadcast %cst_60 : f32 to vector<32x16xf32>
    %108 = arith.addf %107, %106 : vector<32x16xf32>
    %cst_61 = arith.constant 1.000000e+00 : f32
    %109 = vector.broadcast %cst_61 : f32 to vector<32x16xf32>
    %110 = arith.divf %109, %108 : vector<32x16xf32>
    %111 = arith.mulf %103, %110 : vector<32x16xf32>
    %c0_62 = arith.constant 0 : index
    %c32_63 = arith.constant 32 : index
    %112 = vector.load %arg2[%c0_62, %c32_63] : memref<136x128xf32, #tpu.memory_space<vmem>>, vector<33x32xf32>
    %cst_64 = arith.constant dense<0.000000e+00> : vector<33x16xf32>
    %113 = tpu.matmul %112, %111, %cst_64 {dimension_numbers = #tpu.dot_dimension_numbers<[1], [0], [0], [1], [0, 0, 1, 1], [], []>} : vector<33x32xf32>, vector<32x16xf32>, vector<33x16xf32> -> vector<33x16xf32>
    %114 = vector.extract_strided_slice %113 {offsets = [0, 0], sizes = [16, 16], strides = [1, 1]} : vector<33x16xf32> to vector<16x16xf32>
    %115 = vector.extract_strided_slice %113 {offsets = [16, 0], sizes = [16, 16], strides = [1, 1]} : vector<33x16xf32> to vector<16x16xf32>
    %116 = vector.extract_strided_slice %113 {offsets = [32, 0], sizes = [1, 16], strides = [1, 1]} : vector<33x16xf32> to vector<1x16xf32>
    %c32_65 = arith.constant 32 : index
    %c64_66 = arith.constant 64 : index
    %117 = vector.load %arg2[%c32_65, %c64_66] : memref<136x128xf32, #tpu.memory_space<vmem>>, vector<32x1xf32>
    %118 = vector.broadcast %117 : vector<32x1xf32> to vector<32x16xf32>
    %119 = vector.broadcast %116 : vector<1x16xf32> to vector<32x16xf32>
    %120 = arith.mulf %118, %119 : vector<32x16xf32>
    %c32_67 = arith.constant 32 : index
    %c96_68 = arith.constant 96 : index
    %121 = vector.load %arg2[%c32_67, %c96_68] : memref<136x128xf32, #tpu.memory_space<vmem>>, vector<32x1xf32>
    %122 = vector.broadcast %121 : vector<32x1xf32> to vector<32x16xf32>
    %123 = arith.addf %120, %122 : vector<32x16xf32>
    %cst_69 = arith.constant 0.000000e+00 : f32
    %124 = vector.broadcast %cst_69 : f32 to vector<32x16xf32>
    %125 = arith.maximumf %123, %124 : vector<32x16xf32>
    %126 = math.absf %123 : vector<32x16xf32>
    %cst_70 = arith.constant 0.000000e+00 : f32
    %127 = vector.broadcast %cst_70 : f32 to vector<32x16xf32>
    %128 = arith.subf %127, %126 : vector<32x16xf32>
    %129 = math.exp %128 : vector<32x16xf32>
    %cst_71 = arith.constant 1.000000e+00 : f32
    %130 = vector.broadcast %cst_71 : f32 to vector<32x16xf32>
    %131 = arith.addf %130, %129 : vector<32x16xf32>
    %132 = math.log %131 : vector<32x16xf32>
    %133 = arith.addf %125, %132 : vector<32x16xf32>
    %c40 = arith.constant 40 : index
    %c32_72 = arith.constant 32 : index
    %134 = vector.load %arg2[%c40, %c32_72] : memref<136x128xf32, #tpu.memory_space<vmem>>, vector<32x16xf32>
    %135 = arith.mulf %133, %111 : vector<32x16xf32>
    %136 = tpu.transpose %114, [1, 0] : vector<16x16xf32> -> vector<16x16xf32>
    %137 = tpu.transpose %115, [1, 0] : vector<16x16xf32> -> vector<16x16xf32>
    %138 = vector.extract_strided_slice %133 {offsets = [0, 0], sizes = [32, 1], strides = [1, 1]} : vector<32x16xf32> to vector<32x1xf32>
    %139 = vector.broadcast %138 : vector<32x1xf32> to vector<32x16xf32>
    %140 = arith.mulf %139, %134 : vector<32x16xf32>
    %141 = math.exp %140 : vector<32x16xf32>
    %c0_73 = arith.constant 0 : index
    %c0_74 = arith.constant 0 : index
    %c0_75 = arith.constant 0 : index
    %142 = vector.load %arg4[%c0_73, %c0_74, %c0_75] : memref<16x32x16xf32, #tpu.memory_space<vmem>>, vector<1x32x16xf32>
    %143 = vector.shape_cast %142 : vector<1x32x16xf32> to vector<32x16xf32>
    %144 = vector.shape_cast %141 : vector<32x16xf32> to vector<1x32x16xf32>
    tpu.vector_store %arg4[%c0_73, %c0_74, %c0_75], %144 {strides = array<i32>} : memref<16x32x16xf32, #tpu.memory_space<vmem>>, vector<1x32x16xf32>,
    %145 = vector.extract_strided_slice %133 {offsets = [0, 1], sizes = [32, 1], strides = [1, 1]} : vector<32x16xf32> to vector<32x1xf32>
    %146 = vector.broadcast %145 : vector<32x1xf32> to vector<32x16xf32>
    %147 = arith.mulf %146, %134 : vector<32x16xf32>
    %148 = math.exp %147 : vector<32x16xf32>
    %c1 = arith.constant 1 : index
    %c0_76 = arith.constant 0 : index
    %c0_77 = arith.constant 0 : index
    %149 = vector.load %arg4[%c1, %c0_76, %c0_77] : memref<16x32x16xf32, #tpu.memory_space<vmem>>, vector<1x32x16xf32>
    %150 = vector.shape_cast %149 : vector<1x32x16xf32> to vector<32x16xf32>
    %151 = vector.shape_cast %148 : vector<32x16xf32> to vector<1x32x16xf32>
    tpu.vector_store %arg4[%c1, %c0_76, %c0_77], %151 {strides = array<i32>} : memref<16x32x16xf32, #tpu.memory_space<vmem>>, vector<1x32x16xf32>,
    %152 = vector.extract_strided_slice %133 {offsets = [0, 2], sizes = [32, 1], strides = [1, 1]} : vector<32x16xf32> to vector<32x1xf32>
    %153 = vector.broadcast %152 : vector<32x1xf32> to vector<32x16xf32>
    %154 = arith.mulf %153, %134 : vector<32x16xf32>
    %155 = math.exp %154 : vector<32x16xf32>
    %c2 = arith.constant 2 : index
    %c0_78 = arith.constant 0 : index
    %c0_79 = arith.constant 0 : index
    %156 = vector.load %arg4[%c2, %c0_78, %c0_79] : memref<16x32x16xf32, #tpu.memory_space<vmem>>, vector<1x32x16xf32>
    %157 = vector.shape_cast %156 : vector<1x32x16xf32> to vector<32x16xf32>
    %158 = vector.shape_cast %155 : vector<32x16xf32> to vector<1x32x16xf32>
    tpu.vector_store %arg4[%c2, %c0_78, %c0_79], %158 {strides = array<i32>} : memref<16x32x16xf32, #tpu.memory_space<vmem>>, vector<1x32x16xf32>,
    %159 = vector.extract_strided_slice %133 {offsets = [0, 3], sizes = [32, 1], strides = [1, 1]} : vector<32x16xf32> to vector<32x1xf32>
    %160 = vector.broadcast %159 : vector<32x1xf32> to vector<32x16xf32>
    %161 = arith.mulf %160, %134 : vector<32x16xf32>
    %162 = math.exp %161 : vector<32x16xf32>
    %c3 = arith.constant 3 : index
    %c0_80 = arith.constant 0 : index
    %c0_81 = arith.constant 0 : index
    %163 = vector.load %arg4[%c3, %c0_80, %c0_81] : memref<16x32x16xf32, #tpu.memory_space<vmem>>, vector<1x32x16xf32>
    %164 = vector.shape_cast %163 : vector<1x32x16xf32> to vector<32x16xf32>
    %165 = vector.shape_cast %162 : vector<32x16xf32> to vector<1x32x16xf32>
    tpu.vector_store %arg4[%c3, %c0_80, %c0_81], %165 {strides = array<i32>} : memref<16x32x16xf32, #tpu.memory_space<vmem>>, vector<1x32x16xf32>,
    %166 = vector.extract_strided_slice %133 {offsets = [0, 4], sizes = [32, 1], strides = [1, 1]} : vector<32x16xf32> to vector<32x1xf32>
    %167 = vector.broadcast %166 : vector<32x1xf32> to vector<32x16xf32>
    %168 = arith.mulf %167, %134 : vector<32x16xf32>
    %169 = math.exp %168 : vector<32x16xf32>
    %c4 = arith.constant 4 : index
    %c0_82 = arith.constant 0 : index
    %c0_83 = arith.constant 0 : index
    %170 = vector.load %arg4[%c4, %c0_82, %c0_83] : memref<16x32x16xf32, #tpu.memory_space<vmem>>, vector<1x32x16xf32>
    %171 = vector.shape_cast %170 : vector<1x32x16xf32> to vector<32x16xf32>
    %172 = vector.shape_cast %169 : vector<32x16xf32> to vector<1x32x16xf32>
    tpu.vector_store %arg4[%c4, %c0_82, %c0_83], %172 {strides = array<i32>} : memref<16x32x16xf32, #tpu.memory_space<vmem>>, vector<1x32x16xf32>,
    %173 = vector.extract_strided_slice %133 {offsets = [0, 5], sizes = [32, 1], strides = [1, 1]} : vector<32x16xf32> to vector<32x1xf32>
    %174 = vector.broadcast %173 : vector<32x1xf32> to vector<32x16xf32>
    %175 = arith.mulf %174, %134 : vector<32x16xf32>
    %176 = math.exp %175 : vector<32x16xf32>
    %c5 = arith.constant 5 : index
    %c0_84 = arith.constant 0 : index
    %c0_85 = arith.constant 0 : index
    %177 = vector.load %arg4[%c5, %c0_84, %c0_85] : memref<16x32x16xf32, #tpu.memory_space<vmem>>, vector<1x32x16xf32>
    %178 = vector.shape_cast %177 : vector<1x32x16xf32> to vector<32x16xf32>
    %179 = vector.shape_cast %176 : vector<32x16xf32> to vector<1x32x16xf32>
    tpu.vector_store %arg4[%c5, %c0_84, %c0_85], %179 {strides = array<i32>} : memref<16x32x16xf32, #tpu.memory_space<vmem>>, vector<1x32x16xf32>,
    %180 = vector.extract_strided_slice %133 {offsets = [0, 6], sizes = [32, 1], strides = [1, 1]} : vector<32x16xf32> to vector<32x1xf32>
    %181 = vector.broadcast %180 : vector<32x1xf32> to vector<32x16xf32>
    %182 = arith.mulf %181, %134 : vector<32x16xf32>
    %183 = math.exp %182 : vector<32x16xf32>
    %c6 = arith.constant 6 : index
    %c0_86 = arith.constant 0 : index
    %c0_87 = arith.constant 0 : index
    %184 = vector.load %arg4[%c6, %c0_86, %c0_87] : memref<16x32x16xf32, #tpu.memory_space<vmem>>, vector<1x32x16xf32>
    %185 = vector.shape_cast %184 : vector<1x32x16xf32> to vector<32x16xf32>
    %186 = vector.shape_cast %183 : vector<32x16xf32> to vector<1x32x16xf32>
    tpu.vector_store %arg4[%c6, %c0_86, %c0_87], %186 {strides = array<i32>} : memref<16x32x16xf32, #tpu.memory_space<vmem>>, vector<1x32x16xf32>,
    %187 = vector.extract_strided_slice %133 {offsets = [0, 7], sizes = [32, 1], strides = [1, 1]} : vector<32x16xf32> to vector<32x1xf32>
    %188 = vector.broadcast %187 : vector<32x1xf32> to vector<32x16xf32>
    %189 = arith.mulf %188, %134 : vector<32x16xf32>
    %190 = math.exp %189 : vector<32x16xf32>
    %c7 = arith.constant 7 : index
    %c0_88 = arith.constant 0 : index
    %c0_89 = arith.constant 0 : index
    %191 = vector.load %arg4[%c7, %c0_88, %c0_89] : memref<16x32x16xf32, #tpu.memory_space<vmem>>, vector<1x32x16xf32>
    %192 = vector.shape_cast %191 : vector<1x32x16xf32> to vector<32x16xf32>
    %193 = vector.shape_cast %190 : vector<32x16xf32> to vector<1x32x16xf32>
    tpu.vector_store %arg4[%c7, %c0_88, %c0_89], %193 {strides = array<i32>} : memref<16x32x16xf32, #tpu.memory_space<vmem>>, vector<1x32x16xf32>,
    %194 = vector.extract_strided_slice %133 {offsets = [0, 8], sizes = [32, 1], strides = [1, 1]} : vector<32x16xf32> to vector<32x1xf32>
    %195 = vector.broadcast %194 : vector<32x1xf32> to vector<32x16xf32>
    %196 = arith.mulf %195, %134 : vector<32x16xf32>
    %197 = math.exp %196 : vector<32x16xf32>
    %c8 = arith.constant 8 : index
    %c0_90 = arith.constant 0 : index
    %c0_91 = arith.constant 0 : index
    %198 = vector.load %arg4[%c8, %c0_90, %c0_91] : memref<16x32x16xf32, #tpu.memory_space<vmem>>, vector<1x32x16xf32>
    %199 = vector.shape_cast %198 : vector<1x32x16xf32> to vector<32x16xf32>
    %200 = vector.shape_cast %197 : vector<32x16xf32> to vector<1x32x16xf32>
    tpu.vector_store %arg4[%c8, %c0_90, %c0_91], %200 {strides = array<i32>} : memref<16x32x16xf32, #tpu.memory_space<vmem>>, vector<1x32x16xf32>,
    %201 = vector.extract_strided_slice %133 {offsets = [0, 9], sizes = [32, 1], strides = [1, 1]} : vector<32x16xf32> to vector<32x1xf32>
    %202 = vector.broadcast %201 : vector<32x1xf32> to vector<32x16xf32>
    %203 = arith.mulf %202, %134 : vector<32x16xf32>
    %204 = math.exp %203 : vector<32x16xf32>
    %c9 = arith.constant 9 : index
    %c0_92 = arith.constant 0 : index
    %c0_93 = arith.constant 0 : index
    %205 = vector.load %arg4[%c9, %c0_92, %c0_93] : memref<16x32x16xf32, #tpu.memory_space<vmem>>, vector<1x32x16xf32>
    %206 = vector.shape_cast %205 : vector<1x32x16xf32> to vector<32x16xf32>
    %207 = vector.shape_cast %204 : vector<32x16xf32> to vector<1x32x16xf32>
    tpu.vector_store %arg4[%c9, %c0_92, %c0_93], %207 {strides = array<i32>} : memref<16x32x16xf32, #tpu.memory_space<vmem>>, vector<1x32x16xf32>,
    %208 = vector.extract_strided_slice %133 {offsets = [0, 10], sizes = [32, 1], strides = [1, 1]} : vector<32x16xf32> to vector<32x1xf32>
    %209 = vector.broadcast %208 : vector<32x1xf32> to vector<32x16xf32>
    %210 = arith.mulf %209, %134 : vector<32x16xf32>
    %211 = math.exp %210 : vector<32x16xf32>
    %c10 = arith.constant 10 : index
    %c0_94 = arith.constant 0 : index
    %c0_95 = arith.constant 0 : index
    %212 = vector.load %arg4[%c10, %c0_94, %c0_95] : memref<16x32x16xf32, #tpu.memory_space<vmem>>, vector<1x32x16xf32>
    %213 = vector.shape_cast %212 : vector<1x32x16xf32> to vector<32x16xf32>
    %214 = vector.shape_cast %211 : vector<32x16xf32> to vector<1x32x16xf32>
    tpu.vector_store %arg4[%c10, %c0_94, %c0_95], %214 {strides = array<i32>} : memref<16x32x16xf32, #tpu.memory_space<vmem>>, vector<1x32x16xf32>,
    %215 = vector.extract_strided_slice %133 {offsets = [0, 11], sizes = [32, 1], strides = [1, 1]} : vector<32x16xf32> to vector<32x1xf32>
    %216 = vector.broadcast %215 : vector<32x1xf32> to vector<32x16xf32>
    %217 = arith.mulf %216, %134 : vector<32x16xf32>
    %218 = math.exp %217 : vector<32x16xf32>
    %c11 = arith.constant 11 : index
    %c0_96 = arith.constant 0 : index
    %c0_97 = arith.constant 0 : index
    %219 = vector.load %arg4[%c11, %c0_96, %c0_97] : memref<16x32x16xf32, #tpu.memory_space<vmem>>, vector<1x32x16xf32>
    %220 = vector.shape_cast %219 : vector<1x32x16xf32> to vector<32x16xf32>
    %221 = vector.shape_cast %218 : vector<32x16xf32> to vector<1x32x16xf32>
    tpu.vector_store %arg4[%c11, %c0_96, %c0_97], %221 {strides = array<i32>} : memref<16x32x16xf32, #tpu.memory_space<vmem>>, vector<1x32x16xf32>,
    %222 = vector.extract_strided_slice %133 {offsets = [0, 12], sizes = [32, 1], strides = [1, 1]} : vector<32x16xf32> to vector<32x1xf32>
    %223 = vector.broadcast %222 : vector<32x1xf32> to vector<32x16xf32>
    %224 = arith.mulf %223, %134 : vector<32x16xf32>
    %225 = math.exp %224 : vector<32x16xf32>
    %c12 = arith.constant 12 : index
    %c0_98 = arith.constant 0 : index
    %c0_99 = arith.constant 0 : index
    %226 = vector.load %arg4[%c12, %c0_98, %c0_99] : memref<16x32x16xf32, #tpu.memory_space<vmem>>, vector<1x32x16xf32>
    %227 = vector.shape_cast %226 : vector<1x32x16xf32> to vector<32x16xf32>
    %228 = vector.shape_cast %225 : vector<32x16xf32> to vector<1x32x16xf32>
    tpu.vector_store %arg4[%c12, %c0_98, %c0_99], %228 {strides = array<i32>} : memref<16x32x16xf32, #tpu.memory_space<vmem>>, vector<1x32x16xf32>,
    %229 = vector.extract_strided_slice %133 {offsets = [0, 13], sizes = [32, 1], strides = [1, 1]} : vector<32x16xf32> to vector<32x1xf32>
    %230 = vector.broadcast %229 : vector<32x1xf32> to vector<32x16xf32>
    %231 = arith.mulf %230, %134 : vector<32x16xf32>
    %232 = math.exp %231 : vector<32x16xf32>
    %c13 = arith.constant 13 : index
    %c0_100 = arith.constant 0 : index
    %c0_101 = arith.constant 0 : index
    %233 = vector.load %arg4[%c13, %c0_100, %c0_101] : memref<16x32x16xf32, #tpu.memory_space<vmem>>, vector<1x32x16xf32>
    %234 = vector.shape_cast %233 : vector<1x32x16xf32> to vector<32x16xf32>
    %235 = vector.shape_cast %232 : vector<32x16xf32> to vector<1x32x16xf32>
    tpu.vector_store %arg4[%c13, %c0_100, %c0_101], %235 {strides = array<i32>} : memref<16x32x16xf32, #tpu.memory_space<vmem>>, vector<1x32x16xf32>,
    %236 = vector.extract_strided_slice %133 {offsets = [0, 14], sizes = [32, 1], strides = [1, 1]} : vector<32x16xf32> to vector<32x1xf32>
    %237 = vector.broadcast %236 : vector<32x1xf32> to vector<32x16xf32>
    %238 = arith.mulf %237, %134 : vector<32x16xf32>
    %239 = math.exp %238 : vector<32x16xf32>
    %c14 = arith.constant 14 : index
    %c0_102 = arith.constant 0 : index
    %c0_103 = arith.constant 0 : index
    %240 = vector.load %arg4[%c14, %c0_102, %c0_103] : memref<16x32x16xf32, #tpu.memory_space<vmem>>, vector<1x32x16xf32>
    %241 = vector.shape_cast %240 : vector<1x32x16xf32> to vector<32x16xf32>
    %242 = vector.shape_cast %239 : vector<32x16xf32> to vector<1x32x16xf32>
    tpu.vector_store %arg4[%c14, %c0_102, %c0_103], %242 {strides = array<i32>} : memref<16x32x16xf32, #tpu.memory_space<vmem>>, vector<1x32x16xf32>,
    %243 = vector.extract_strided_slice %133 {offsets = [0, 15], sizes = [32, 1], strides = [1, 1]} : vector<32x16xf32> to vector<32x1xf32>
    %244 = vector.broadcast %243 : vector<32x1xf32> to vector<32x16xf32>
    %245 = arith.mulf %244, %134 : vector<32x16xf32>
    %246 = math.exp %245 : vector<32x16xf32>
    %c15 = arith.constant 15 : index
    %c0_104 = arith.constant 0 : index
    %c0_105 = arith.constant 0 : index
    %247 = vector.load %arg4[%c15, %c0_104, %c0_105] : memref<16x32x16xf32, #tpu.memory_space<vmem>>, vector<1x32x16xf32>
    %248 = vector.shape_cast %247 : vector<1x32x16xf32> to vector<32x16xf32>
    %249 = vector.shape_cast %246 : vector<32x16xf32> to vector<1x32x16xf32>
    tpu.vector_store %arg4[%c15, %c0_104, %c0_105], %249 {strides = array<i32>} : memref<16x32x16xf32, #tpu.memory_space<vmem>>, vector<1x32x16xf32>,
    %250 = tpu.iota {dimensions = array<i32: 1>} : vector<1x16xi32>
    %cst_106 = arith.constant 0.000000e+00 : f32
    %251 = vector.broadcast %cst_106 : f32 to vector<32x16xf32>
    %cst_107 = arith.constant 0.000000e+00 : f32
    %252 = vector.broadcast %cst_107 : f32 to vector<32x16xf32>
    %253 = vector.extract_strided_slice %135 {offsets = [0, 0], sizes = [32, 1], strides = [1, 1]} : vector<32x16xf32> to vector<32x1xf32>
    %254 = vector.extract_strided_slice %136 {offsets = [0, 0], sizes = [1, 16], strides = [1, 1]} : vector<16x16xf32> to vector<1x16xf32>
    %255 = vector.broadcast %253 : vector<32x1xf32> to vector<32x16xf32>
    %256 = vector.broadcast %254 : vector<1x16xf32> to vector<32x16xf32>
    %257 = arith.mulf %255, %256 : vector<32x16xf32>
    %c0_108 = arith.constant 0 : index
    %c0_109 = arith.constant 0 : index
    %c0_110 = arith.constant 0 : index
    %258 = vector.load %arg4[%c0_108, %c0_109, %c0_110] : memref<16x32x16xf32, #tpu.memory_space<vmem>>, vector<1x32x16xf32>
    %259 = vector.shape_cast %258 : vector<1x32x16xf32> to vector<32x16xf32>
    %260 = arith.mulf %259, %251 : vector<32x16xf32>
    %261 = arith.addf %260, %257 : vector<32x16xf32>
    %262 = vector.extract_strided_slice %137 {offsets = [0, 0], sizes = [1, 16], strides = [1, 1]} : vector<16x16xf32> to vector<1x16xf32>
    %263 = vector.broadcast %262 : vector<1x16xf32> to vector<32x16xf32>
    %264 = arith.mulf %261, %263 : vector<32x16xf32>
    %cst_111 = arith.constant dense<0.000000e+00> : vector<32xf32>
    %265 = vector.multi_reduction <add>, %264, %cst_111 [1] : vector<32x16xf32> to vector<32xf32>
    %266 = vector.shape_cast %265 : vector<32xf32> to vector<32x1xf32>
    %c0_i32 = arith.constant 0 : i32
    %267 = vector.broadcast %c0_i32 : i32 to vector<1x16xi32>
    %268 = arith.cmpi eq, %250, %267 : vector<1x16xi32>
    %269 = vector.shape_cast %268 : vector<1x16xi1> to vector<1x16xi1>
    %270 = vector.broadcast %269 : vector<1x16xi1> to vector<32x16xi1>
    %271 = vector.shape_cast %266 : vector<32x1xf32> to vector<32x1xf32>
    %272 = vector.broadcast %271 : vector<32x1xf32> to vector<32x16xf32>
    %273 = arith.select %270, %272, %252 : vector<32x16xi1>, vector<32x16xf32>
    %274 = vector.extract_strided_slice %135 {offsets = [0, 1], sizes = [32, 1], strides = [1, 1]} : vector<32x16xf32> to vector<32x1xf32>
    %275 = vector.extract_strided_slice %136 {offsets = [1, 0], sizes = [1, 16], strides = [1, 1]} : vector<16x16xf32> to vector<1x16xf32>
    %276 = vector.broadcast %274 : vector<32x1xf32> to vector<32x16xf32>
    %277 = vector.broadcast %275 : vector<1x16xf32> to vector<32x16xf32>
    %278 = arith.mulf %276, %277 : vector<32x16xf32>
    %c1_112 = arith.constant 1 : index
    %c0_113 = arith.constant 0 : index
    %c0_114 = arith.constant 0 : index
    %279 = vector.load %arg4[%c1_112, %c0_113, %c0_114] : memref<16x32x16xf32, #tpu.memory_space<vmem>>, vector<1x32x16xf32>
    %280 = vector.shape_cast %279 : vector<1x32x16xf32> to vector<32x16xf32>
    %281 = arith.mulf %280, %261 : vector<32x16xf32>
    %282 = arith.addf %281, %278 : vector<32x16xf32>
    %283 = vector.extract_strided_slice %137 {offsets = [1, 0], sizes = [1, 16], strides = [1, 1]} : vector<16x16xf32> to vector<1x16xf32>
    %284 = vector.broadcast %283 : vector<1x16xf32> to vector<32x16xf32>
    %285 = arith.mulf %282, %284 : vector<32x16xf32>
    %cst_115 = arith.constant dense<0.000000e+00> : vector<32xf32>
    %286 = vector.multi_reduction <add>, %285, %cst_115 [1] : vector<32x16xf32> to vector<32xf32>
    %287 = vector.shape_cast %286 : vector<32xf32> to vector<32x1xf32>
    %c1_i32 = arith.constant 1 : i32
    %288 = vector.broadcast %c1_i32 : i32 to vector<1x16xi32>
    %289 = arith.cmpi eq, %250, %288 : vector<1x16xi32>
    %290 = vector.shape_cast %289 : vector<1x16xi1> to vector<1x16xi1>
    %291 = vector.broadcast %290 : vector<1x16xi1> to vector<32x16xi1>
    %292 = vector.shape_cast %287 : vector<32x1xf32> to vector<32x1xf32>
    %293 = vector.broadcast %292 : vector<32x1xf32> to vector<32x16xf32>
    %294 = arith.select %291, %293, %273 : vector<32x16xi1>, vector<32x16xf32>
    %295 = vector.extract_strided_slice %135 {offsets = [0, 2], sizes = [32, 1], strides = [1, 1]} : vector<32x16xf32> to vector<32x1xf32>
    %296 = vector.extract_strided_slice %136 {offsets = [2, 0], sizes = [1, 16], strides = [1, 1]} : vector<16x16xf32> to vector<1x16xf32>
    %297 = vector.broadcast %295 : vector<32x1xf32> to vector<32x16xf32>
    %298 = vector.broadcast %296 : vector<1x16xf32> to vector<32x16xf32>
    %299 = arith.mulf %297, %298 : vector<32x16xf32>
    %c2_116 = arith.constant 2 : index
    %c0_117 = arith.constant 0 : index
    %c0_118 = arith.constant 0 : index
    %300 = vector.load %arg4[%c2_116, %c0_117, %c0_118] : memref<16x32x16xf32, #tpu.memory_space<vmem>>, vector<1x32x16xf32>
    %301 = vector.shape_cast %300 : vector<1x32x16xf32> to vector<32x16xf32>
    %302 = arith.mulf %301, %282 : vector<32x16xf32>
    %303 = arith.addf %302, %299 : vector<32x16xf32>
    %304 = vector.extract_strided_slice %137 {offsets = [2, 0], sizes = [1, 16], strides = [1, 1]} : vector<16x16xf32> to vector<1x16xf32>
    %305 = vector.broadcast %304 : vector<1x16xf32> to vector<32x16xf32>
    %306 = arith.mulf %303, %305 : vector<32x16xf32>
    %cst_119 = arith.constant dense<0.000000e+00> : vector<32xf32>
    %307 = vector.multi_reduction <add>, %306, %cst_119 [1] : vector<32x16xf32> to vector<32xf32>
    %308 = vector.shape_cast %307 : vector<32xf32> to vector<32x1xf32>
    %c2_i32 = arith.constant 2 : i32
    %309 = vector.broadcast %c2_i32 : i32 to vector<1x16xi32>
    %310 = arith.cmpi eq, %250, %309 : vector<1x16xi32>
    %311 = vector.shape_cast %310 : vector<1x16xi1> to vector<1x16xi1>
    %312 = vector.broadcast %311 : vector<1x16xi1> to vector<32x16xi1>
    %313 = vector.shape_cast %308 : vector<32x1xf32> to vector<32x1xf32>
    %314 = vector.broadcast %313 : vector<32x1xf32> to vector<32x16xf32>
    %315 = arith.select %312, %314, %294 : vector<32x16xi1>, vector<32x16xf32>
    %316 = vector.extract_strided_slice %135 {offsets = [0, 3], sizes = [32, 1], strides = [1, 1]} : vector<32x16xf32> to vector<32x1xf32>
    %317 = vector.extract_strided_slice %136 {offsets = [3, 0], sizes = [1, 16], strides = [1, 1]} : vector<16x16xf32> to vector<1x16xf32>
    %318 = vector.broadcast %316 : vector<32x1xf32> to vector<32x16xf32>
    %319 = vector.broadcast %317 : vector<1x16xf32> to vector<32x16xf32>
    %320 = arith.mulf %318, %319 : vector<32x16xf32>
    %c3_120 = arith.constant 3 : index
    %c0_121 = arith.constant 0 : index
    %c0_122 = arith.constant 0 : index
    %321 = vector.load %arg4[%c3_120, %c0_121, %c0_122] : memref<16x32x16xf32, #tpu.memory_space<vmem>>, vector<1x32x16xf32>
    %322 = vector.shape_cast %321 : vector<1x32x16xf32> to vector<32x16xf32>
    %323 = arith.mulf %322, %303 : vector<32x16xf32>
    %324 = arith.addf %323, %320 : vector<32x16xf32>
    %325 = vector.extract_strided_slice %137 {offsets = [3, 0], sizes = [1, 16], strides = [1, 1]} : vector<16x16xf32> to vector<1x16xf32>
    %326 = vector.broadcast %325 : vector<1x16xf32> to vector<32x16xf32>
    %327 = arith.mulf %324, %326 : vector<32x16xf32>
    %cst_123 = arith.constant dense<0.000000e+00> : vector<32xf32>
    %328 = vector.multi_reduction <add>, %327, %cst_123 [1] : vector<32x16xf32> to vector<32xf32>
    %329 = vector.shape_cast %328 : vector<32xf32> to vector<32x1xf32>
    %c3_i32 = arith.constant 3 : i32
    %330 = vector.broadcast %c3_i32 : i32 to vector<1x16xi32>
    %331 = arith.cmpi eq, %250, %330 : vector<1x16xi32>
    %332 = vector.shape_cast %331 : vector<1x16xi1> to vector<1x16xi1>
    %333 = vector.broadcast %332 : vector<1x16xi1> to vector<32x16xi1>
    %334 = vector.shape_cast %329 : vector<32x1xf32> to vector<32x1xf32>
    %335 = vector.broadcast %334 : vector<32x1xf32> to vector<32x16xf32>
    %336 = arith.select %333, %335, %315 : vector<32x16xi1>, vector<32x16xf32>
    %337 = vector.extract_strided_slice %135 {offsets = [0, 4], sizes = [32, 1], strides = [1, 1]} : vector<32x16xf32> to vector<32x1xf32>
    %338 = vector.extract_strided_slice %136 {offsets = [4, 0], sizes = [1, 16], strides = [1, 1]} : vector<16x16xf32> to vector<1x16xf32>
    %339 = vector.broadcast %337 : vector<32x1xf32> to vector<32x16xf32>
    %340 = vector.broadcast %338 : vector<1x16xf32> to vector<32x16xf32>
    %341 = arith.mulf %339, %340 : vector<32x16xf32>
    %c4_124 = arith.constant 4 : index
    %c0_125 = arith.constant 0 : index
    %c0_126 = arith.constant 0 : index
    %342 = vector.load %arg4[%c4_124, %c0_125, %c0_126] : memref<16x32x16xf32, #tpu.memory_space<vmem>>, vector<1x32x16xf32>
    %343 = vector.shape_cast %342 : vector<1x32x16xf32> to vector<32x16xf32>
    %344 = arith.mulf %343, %324 : vector<32x16xf32>
    %345 = arith.addf %344, %341 : vector<32x16xf32>
    %346 = vector.extract_strided_slice %137 {offsets = [4, 0], sizes = [1, 16], strides = [1, 1]} : vector<16x16xf32> to vector<1x16xf32>
    %347 = vector.broadcast %346 : vector<1x16xf32> to vector<32x16xf32>
    %348 = arith.mulf %345, %347 : vector<32x16xf32>
    %cst_127 = arith.constant dense<0.000000e+00> : vector<32xf32>
    %349 = vector.multi_reduction <add>, %348, %cst_127 [1] : vector<32x16xf32> to vector<32xf32>
    %350 = vector.shape_cast %349 : vector<32xf32> to vector<32x1xf32>
    %c4_i32 = arith.constant 4 : i32
    %351 = vector.broadcast %c4_i32 : i32 to vector<1x16xi32>
    %352 = arith.cmpi eq, %250, %351 : vector<1x16xi32>
    %353 = vector.shape_cast %352 : vector<1x16xi1> to vector<1x16xi1>
    %354 = vector.broadcast %353 : vector<1x16xi1> to vector<32x16xi1>
    %355 = vector.shape_cast %350 : vector<32x1xf32> to vector<32x1xf32>
    %356 = vector.broadcast %355 : vector<32x1xf32> to vector<32x16xf32>
    %357 = arith.select %354, %356, %336 : vector<32x16xi1>, vector<32x16xf32>
    %358 = vector.extract_strided_slice %135 {offsets = [0, 5], sizes = [32, 1], strides = [1, 1]} : vector<32x16xf32> to vector<32x1xf32>
    %359 = vector.extract_strided_slice %136 {offsets = [5, 0], sizes = [1, 16], strides = [1, 1]} : vector<16x16xf32> to vector<1x16xf32>
    %360 = vector.broadcast %358 : vector<32x1xf32> to vector<32x16xf32>
    %361 = vector.broadcast %359 : vector<1x16xf32> to vector<32x16xf32>
    %362 = arith.mulf %360, %361 : vector<32x16xf32>
    %c5_128 = arith.constant 5 : index
    %c0_129 = arith.constant 0 : index
    %c0_130 = arith.constant 0 : index
    %363 = vector.load %arg4[%c5_128, %c0_129, %c0_130] : memref<16x32x16xf32, #tpu.memory_space<vmem>>, vector<1x32x16xf32>
    %364 = vector.shape_cast %363 : vector<1x32x16xf32> to vector<32x16xf32>
    %365 = arith.mulf %364, %345 : vector<32x16xf32>
    %366 = arith.addf %365, %362 : vector<32x16xf32>
    %367 = vector.extract_strided_slice %137 {offsets = [5, 0], sizes = [1, 16], strides = [1, 1]} : vector<16x16xf32> to vector<1x16xf32>
    %368 = vector.broadcast %367 : vector<1x16xf32> to vector<32x16xf32>
    %369 = arith.mulf %366, %368 : vector<32x16xf32>
    %cst_131 = arith.constant dense<0.000000e+00> : vector<32xf32>
    %370 = vector.multi_reduction <add>, %369, %cst_131 [1] : vector<32x16xf32> to vector<32xf32>
    %371 = vector.shape_cast %370 : vector<32xf32> to vector<32x1xf32>
    %c5_i32 = arith.constant 5 : i32
    %372 = vector.broadcast %c5_i32 : i32 to vector<1x16xi32>
    %373 = arith.cmpi eq, %250, %372 : vector<1x16xi32>
    %374 = vector.shape_cast %373 : vector<1x16xi1> to vector<1x16xi1>
    %375 = vector.broadcast %374 : vector<1x16xi1> to vector<32x16xi1>
    %376 = vector.shape_cast %371 : vector<32x1xf32> to vector<32x1xf32>
    %377 = vector.broadcast %376 : vector<32x1xf32> to vector<32x16xf32>
    %378 = arith.select %375, %377, %357 : vector<32x16xi1>, vector<32x16xf32>
    %379 = vector.extract_strided_slice %135 {offsets = [0, 6], sizes = [32, 1], strides = [1, 1]} : vector<32x16xf32> to vector<32x1xf32>
    %380 = vector.extract_strided_slice %136 {offsets = [6, 0], sizes = [1, 16], strides = [1, 1]} : vector<16x16xf32> to vector<1x16xf32>
    %381 = vector.broadcast %379 : vector<32x1xf32> to vector<32x16xf32>
    %382 = vector.broadcast %380 : vector<1x16xf32> to vector<32x16xf32>
    %383 = arith.mulf %381, %382 : vector<32x16xf32>
    %c6_132 = arith.constant 6 : index
    %c0_133 = arith.constant 0 : index
    %c0_134 = arith.constant 0 : index
    %384 = vector.load %arg4[%c6_132, %c0_133, %c0_134] : memref<16x32x16xf32, #tpu.memory_space<vmem>>, vector<1x32x16xf32>
    %385 = vector.shape_cast %384 : vector<1x32x16xf32> to vector<32x16xf32>
    %386 = arith.mulf %385, %366 : vector<32x16xf32>
    %387 = arith.addf %386, %383 : vector<32x16xf32>
    %388 = vector.extract_strided_slice %137 {offsets = [6, 0], sizes = [1, 16], strides = [1, 1]} : vector<16x16xf32> to vector<1x16xf32>
    %389 = vector.broadcast %388 : vector<1x16xf32> to vector<32x16xf32>
    %390 = arith.mulf %387, %389 : vector<32x16xf32>
    %cst_135 = arith.constant dense<0.000000e+00> : vector<32xf32>
    %391 = vector.multi_reduction <add>, %390, %cst_135 [1] : vector<32x16xf32> to vector<32xf32>
    %392 = vector.shape_cast %391 : vector<32xf32> to vector<32x1xf32>
    %c6_i32 = arith.constant 6 : i32
    %393 = vector.broadcast %c6_i32 : i32 to vector<1x16xi32>
    %394 = arith.cmpi eq, %250, %393 : vector<1x16xi32>
    %395 = vector.shape_cast %394 : vector<1x16xi1> to vector<1x16xi1>
    %396 = vector.broadcast %395 : vector<1x16xi1> to vector<32x16xi1>
    %397 = vector.shape_cast %392 : vector<32x1xf32> to vector<32x1xf32>
    %398 = vector.broadcast %397 : vector<32x1xf32> to vector<32x16xf32>
    %399 = arith.select %396, %398, %378 : vector<32x16xi1>, vector<32x16xf32>
    %400 = vector.extract_strided_slice %135 {offsets = [0, 7], sizes = [32, 1], strides = [1, 1]} : vector<32x16xf32> to vector<32x1xf32>
    %401 = vector.extract_strided_slice %136 {offsets = [7, 0], sizes = [1, 16], strides = [1, 1]} : vector<16x16xf32> to vector<1x16xf32>
    %402 = vector.broadcast %400 : vector<32x1xf32> to vector<32x16xf32>
    %403 = vector.broadcast %401 : vector<1x16xf32> to vector<32x16xf32>
    %404 = arith.mulf %402, %403 : vector<32x16xf32>
    %c7_136 = arith.constant 7 : index
    %c0_137 = arith.constant 0 : index
    %c0_138 = arith.constant 0 : index
    %405 = vector.load %arg4[%c7_136, %c0_137, %c0_138] : memref<16x32x16xf32, #tpu.memory_space<vmem>>, vector<1x32x16xf32>
    %406 = vector.shape_cast %405 : vector<1x32x16xf32> to vector<32x16xf32>
    %407 = arith.mulf %406, %387 : vector<32x16xf32>
    %408 = arith.addf %407, %404 : vector<32x16xf32>
    %409 = vector.extract_strided_slice %137 {offsets = [7, 0], sizes = [1, 16], strides = [1, 1]} : vector<16x16xf32> to vector<1x16xf32>
    %410 = vector.broadcast %409 : vector<1x16xf32> to vector<32x16xf32>
    %411 = arith.mulf %408, %410 : vector<32x16xf32>
    %cst_139 = arith.constant dense<0.000000e+00> : vector<32xf32>
    %412 = vector.multi_reduction <add>, %411, %cst_139 [1] : vector<32x16xf32> to vector<32xf32>
    %413 = vector.shape_cast %412 : vector<32xf32> to vector<32x1xf32>
    %c7_i32 = arith.constant 7 : i32
    %414 = vector.broadcast %c7_i32 : i32 to vector<1x16xi32>
    %415 = arith.cmpi eq, %250, %414 : vector<1x16xi32>
    %416 = vector.shape_cast %415 : vector<1x16xi1> to vector<1x16xi1>
    %417 = vector.broadcast %416 : vector<1x16xi1> to vector<32x16xi1>
    %418 = vector.shape_cast %413 : vector<32x1xf32> to vector<32x1xf32>
    %419 = vector.broadcast %418 : vector<32x1xf32> to vector<32x16xf32>
    %420 = arith.select %417, %419, %399 : vector<32x16xi1>, vector<32x16xf32>
    %421 = vector.extract_strided_slice %135 {offsets = [0, 8], sizes = [32, 1], strides = [1, 1]} : vector<32x16xf32> to vector<32x1xf32>
    %422 = vector.extract_strided_slice %136 {offsets = [8, 0], sizes = [1, 16], strides = [1, 1]} : vector<16x16xf32> to vector<1x16xf32>
    %423 = vector.broadcast %421 : vector<32x1xf32> to vector<32x16xf32>
    %424 = vector.broadcast %422 : vector<1x16xf32> to vector<32x16xf32>
    %425 = arith.mulf %423, %424 : vector<32x16xf32>
    %c8_140 = arith.constant 8 : index
    %c0_141 = arith.constant 0 : index
    %c0_142 = arith.constant 0 : index
    %426 = vector.load %arg4[%c8_140, %c0_141, %c0_142] : memref<16x32x16xf32, #tpu.memory_space<vmem>>, vector<1x32x16xf32>
    %427 = vector.shape_cast %426 : vector<1x32x16xf32> to vector<32x16xf32>
    %428 = arith.mulf %427, %408 : vector<32x16xf32>
    %429 = arith.addf %428, %425 : vector<32x16xf32>
    %430 = vector.extract_strided_slice %137 {offsets = [8, 0], sizes = [1, 16], strides = [1, 1]} : vector<16x16xf32> to vector<1x16xf32>
    %431 = vector.broadcast %430 : vector<1x16xf32> to vector<32x16xf32>
    %432 = arith.mulf %429, %431 : vector<32x16xf32>
    %cst_143 = arith.constant dense<0.000000e+00> : vector<32xf32>
    %433 = vector.multi_reduction <add>, %432, %cst_143 [1] : vector<32x16xf32> to vector<32xf32>
    %434 = vector.shape_cast %433 : vector<32xf32> to vector<32x1xf32>
    %c8_i32 = arith.constant 8 : i32
    %435 = vector.broadcast %c8_i32 : i32 to vector<1x16xi32>
    %436 = arith.cmpi eq, %250, %435 : vector<1x16xi32>
    %437 = vector.shape_cast %436 : vector<1x16xi1> to vector<1x16xi1>
    %438 = vector.broadcast %437 : vector<1x16xi1> to vector<32x16xi1>
    %439 = vector.shape_cast %434 : vector<32x1xf32> to vector<32x1xf32>
    %440 = vector.broadcast %439 : vector<32x1xf32> to vector<32x16xf32>
    %441 = arith.select %438, %440, %420 : vector<32x16xi1>, vector<32x16xf32>
    %442 = vector.extract_strided_slice %135 {offsets = [0, 9], sizes = [32, 1], strides = [1, 1]} : vector<32x16xf32> to vector<32x1xf32>
    %443 = vector.extract_strided_slice %136 {offsets = [9, 0], sizes = [1, 16], strides = [1, 1]} : vector<16x16xf32> to vector<1x16xf32>
    %444 = vector.broadcast %442 : vector<32x1xf32> to vector<32x16xf32>
    %445 = vector.broadcast %443 : vector<1x16xf32> to vector<32x16xf32>
    %446 = arith.mulf %444, %445 : vector<32x16xf32>
    %c9_144 = arith.constant 9 : index
    %c0_145 = arith.constant 0 : index
    %c0_146 = arith.constant 0 : index
    %447 = vector.load %arg4[%c9_144, %c0_145, %c0_146] : memref<16x32x16xf32, #tpu.memory_space<vmem>>, vector<1x32x16xf32>
    %448 = vector.shape_cast %447 : vector<1x32x16xf32> to vector<32x16xf32>
    %449 = arith.mulf %448, %429 : vector<32x16xf32>
    %450 = arith.addf %449, %446 : vector<32x16xf32>
    %451 = vector.extract_strided_slice %137 {offsets = [9, 0], sizes = [1, 16], strides = [1, 1]} : vector<16x16xf32> to vector<1x16xf32>
    %452 = vector.broadcast %451 : vector<1x16xf32> to vector<32x16xf32>
    %453 = arith.mulf %450, %452 : vector<32x16xf32>
    %cst_147 = arith.constant dense<0.000000e+00> : vector<32xf32>
    %454 = vector.multi_reduction <add>, %453, %cst_147 [1] : vector<32x16xf32> to vector<32xf32>
    %455 = vector.shape_cast %454 : vector<32xf32> to vector<32x1xf32>
    %c9_i32 = arith.constant 9 : i32
    %456 = vector.broadcast %c9_i32 : i32 to vector<1x16xi32>
    %457 = arith.cmpi eq, %250, %456 : vector<1x16xi32>
    %458 = vector.shape_cast %457 : vector<1x16xi1> to vector<1x16xi1>
    %459 = vector.broadcast %458 : vector<1x16xi1> to vector<32x16xi1>
    %460 = vector.shape_cast %455 : vector<32x1xf32> to vector<32x1xf32>
    %461 = vector.broadcast %460 : vector<32x1xf32> to vector<32x16xf32>
    %462 = arith.select %459, %461, %441 : vector<32x16xi1>, vector<32x16xf32>
    %463 = vector.extract_strided_slice %135 {offsets = [0, 10], sizes = [32, 1], strides = [1, 1]} : vector<32x16xf32> to vector<32x1xf32>
    %464 = vector.extract_strided_slice %136 {offsets = [10, 0], sizes = [1, 16], strides = [1, 1]} : vector<16x16xf32> to vector<1x16xf32>
    %465 = vector.broadcast %463 : vector<32x1xf32> to vector<32x16xf32>
    %466 = vector.broadcast %464 : vector<1x16xf32> to vector<32x16xf32>
    %467 = arith.mulf %465, %466 : vector<32x16xf32>
    %c10_148 = arith.constant 10 : index
    %c0_149 = arith.constant 0 : index
    %c0_150 = arith.constant 0 : index
    %468 = vector.load %arg4[%c10_148, %c0_149, %c0_150] : memref<16x32x16xf32, #tpu.memory_space<vmem>>, vector<1x32x16xf32>
    %469 = vector.shape_cast %468 : vector<1x32x16xf32> to vector<32x16xf32>
    %470 = arith.mulf %469, %450 : vector<32x16xf32>
    %471 = arith.addf %470, %467 : vector<32x16xf32>
    %472 = vector.extract_strided_slice %137 {offsets = [10, 0], sizes = [1, 16], strides = [1, 1]} : vector<16x16xf32> to vector<1x16xf32>
    %473 = vector.broadcast %472 : vector<1x16xf32> to vector<32x16xf32>
    %474 = arith.mulf %471, %473 : vector<32x16xf32>
    %cst_151 = arith.constant dense<0.000000e+00> : vector<32xf32>
    %475 = vector.multi_reduction <add>, %474, %cst_151 [1] : vector<32x16xf32> to vector<32xf32>
    %476 = vector.shape_cast %475 : vector<32xf32> to vector<32x1xf32>
    %c10_i32 = arith.constant 10 : i32
    %477 = vector.broadcast %c10_i32 : i32 to vector<1x16xi32>
    %478 = arith.cmpi eq, %250, %477 : vector<1x16xi32>
    %479 = vector.shape_cast %478 : vector<1x16xi1> to vector<1x16xi1>
    %480 = vector.broadcast %479 : vector<1x16xi1> to vector<32x16xi1>
    %481 = vector.shape_cast %476 : vector<32x1xf32> to vector<32x1xf32>
    %482 = vector.broadcast %481 : vector<32x1xf32> to vector<32x16xf32>
    %483 = arith.select %480, %482, %462 : vector<32x16xi1>, vector<32x16xf32>
    %484 = vector.extract_strided_slice %135 {offsets = [0, 11], sizes = [32, 1], strides = [1, 1]} : vector<32x16xf32> to vector<32x1xf32>
    %485 = vector.extract_strided_slice %136 {offsets = [11, 0], sizes = [1, 16], strides = [1, 1]} : vector<16x16xf32> to vector<1x16xf32>
    %486 = vector.broadcast %484 : vector<32x1xf32> to vector<32x16xf32>
    %487 = vector.broadcast %485 : vector<1x16xf32> to vector<32x16xf32>
    %488 = arith.mulf %486, %487 : vector<32x16xf32>
    %c11_152 = arith.constant 11 : index
    %c0_153 = arith.constant 0 : index
    %c0_154 = arith.constant 0 : index
    %489 = vector.load %arg4[%c11_152, %c0_153, %c0_154] : memref<16x32x16xf32, #tpu.memory_space<vmem>>, vector<1x32x16xf32>
    %490 = vector.shape_cast %489 : vector<1x32x16xf32> to vector<32x16xf32>
    %491 = arith.mulf %490, %471 : vector<32x16xf32>
    %492 = arith.addf %491, %488 : vector<32x16xf32>
    %493 = vector.extract_strided_slice %137 {offsets = [11, 0], sizes = [1, 16], strides = [1, 1]} : vector<16x16xf32> to vector<1x16xf32>
    %494 = vector.broadcast %493 : vector<1x16xf32> to vector<32x16xf32>
    %495 = arith.mulf %492, %494 : vector<32x16xf32>
    %cst_155 = arith.constant dense<0.000000e+00> : vector<32xf32>
    %496 = vector.multi_reduction <add>, %495, %cst_155 [1] : vector<32x16xf32> to vector<32xf32>
    %497 = vector.shape_cast %496 : vector<32xf32> to vector<32x1xf32>
    %c11_i32 = arith.constant 11 : i32
    %498 = vector.broadcast %c11_i32 : i32 to vector<1x16xi32>
    %499 = arith.cmpi eq, %250, %498 : vector<1x16xi32>
    %500 = vector.shape_cast %499 : vector<1x16xi1> to vector<1x16xi1>
    %501 = vector.broadcast %500 : vector<1x16xi1> to vector<32x16xi1>
    %502 = vector.shape_cast %497 : vector<32x1xf32> to vector<32x1xf32>
    %503 = vector.broadcast %502 : vector<32x1xf32> to vector<32x16xf32>
    %504 = arith.select %501, %503, %483 : vector<32x16xi1>, vector<32x16xf32>
    %505 = vector.extract_strided_slice %135 {offsets = [0, 12], sizes = [32, 1], strides = [1, 1]} : vector<32x16xf32> to vector<32x1xf32>
    %506 = vector.extract_strided_slice %136 {offsets = [12, 0], sizes = [1, 16], strides = [1, 1]} : vector<16x16xf32> to vector<1x16xf32>
    %507 = vector.broadcast %505 : vector<32x1xf32> to vector<32x16xf32>
    %508 = vector.broadcast %506 : vector<1x16xf32> to vector<32x16xf32>
    %509 = arith.mulf %507, %508 : vector<32x16xf32>
    %c12_156 = arith.constant 12 : index
    %c0_157 = arith.constant 0 : index
    %c0_158 = arith.constant 0 : index
    %510 = vector.load %arg4[%c12_156, %c0_157, %c0_158] : memref<16x32x16xf32, #tpu.memory_space<vmem>>, vector<1x32x16xf32>
    %511 = vector.shape_cast %510 : vector<1x32x16xf32> to vector<32x16xf32>
    %512 = arith.mulf %511, %492 : vector<32x16xf32>
    %513 = arith.addf %512, %509 : vector<32x16xf32>
    %514 = vector.extract_strided_slice %137 {offsets = [12, 0], sizes = [1, 16], strides = [1, 1]} : vector<16x16xf32> to vector<1x16xf32>
    %515 = vector.broadcast %514 : vector<1x16xf32> to vector<32x16xf32>
    %516 = arith.mulf %513, %515 : vector<32x16xf32>
    %cst_159 = arith.constant dense<0.000000e+00> : vector<32xf32>
    %517 = vector.multi_reduction <add>, %516, %cst_159 [1] : vector<32x16xf32> to vector<32xf32>
    %518 = vector.shape_cast %517 : vector<32xf32> to vector<32x1xf32>
    %c12_i32 = arith.constant 12 : i32
    %519 = vector.broadcast %c12_i32 : i32 to vector<1x16xi32>
    %520 = arith.cmpi eq, %250, %519 : vector<1x16xi32>
    %521 = vector.shape_cast %520 : vector<1x16xi1> to vector<1x16xi1>
    %522 = vector.broadcast %521 : vector<1x16xi1> to vector<32x16xi1>
    %523 = vector.shape_cast %518 : vector<32x1xf32> to vector<32x1xf32>
    %524 = vector.broadcast %523 : vector<32x1xf32> to vector<32x16xf32>
    %525 = arith.select %522, %524, %504 : vector<32x16xi1>, vector<32x16xf32>
    %526 = vector.extract_strided_slice %135 {offsets = [0, 13], sizes = [32, 1], strides = [1, 1]} : vector<32x16xf32> to vector<32x1xf32>
    %527 = vector.extract_strided_slice %136 {offsets = [13, 0], sizes = [1, 16], strides = [1, 1]} : vector<16x16xf32> to vector<1x16xf32>
    %528 = vector.broadcast %526 : vector<32x1xf32> to vector<32x16xf32>
    %529 = vector.broadcast %527 : vector<1x16xf32> to vector<32x16xf32>
    %530 = arith.mulf %528, %529 : vector<32x16xf32>
    %c13_160 = arith.constant 13 : index
    %c0_161 = arith.constant 0 : index
    %c0_162 = arith.constant 0 : index
    %531 = vector.load %arg4[%c13_160, %c0_161, %c0_162] : memref<16x32x16xf32, #tpu.memory_space<vmem>>, vector<1x32x16xf32>
    %532 = vector.shape_cast %531 : vector<1x32x16xf32> to vector<32x16xf32>
    %533 = arith.mulf %532, %513 : vector<32x16xf32>
    %534 = arith.addf %533, %530 : vector<32x16xf32>
    %535 = vector.extract_strided_slice %137 {offsets = [13, 0], sizes = [1, 16], strides = [1, 1]} : vector<16x16xf32> to vector<1x16xf32>
    %536 = vector.broadcast %535 : vector<1x16xf32> to vector<32x16xf32>
    %537 = arith.mulf %534, %536 : vector<32x16xf32>
    %cst_163 = arith.constant dense<0.000000e+00> : vector<32xf32>
    %538 = vector.multi_reduction <add>, %537, %cst_163 [1] : vector<32x16xf32> to vector<32xf32>
    %539 = vector.shape_cast %538 : vector<32xf32> to vector<32x1xf32>
    %c13_i32 = arith.constant 13 : i32
    %540 = vector.broadcast %c13_i32 : i32 to vector<1x16xi32>
    %541 = arith.cmpi eq, %250, %540 : vector<1x16xi32>
    %542 = vector.shape_cast %541 : vector<1x16xi1> to vector<1x16xi1>
    %543 = vector.broadcast %542 : vector<1x16xi1> to vector<32x16xi1>
    %544 = vector.shape_cast %539 : vector<32x1xf32> to vector<32x1xf32>
    %545 = vector.broadcast %544 : vector<32x1xf32> to vector<32x16xf32>
    %546 = arith.select %543, %545, %525 : vector<32x16xi1>, vector<32x16xf32>
    %547 = vector.extract_strided_slice %135 {offsets = [0, 14], sizes = [32, 1], strides = [1, 1]} : vector<32x16xf32> to vector<32x1xf32>
    %548 = vector.extract_strided_slice %136 {offsets = [14, 0], sizes = [1, 16], strides = [1, 1]} : vector<16x16xf32> to vector<1x16xf32>
    %549 = vector.broadcast %547 : vector<32x1xf32> to vector<32x16xf32>
    %550 = vector.broadcast %548 : vector<1x16xf32> to vector<32x16xf32>
    %551 = arith.mulf %549, %550 : vector<32x16xf32>
    %c14_164 = arith.constant 14 : index
    %c0_165 = arith.constant 0 : index
    %c0_166 = arith.constant 0 : index
    %552 = vector.load %arg4[%c14_164, %c0_165, %c0_166] : memref<16x32x16xf32, #tpu.memory_space<vmem>>, vector<1x32x16xf32>
    %553 = vector.shape_cast %552 : vector<1x32x16xf32> to vector<32x16xf32>
    %554 = arith.mulf %553, %534 : vector<32x16xf32>
    %555 = arith.addf %554, %551 : vector<32x16xf32>
    %556 = vector.extract_strided_slice %137 {offsets = [14, 0], sizes = [1, 16], strides = [1, 1]} : vector<16x16xf32> to vector<1x16xf32>
    %557 = vector.broadcast %556 : vector<1x16xf32> to vector<32x16xf32>
    %558 = arith.mulf %555, %557 : vector<32x16xf32>
    %cst_167 = arith.constant dense<0.000000e+00> : vector<32xf32>
    %559 = vector.multi_reduction <add>, %558, %cst_167 [1] : vector<32x16xf32> to vector<32xf32>
    %560 = vector.shape_cast %559 : vector<32xf32> to vector<32x1xf32>
    %c14_i32 = arith.constant 14 : i32
    %561 = vector.broadcast %c14_i32 : i32 to vector<1x16xi32>
    %562 = arith.cmpi eq, %250, %561 : vector<1x16xi32>
    %563 = vector.shape_cast %562 : vector<1x16xi1> to vector<1x16xi1>
    %564 = vector.broadcast %563 : vector<1x16xi1> to vector<32x16xi1>
    %565 = vector.shape_cast %560 : vector<32x1xf32> to vector<32x1xf32>
    %566 = vector.broadcast %565 : vector<32x1xf32> to vector<32x16xf32>
    %567 = arith.select %564, %566, %546 : vector<32x16xi1>, vector<32x16xf32>
    %568 = vector.extract_strided_slice %135 {offsets = [0, 15], sizes = [32, 1], strides = [1, 1]} : vector<32x16xf32> to vector<32x1xf32>
    %569 = vector.extract_strided_slice %136 {offsets = [15, 0], sizes = [1, 16], strides = [1, 1]} : vector<16x16xf32> to vector<1x16xf32>
    %570 = vector.broadcast %568 : vector<32x1xf32> to vector<32x16xf32>
    %571 = vector.broadcast %569 : vector<1x16xf32> to vector<32x16xf32>
    %572 = arith.mulf %570, %571 : vector<32x16xf32>
    %c15_168 = arith.constant 15 : index
    %c0_169 = arith.constant 0 : index
    %c0_170 = arith.constant 0 : index
    %573 = vector.load %arg4[%c15_168, %c0_169, %c0_170] : memref<16x32x16xf32, #tpu.memory_space<vmem>>, vector<1x32x16xf32>
    %574 = vector.shape_cast %573 : vector<1x32x16xf32> to vector<32x16xf32>
    %575 = arith.mulf %574, %555 : vector<32x16xf32>
    %576 = arith.addf %575, %572 : vector<32x16xf32>
    %577 = vector.extract_strided_slice %137 {offsets = [15, 0], sizes = [1, 16], strides = [1, 1]} : vector<16x16xf32> to vector<1x16xf32>
    %578 = vector.broadcast %577 : vector<1x16xf32> to vector<32x16xf32>
    %579 = arith.mulf %576, %578 : vector<32x16xf32>
    %cst_171 = arith.constant dense<0.000000e+00> : vector<32xf32>
    %580 = vector.multi_reduction <add>, %579, %cst_171 [1] : vector<32x16xf32> to vector<32xf32>
    %581 = vector.shape_cast %580 : vector<32xf32> to vector<32x1xf32>
    %c15_i32 = arith.constant 15 : i32
    %582 = vector.broadcast %c15_i32 : i32 to vector<1x16xi32>
    %583 = arith.cmpi eq, %250, %582 : vector<1x16xi32>
    %584 = vector.shape_cast %583 : vector<1x16xi1> to vector<1x16xi1>
    %585 = vector.broadcast %584 : vector<1x16xi1> to vector<32x16xi1>
    %586 = vector.shape_cast %581 : vector<32x1xf32> to vector<32x1xf32>
    %587 = vector.broadcast %586 : vector<32x1xf32> to vector<32x16xf32>
    %588 = arith.select %585, %587, %567 : vector<32x16xi1>, vector<32x16xf32>
    %c64_172 = arith.constant 64 : index
    %c0_173 = arith.constant 0 : index
    %589 = vector.load %arg2[%c64_172, %c0_173] : memref<136x128xf32, #tpu.memory_space<vmem>>, vector<32x1xf32>
    %590 = vector.broadcast %589 : vector<32x1xf32> to vector<32x16xf32>
    %591 = arith.mulf %590, %111 : vector<32x16xf32>
    %592 = arith.addf %588, %591 : vector<32x16xf32>
    %cst_174 = arith.constant 0.000000e+00 : f32
    %593 = vector.broadcast %cst_174 : f32 to vector<32x16xf32>
    %594 = arith.subf %593, %75 : vector<32x16xf32>
    %595 = math.exp %594 : vector<32x16xf32>
    %cst_175 = arith.constant 1.000000e+00 : f32
    %596 = vector.broadcast %cst_175 : f32 to vector<32x16xf32>
    %597 = arith.addf %596, %595 : vector<32x16xf32>
    %cst_176 = arith.constant 1.000000e+00 : f32
    %598 = vector.broadcast %cst_176 : f32 to vector<32x16xf32>
    %599 = arith.divf %598, %597 : vector<32x16xf32>
    %600 = arith.mulf %75, %599 : vector<32x16xf32>
    %601 = arith.mulf %592, %600 : vector<32x16xf32>
    %c96_177 = arith.constant 96 : index
    %c64_178 = arith.constant 64 : index
    %602 = vector.load %arg2[%c96_177, %c64_178] : memref<136x128xf32, #tpu.memory_space<vmem>>, vector<16x32xf32>
    %cst_179 = arith.constant dense<0.000000e+00> : vector<16x16xf32>
    %603 = tpu.matmul %602, %601, %cst_179 {dimension_numbers = #tpu.dot_dimension_numbers<[1], [0], [0], [1], [0, 0, 1, 1], [], []>} : vector<16x32xf32>, vector<32x16xf32>, vector<16x16xf32> -> vector<16x16xf32>
    %c128_180 = arith.constant 128 : index
    %c32_181 = arith.constant 32 : index
    %604 = vector.load %arg2[%c128_180, %c32_181] : memref<136x128xf32, #tpu.memory_space<vmem>>, vector<4x16xf32>
    %cst_182 = arith.constant dense<0.000000e+00> : vector<4x16xf32>
    %605 = tpu.matmul %604, %603, %cst_182 {dimension_numbers = #tpu.dot_dimension_numbers<[1], [0], [0], [1], [0, 0, 1, 1], [], []>} : vector<4x16xf32>, vector<16x16xf32>, vector<4x16xf32> -> vector<4x16xf32>
    %c128_183 = arith.constant 128 : index
    %c64_184 = arith.constant 64 : index
    %606 = vector.load %arg2[%c128_183, %c64_184] : memref<136x128xf32, #tpu.memory_space<vmem>>, vector<4x1xf32>
    %607 = vector.broadcast %606 : vector<4x1xf32> to vector<4x16xf32>
    %608 = arith.addf %605, %607 : vector<4x16xf32>
    %c0_185 = arith.constant 0 : index
    %c0_186 = arith.constant 0 : index
    %c0_187 = arith.constant 0 : index
    %609 = vector.load %arg3[%c0_185, %c0_186, %c0_187] : memref<1x4x16xf32, #tpu.memory_space<vmem>>, vector<1x4x16xf32>
    %610 = vector.shape_cast %609 : vector<1x4x16xf32> to vector<4x16xf32>
    %611 = vector.shape_cast %608 : vector<4x16xf32> to vector<1x4x16xf32>
    tpu.vector_store %arg3[%c0_185, %c0_186, %c0_187], %611 {strides = array<i32>} : memref<1x4x16xf32, #tpu.memory_space<vmem>>, vector<1x4x16xf32>,
    return
  }
  func.func @transform_0(%arg0: i32) -> (i32, i32, i32) {
    %c0_i32 = arith.constant 0 : i32
    %c0_i32_0 = arith.constant 0 : i32
    %c0_i32_1 = arith.constant 0 : i32
    return %arg0, %c0_i32, %c0_i32_0 : i32, i32, i32
  }
  func.func @transform_1(%arg0: i32) -> (i32, i32) {
    %c0_i32 = arith.constant 0 : i32
    %c0_i32_0 = arith.constant 0 : i32
    %c0_i32_1 = arith.constant 0 : i32
    return %c0_i32, %c0_i32_0 : i32, i32
  }
  func.func @transform_2(%arg0: i32) -> (i32, i32, i32) {
    %c0_i32 = arith.constant 0 : i32
    %c0_i32_0 = arith.constant 0 : i32
    %c0_i32_1 = arith.constant 0 : i32
    return %arg0, %c0_i32, %c0_i32_0 : i32, i32, i32
  }
}

</mosaic_0001>

<llo_original>
// kernel: tpu_custom_call.1
$region0: #{tpu_custom_call.1}
  #allocation0 [shape = 'u32[]', space=smem, size = 0x4, offset = 0x4, fixed_abs, tag = 'smem constant byte address 0x4 - core index']
  #allocation1 [shape = 'u32[72,128]{1,0:T(1,128)}', space=vmem, size = 0x9000, scoped, tag = 'internal scratch']
  #allocation2 [shape = 'f32[16,32,16]{2,1,0:T(8,128)}', space=vmem, size = 0x40000, scoped, tag = 'scratch operand']
  %s0 = inlined_call_operand.hbm [shape: f32[2,8,16], index: 0, kind: input, shape index: {}]
  %s1 = inlined_call_operand.hbm [shape: f32[136,128], index: 1, kind: input, shape index: {}]
  %s2 = inlined_call_operand.hbm [shape: f32[2,4,16], index: 2, kind: output, shape index: {}]
  %s3 = sld [smem:[#allocation0]]
  $region49: #{tpu_custom_call.1} parent=0
    _
  %s5 = ssub.s32 1, %s3
  %s6 = scalar_select 0, %s5, %s3
  $region1: #{tpu_custom_call.1} parent=0
    #allocation3 [shape = 'u8[8192]{0}', space=vmem, size = 0x2000, scoped, tag = 'input window, operand 0']
    #allocation4 [shape = 's32[2]{0}', space=sflag, size = 0x8, scoped, tag = 'scoped memory for tpu_custom_call.1']
    #allocation5 [shape = 's32[2]{0}', space=sflag, size = 0x8, scoped, tag = 'scoped memory for tpu_custom_call.1']
    #allocation6 [shape = 'u8[69632]{0}', space=vmem, size = 0x11000, scoped, tag = 'input window, operand 1, single buffered']
    #allocation7 [shape = 's32[1]{0}', space=sflag, size = 0x4, scoped, tag = 'scoped memory for tpu_custom_call.1']
    #allocation8 [shape = 'u8[4096]{0}', space=vmem, size = 0x1000, scoped, tag = 'output window, operand 0']
    %7 = vsyncpa [#allocation4], 0
    %s8 = scalar_lea.sflag [#allocation4], 1
    %9 = vsyncpa %s8, 0
    %10 = vsyncpa [#allocation7], 0
    %11 = vsyncpa [#allocation5], 0
    %s12 = scalar_lea.sflag [#allocation5], 1
    %13 = vsyncpa %s12, 0
    loop: start=0, step=1, limit=4
    $region2: #{tpu_custom_call.1} parent=1 // loop_pre_header
      _
    $region3: #{tpu_custom_call.1} parent=1 // loop_header
      %s15 = sphi 0, %s19
      %p16 = scmp.ge.s32.totalorder %s15, 4
      %s25 = sphi 0, %s27
      %s28 = sphi 0, %s25
      %s29 = sphi 0, %s28
      %s45 = sphi 0, %s29
      %s49 = sphi 0, %s49
      %s51 = sphi 0, %s49
      %s52 = sphi 0, %s51
      %s66 = sphi 0, %s52
      %s72 = sphi 0, %s74
      %s75 = sphi 0, %s72
      %s76 = sphi 0, %s75
      %s92 = sphi 0, %s76
    $region4: #{tpu_custom_call.1} parent=1 // loop_header_branch
      %18 = sbr.rel (%p16) target = $region8
    $region5: #{tpu_custom_call.1} parent=1 // loop_body
      %s20 = ssub.s32 %s15, 1
      %s21 = ssub.s32 %s15, 2
      %s22 = sadd.s32 %s15, 1
      %s23 = ssub.s32 %s15, %s22
      %p24 = scmp.eq.s32.totalorder %s23, 0
      %s26 = sadd.s32 %s25, 1
      %s27 = scalar_select %p24, %s25, %s26
      %p30 = pneg %p24
      %p31 = scmp.eq.s32.totalorder %s15, 1
      %p32 = por %p30, %p31
      %p33 = scmp.ne.s32.totalorder %s25, %s28
      %p34 = scmp.eq.s32.totalorder %s15, 0
      %p35 = por %p33, %p34
      %p36 = scmp.ne.s32.totalorder %s25, %s28
      %p37 = scmp.eq.s32.totalorder %s20, 1
      %p38 = por %p36, %p37
      %p39 = scmp.ne.s32.totalorder %s28, %s29
      %p40 = scmp.eq.s32.totalorder %s20, 0
      %p41 = por %p39, %p40
      %p42 = scmp.ne.s32.totalorder %s28, %s29
      %p43 = scmp.eq.s32.totalorder %s21, 1
      %p44 = por %p42, %p43
      %p46 = scmp.ne.s32.totalorder %s29, %s45
      %p47 = scmp.eq.s32.totalorder %s21, 0
      %p48 = por %p46, %p47
      %s50 = sadd.s32 %s49, 1
      %p53 = scmp.eq.s32.totalorder %s15, 1
      %p54 = scmp.ne.s32.totalorder %s49, %s51
      %p55 = scmp.eq.s32.totalorder %s15, 0
      %p56 = por %p54, %p55
      %p57 = scmp.ne.s32.totalorder %s49, %s51
      %p58 = scmp.eq.s32.totalorder %s20, 1
      %p59 = por %p57, %p58
      %p60 = scmp.ne.s32.totalorder %s51, %s52
      %p61 = scmp.eq.s32.totalorder %s20, 0
      %p62 = por %p60, %p61
      %p63 = scmp.ne.s32.totalorder %s51, %s52
      %p64 = scmp.eq.s32.totalorder %s21, 1
      %p65 = por %p63, %p64
      %p67 = scmp.ne.s32.totalorder %s52, %s66
      %p68 = scmp.eq.s32.totalorder %s21, 0
      %p69 = por %p67, %p68
      %s70 = ssub.s32 %s15, %s22
      %p71 = scmp.eq.s32.totalorder %s70, 0
      %s73 = sadd.s32 %s72, 1
      %s74 = scalar_select %p71, %s72, %s73
      %p77 = pneg %p71
      %p78 = scmp.eq.s32.totalorder %s15, 1
      %p79 = por %p77, %p78
      %p80 = scmp.ne.s32.totalorder %s72, %s75
      %p81 = scmp.eq.s32.totalorder %s15, 0
      %p82 = por %p80, %p81
      %p83 = scmp.ne.s32.totalorder %s72, %s75
      %p84 = scmp.eq.s32.totalorder %s20, 1
      %p85 = por %p83, %p84
      %p86 = scmp.ne.s32.totalorder %s75, %s76
      %p87 = scmp.eq.s32.totalorder %s20, 0
      %p88 = por %p86, %p87
      %p89 = scmp.ne.s32.totalorder %s75, %s76
      %p90 = scmp.eq.s32.totalorder %s21, 1
      %p91 = por %p89, %p90
      %p93 = scmp.ne.s32.totalorder %s76, %s92
      %p94 = scmp.eq.s32.totalorder %s21, 0
      %p95 = por %p93, %p94
      %p96 = scmp.le.s32.totalorder 1, %s15
      %p97 = scmp.lt.s32.totalorder %s15, 3
      %p98 = pnand %p96, %p97
      %p99 = pneg %p98
      // Predicated region
      $region9: #{tpu_custom_call.1} parent=5 // pred_check
        _
      $region10: #{tpu_custom_call.1} parent=5 // pred_check_branch
        %101 = sbr.rel (%p98) target = $region12
      $region11: #{tpu_custom_call.1} parent=5 // pred_region
        %s102 = ssub.s32 %s15, 1
        // Predicated region
        $region13: #{tpu_custom_call.1} parent=11 // pred_check
          %p103 = pneg %p62
        $region14: #{tpu_custom_call.1} parent=11 // pred_check_branch
          %105 = sbr.rel (%p103) target = $region16
        $region15: #{tpu_custom_call.1} parent=11 // pred_region
          %107 = vsyncadd [#allocation7], 0
          %s108 = sshll.u32 %s1, 4
          %s109 = int_to_ptr.hbm [resolvable:$true] %s108
          %s110 = sshll.u32 [#allocation6], 4
          %s111 = int_to_ptr.vmem [resolvable:$true] %s110
          %116 = dma.hbm_to_vmem [thread:$0]  %s109, 2176, %s111, [#allocation7], 128, 128, 8
        $region16: #{tpu_custom_call.1} parent=11 // pred_fallthru
          _
      $region12: #{tpu_custom_call.1} parent=5 // pred_fallthru
        _
      %p117 = scmp.lt.s32.totalorder %s15, 2
      // Predicated region
      $region17: #{tpu_custom_call.1} parent=5 // pred_check
        %p118 = pneg %p117
      $region18: #{tpu_custom_call.1} parent=5 // pred_check_branch
        %120 = sbr.rel (%p118) target = $region20
      $region19: #{tpu_custom_call.1} parent=5 // pred_region
        // Predicated region
        $region21: #{tpu_custom_call.1} parent=19 // pred_check
          %p121 = pneg %p35
        $region22: #{tpu_custom_call.1} parent=19 // pred_check_branch
          %123 = sbr.rel (%p121) target = $region24
        $region23: #{tpu_custom_call.1} parent=19 // pred_region
          %s124 = sand.u32 %s25, 1
          %s125 = scalar_lea.sflag [#allocation4], %s124
          %s126 = sand.u32 %s25, 1
          %s127 = smul.addr %s126, 8
          %s128 = scalar_lea.vmem [#allocation3], %s127
          %130 = vsyncadd %s125, 0
          %s131 = smul.addr %s15, 8
          %s132 = scalar_lea.hbm %s0, %s131
          %s134 = sshll.u32 %s132, 4
          %s135 = int_to_ptr.hbm [resolvable:$true] %s134
          %s136 = sshll.u32 %s128, 4
          %s137 = int_to_ptr.vmem [resolvable:$true] %s136
          %139 = dma.hbm_to_vmem [thread:$0]  %s135, 128, %s137, %s125
        $region24: #{tpu_custom_call.1} parent=19 // pred_fallthru
          _
      $region20: #{tpu_custom_call.1} parent=5 // pred_fallthru
        _
      %p140 = scmp.le.s32.totalorder 1, %s15
      %p141 = scmp.lt.s32.totalorder %s15, 3
      %p142 = pnand %p140, %p141
      %p143 = pneg %p142
      // Predicated region
      $region25: #{tpu_custom_call.1} parent=5 // pred_check
        _
      $region26: #{tpu_custom_call.1} parent=5 // pred_check_branch
        %145 = sbr.rel (%p142) target = $region28
      $region27: #{tpu_custom_call.1} parent=5 // pred_region
        %s146 = ssub.s32 %s15, 1
        %s147 = sand.u32 %s28, 1
        %s148 = scalar_lea.sflag [#allocation4], %s147
        %s149 = sand.u32 %s28, 1
        %s150 = smul.addr %s149, 8
        %s151 = scalar_lea.vmem [#allocation3], %s150
        // Predicated region
        $region29: #{tpu_custom_call.1} parent=27 // pred_check
          %p152 = pneg %p41
        $region30: #{tpu_custom_call.1} parent=27 // pred_check_branch
          %154 = sbr.rel (%p152) target = $region32
        $region31: #{tpu_custom_call.1} parent=27 // pred_region
          %156 = dma.done %s148, 128
        $region32: #{tpu_custom_call.1} parent=27 // pred_fallthru
          _
        // Predicated region
        $region33: #{tpu_custom_call.1} parent=27 // pred_check
          %p157 = pneg %p62
        $region34: #{tpu_custom_call.1} parent=27 // pred_check_branch
          %159 = sbr.rel (%p157) target = $region36
        $region35: #{tpu_custom_call.1} parent=27 // pred_region
          %161 = dma.done [#allocation7], 2176
        $region36: #{tpu_custom_call.1} parent=27 // pred_fallthru
          _
        %s162 = sand.u32 %s28, 1
        %s163 = scalar_lea.sflag [#allocation4], %s162
        %s164 = sand.u32 %s28, 1
        %s165 = smul.addr %s164, 8
        %s166 = scalar_lea.vmem [#allocation3], %s165
        %p167 = pneg %p41
        %p168 = pneg %p38
        %p169 = pneg %p62
        %p170 = pneg %p59
        %p171 = pneg %p88
        %p172 = pneg %p85
        %s173 = sand.u32 %s75, 1
        %s174 = scalar_lea.sflag [#allocation5], %s173
        %s175 = sand.u32 %s75, 1
        %s176 = smul.addr %s175, 4
        %s177 = scalar_lea.vmem [#allocation8], %s176
        %v178 = vld [vmem:[%s151] sm:$0xff]
        %v179 = vld [vmem:[#allocation6 + $0x40] sm:$0xff]
        %v180 = vld [vmem:[#allocation6 + $0x48] sm:$0xff]
        %182 = vset.pattern.permute.xlu0 96
        %183 = vperm.xlu0 %182, %v179
        %v184 = vpop.permute.xlu0 %183
        %187 = vset.pattern.permute.xlu0 96
        %188 = vperm.xlu0 %187, %v180
        %v189 = vpop.permute.xlu0 %188
        %191 = vrot.lane.b32.xlu0 %v179, 64
        %v192 = vpop.permute.xlu0 %191
        %193 = vrot.lane.b32.xlu0 %v180, 64
        %v194 = vpop.permute.xlu0 %193
        %vm195 = vcmask 64512
        %v196 = vsel %vm195, %v192, 0
        %v198 = vsel %vm195, %v194, 0
        %200 = vmatpush.msra.mxu0 0.0
        %201 = vmatpush.msra.mxu0 0.0
        %202 = vmatpush.msra.mxu0 0.0
        %203 = vmatpush.msra.mxu0 0.0
        %204 = vmatpush.msra.mxu0 0.0
        %205 = vmatpush.msra.mxu0 0.0
        %206 = vmatpush.msra.mxu0 0.0
        %207 = vmatpush.msra.mxu0 0.0
        %208 = vmatpush.msra.mxu0 0.0
        %209 = vmatpush.msra.mxu0 0.0
        %210 = vmatpush.msra.mxu0 0.0
        %211 = vmatpush.msra.mxu0 0.0
        %212 = vmatpush.msra.mxu0 0.0
        %213 = vmatpush.msra.mxu0 0.0
        %214 = vmatpush.msra.mxu0 0.0
        %215 = vmatpush.msra.mxu0 %v178
        %216 = vmatmul.f32.gmra.mxu0 %v196
        %v217 = vpop.f32.mrf.mxu0
        %v218 = vadd.f32 %v184, %v217
        %219 = vmatmul.f32.gmra.mxu0 %v198
        %v220 = vpop.f32.mrf.mxu0
        %v221 = vadd.f32 %v189, %v220
        %222 = vdwg.mxu0
        %v223 = vld [vmem:[#allocation6 + $0x60] sm:$0x3]
        %v224 = vld [vmem:[#allocation6 + $0x68] sm:$0x3]
        %v225 = vld [vmem:[#allocation6 + $0x70] sm:$0x3]
        %228 = vrot.lane.b32.xlu0 %v218, 2
        %v229 = vpop.permute.xlu0 %228
        %230 = vrot.lane.b32.xlu0 %v221, 2
        %v231 = vpop.permute.xlu0 %230
        %vm234 = vcmask 15360
        %v235 = vsel %vm234, 0.0, %v229
        %v236 = vsel %vm234, 0.0, %v231
        %238 = vrot.lane.b32.xlu0 %v224, 96
        %v239 = vpop.permute.xlu0 %238
        %vm240 = vcmask 130048
        %v241 = vsel %vm240, %v239, 0
        %243 = vmatpush.msra.mxu0 0.0
        %244 = vmatpush.msra.mxu0 0.0
        %245 = vmatpush.msra.mxu0 0.0
        %246 = vmatpush.msra.mxu0 0.0
        %247 = vmatpush.msra.mxu0 0.0
        %248 = vmatpush.msra.mxu0 0.0
        %249 = vmatpush.msra.mxu0 0.0
        %250 = vmatpush.msra.mxu0 0.0
        %251 = vmatpush.msra.mxu0 0.0
        %252 = vmatpush.msra.mxu0 0.0
        %253 = vmatpush.msra.mxu0 0.0
        %254 = vmatpush.msra.mxu0 0.0
        %255 = vmatpush.msra.mxu0 0.0
        %256 = vmatpush.msra.mxu0 0.0
        %257 = vmatpush.msra.mxu0 %v221
        %258 = vmatpush.msra.mxu0 %v218
        %259 = vmatmul.f32.gmra.mxu0 %v241
        %v260 = vpop.f32.mrf.mxu0
        %v261 = vadd.f32 0.0, %v260
        %262 = vdwg.mxu0
        %264 = vrot.lane.b32.xlu0 %v223, 32
        %v265 = vpop.permute.xlu0 %264
        %v266 = vsel %vm240, %v265, 0
        %268 = vmatpush.msra.mxu0 0.0
        %269 = vmatpush.msra.mxu0 0.0
        %270 = vmatpush.msra.mxu0 0.0
        %271 = vmatpush.msra.mxu0 0.0
        %272 = vmatpush.msra.mxu0 0.0
        %273 = vmatpush.msra.mxu0 0.0
        %274 = vmatpush.msra.mxu0 0.0
        %275 = vmatpush.msra.mxu0 0.0
        %276 = vmatpush.msra.mxu0 0.0
        %277 = vmatpush.msra.mxu0 0.0
        %278 = vmatpush.msra.mxu0 0.0
        %279 = vmatpush.msra.mxu0 0.0
        %280 = vmatpush.msra.mxu0 0.0
        %281 = vmatpush.msra.mxu0 0.0
        %282 = vmatpush.msra.mxu0 %v236
        %283 = vmatpush.msra.mxu0 %v235
        %284 = vmatmul.f32.gmra.mxu0 %v266
        %v285 = vpop.f32.mrf.mxu0
        %v286 = vadd.f32 %v261, %v285
        %287 = vdwg.mxu0
        %288 = vrot.lane.b32.xlu0 %v218, 126
        %v289 = vpop.permute.xlu0 %288
        %290 = vrot.lane.b32.xlu0 %v221, 126
        %v291 = vpop.permute.xlu0 %290
        %vm294 = vcmask 113664
        %v295 = vsel %vm294, %v289, 0.0
        %v296 = vsel %vm294, %v291, 0.0
        %297 = vrot.lane.b32.xlu0 %v224, 32
        %v298 = vpop.permute.xlu0 %297
        %v299 = vsel %vm240, %v298, 0
        %301 = vmatpush.msra.mxu0 0.0
        %302 = vmatpush.msra.mxu0 0.0
        %303 = vmatpush.msra.mxu0 0.0
        %304 = vmatpush.msra.mxu0 0.0
        %305 = vmatpush.msra.mxu0 0.0
        %306 = vmatpush.msra.mxu0 0.0
        %307 = vmatpush.msra.mxu0 0.0
        %308 = vmatpush.msra.mxu0 0.0
        %309 = vmatpush.msra.mxu0 0.0
        %310 = vmatpush.msra.mxu0 0.0
        %311 = vmatpush.msra.mxu0 0.0
        %312 = vmatpush.msra.mxu0 0.0
        %313 = vmatpush.msra.mxu0 0.0
        %314 = vmatpush.msra.mxu0 0.0
        %315 = vmatpush.msra.mxu0 %v296
        %316 = vmatpush.msra.mxu0 %v295
        %317 = vmatmul.f32.gmra.mxu0 %v299
        %v318 = vpop.f32.mrf.mxu0
        %v319 = vadd.f32 0.0, %v318
        %320 = vdwg.mxu0
        %v321 = vadd.f32 %v286, %v319
        %323 = vset.pattern.permute.xlu0 0
        %324 = vperm.xlu0 %323, %v225
        %v325 = vpop.permute.xlu0 %324
        %v327 = vadd.f32 %v321, %v325
        %v328 = vld [vmem:[#allocation6 + $0x78] sm:$0x3]
        %330 = vrot.lane.b32.xlu0 %v327, 4
        %v331 = vpop.permute.xlu0 %330
        %vm333 = vcmask 31744
        %v334 = vsel %vm333, 0.0, %v331
        %335 = vrot.lane.b32.xlu0 %v225, 64
        %v336 = vpop.permute.xlu0 %335
        %v337 = vsel %vm234, %v336, 0
        %vm339 = vcmask 1041408
        %v340 = vsel %vm339, %v327, 0
        %342 = vmatpush.msra.mxu0 0.0
        %343 = vmatpush.msra.mxu0 0.0
        %344 = vmatpush.msra.mxu0 0.0
        %345 = vmatpush.msra.mxu0 0.0
        %346 = vmatpush.msra.mxu0 0.0
        %347 = vmatpush.msra.mxu0 0.0
        %348 = vmatpush.msra.mxu0 0.0
        %349 = vmatpush.msra.mxu0 0.0
        %350 = vmatpush.msra.mxu0 0.0
        %351 = vmatpush.msra.mxu0 0.0
        %352 = vmatpush.msra.mxu0 0.0
        %353 = vmatpush.msra.mxu0 0.0
        %354 = vmatpush.msra.mxu0 0.0
        %355 = vmatpush.msra.mxu0 0.0
        %356 = vmatpush.msra.mxu0 0.0
        %357 = vmatpush.msra.mxu0 %v340
        %358 = vmatmul.f32.gmra.mxu0 %v337
        %v359 = vpop.f32.mrf.mxu0
        %v360 = vadd.f32 0.0, %v359
        %361 = vdwg.mxu0
        %362 = vrot.lane.b32.xlu0 %v225, 96
        %v363 = vpop.permute.xlu0 %362
        %v364 = vsel %vm234, %v363, 0
        %v367 = vsel %vm339, %v334, 0
        %369 = vmatpush.msra.mxu0 0.0
        %370 = vmatpush.msra.mxu0 0.0
        %371 = vmatpush.msra.mxu0 0.0
        %372 = vmatpush.msra.mxu0 0.0
        %373 = vmatpush.msra.mxu0 0.0
        %374 = vmatpush.msra.mxu0 0.0
        %375 = vmatpush.msra.mxu0 0.0
        %376 = vmatpush.msra.mxu0 0.0
        %377 = vmatpush.msra.mxu0 0.0
        %378 = vmatpush.msra.mxu0 0.0
        %379 = vmatpush.msra.mxu0 0.0
        %380 = vmatpush.msra.mxu0 0.0
        %381 = vmatpush.msra.mxu0 0.0
        %382 = vmatpush.msra.mxu0 0.0
        %383 = vmatpush.msra.mxu0 0.0
        %384 = vmatpush.msra.mxu0 %v367
        %385 = vmatmul.f32.gmra.mxu0 %v364
        %v386 = vpop.f32.mrf.mxu0
        %v387 = vadd.f32 %v360, %v386
        %388 = vdwg.mxu0
        %389 = vrot.lane.b32.xlu0 %v327, 124
        %v390 = vpop.permute.xlu0 %389
        %vm392 = vcmask 97280
        %v393 = vsel %vm392, %v390, 0.0
        %394 = vrot.lane.b32.xlu0 %v225, 32
        %v395 = vpop.permute.xlu0 %394
        %v396 = vsel %vm234, %v395, 0
        %v399 = vsel %vm339, %v393, 0
        %401 = vmatpush.msra.mxu0 0.0
        %402 = vmatpush.msra.mxu0 0.0
        %403 = vmatpush.msra.mxu0 0.0
        %404 = vmatpush.msra.mxu0 0.0
        %405 = vmatpush.msra.mxu0 0.0
        %406 = vmatpush.msra.mxu0 0.0
        %407 = vmatpush.msra.mxu0 0.0
        %408 = vmatpush.msra.mxu0 0.0
        %409 = vmatpush.msra.mxu0 0.0
        %410 = vmatpush.msra.mxu0 0.0
        %411 = vmatpush.msra.mxu0 0.0
        %412 = vmatpush.msra.mxu0 0.0
        %413 = vmatpush.msra.mxu0 0.0
        %414 = vmatpush.msra.mxu0 0.0
        %415 = vmatpush.msra.mxu0 0.0
        %416 = vmatpush.msra.mxu0 %v399
        %417 = vmatmul.f32.gmra.mxu0 %v396
        %v418 = vpop.f32.mrf.mxu0
        %v419 = vadd.f32 0.0, %v418
        %420 = vdwg.mxu0
        %v421 = vadd.f32 %v387, %v419
        %423 = vset.pattern.permute.xlu0 0
        %424 = vperm.xlu0 %423, %v328
        %v425 = vpop.permute.xlu0 %424
        %v427 = vadd.f32 %v421, %v425
        %v428 = vld [vmem:[#allocation6 + $0x80] sm:$0x3]
        %430 = vrot.lane.b32.xlu0 %v427, 8
        %v431 = vpop.permute.xlu0 %430
        %v433 = vsel %vm195, 0.0, %v431
        %434 = vrot.lane.b32.xlu0 %v328, 64
        %v435 = vpop.permute.xlu0 %434
        %v436 = vsel %vm234, %v435, 0
        %v438 = vsel %vm339, %v427, 0
        %440 = vmatpush.msra.mxu0 0.0
        %441 = vmatpush.msra.mxu0 0.0
        %442 = vmatpush.msra.mxu0 0.0
        %443 = vmatpush.msra.mxu0 0.0
        %444 = vmatpush.msra.mxu0 0.0
        %445 = vmatpush.msra.mxu0 0.0
        %446 = vmatpush.msra.mxu0 0.0
        %447 = vmatpush.msra.mxu0 0.0
        %448 = vmatpush.msra.mxu0 0.0
        %449 = vmatpush.msra.mxu0 0.0
        %450 = vmatpush.msra.mxu0 0.0
        %451 = vmatpush.msra.mxu0 0.0
        %452 = vmatpush.msra.mxu0 0.0
        %453 = vmatpush.msra.mxu0 0.0
        %454 = vmatpush.msra.mxu0 0.0
        %455 = vmatpush.msra.mxu0 %v438
        %456 = vmatmul.f32.gmra.mxu0 %v436
        %v457 = vpop.f32.mrf.mxu0
        %v458 = vadd.f32 0.0, %v457
        %459 = vdwg.mxu0
        %460 = vrot.lane.b32.xlu0 %v328, 96
        %v461 = vpop.permute.xlu0 %460
        %v462 = vsel %vm234, %v461, 0
        %v465 = vsel %vm339, %v433, 0
        %467 = vmatpush.msra.mxu0 0.0
        %468 = vmatpush.msra.mxu0 0.0
        %469 = vmatpush.msra.mxu0 0.0
        %470 = vmatpush.msra.mxu0 0.0
        %471 = vmatpush.msra.mxu0 0.0
        %472 = vmatpush.msra.mxu0 0.0
        %473 = vmatpush.msra.mxu0 0.0
        %474 = vmatpush.msra.mxu0 0.0
        %475 = vmatpush.msra.mxu0 0.0
        %476 = vmatpush.msra.mxu0 0.0
        %477 = vmatpush.msra.mxu0 0.0
        %478 = vmatpush.msra.mxu0 0.0
        %479 = vmatpush.msra.mxu0 0.0
        %480 = vmatpush.msra.mxu0 0.0
        %481 = vmatpush.msra.mxu0 0.0
        %482 = vmatpush.msra.mxu0 %v465
        %483 = vmatmul.f32.gmra.mxu0 %v462
        %v484 = vpop.f32.mrf.mxu0
        %v485 = vadd.f32 %v458, %v484
        %486 = vdwg.mxu0
        %487 = vrot.lane.b32.xlu0 %v427, 120
        %v488 = vpop.permute.xlu0 %487
        %v490 = vsel %vm195, %v488, 0.0
        %491 = vrot.lane.b32.xlu0 %v328, 32
        %v492 = vpop.permute.xlu0 %491
        %v493 = vsel %vm234, %v492, 0
        %v496 = vsel %vm339, %v490, 0
        %498 = vmatpush.msra.mxu0 0.0
        %499 = vmatpush.msra.mxu0 0.0
        %500 = vmatpush.msra.mxu0 0.0
        %501 = vmatpush.msra.mxu0 0.0
        %502 = vmatpush.msra.mxu0 0.0
        %503 = vmatpush.msra.mxu0 0.0
        %504 = vmatpush.msra.mxu0 0.0
        %505 = vmatpush.msra.mxu0 0.0
        %506 = vmatpush.msra.mxu0 0.0
        %507 = vmatpush.msra.mxu0 0.0
        %508 = vmatpush.msra.mxu0 0.0
        %509 = vmatpush.msra.mxu0 0.0
        %510 = vmatpush.msra.mxu0 0.0
        %511 = vmatpush.msra.mxu0 0.0
        %512 = vmatpush.msra.mxu0 0.0
        %513 = vmatpush.msra.mxu0 %v496
        %514 = vmatmul.f32.gmra.mxu0 %v493
        %v515 = vpop.f32.mrf.mxu0
        %v516 = vadd.f32 0.0, %v515
        %517 = vdwg.mxu0
        %v518 = vadd.f32 %v485, %v516
        %520 = vset.pattern.permute.xlu0 0
        %521 = vperm.xlu0 %520, %v428
        %v522 = vpop.permute.xlu0 %521
        %v524 = vadd.f32 %v518, %v522
        %v525 = vld [vmem:[#allocation6 + $0x48] sm:$0xff]
        %v526 = vld [vmem:[#allocation6 + $0x50] sm:$0xff]
        %v527 = vld [vmem:[#allocation6 + $0x58] sm:$0xff]
        %530 = vrot.lane.b32.xlu0 %v526, 64
        %v531 = vpop.permute.xlu0 %530
        %532 = vrot.lane.b32.xlu0 %v527, 64
        %v533 = vpop.permute.xlu0 %532
        %v534 = vsel %vm234, %v531, 0
        %v536 = vsel %vm234, %v533, 0
        %538 = vmatpush.msra.mxu0 0.0
        %539 = vmatpush.msra.mxu0 0.0
        %540 = vmatpush.msra.mxu0 0.0
        %541 = vmatpush.msra.mxu0 0.0
        %542 = vmatpush.msra.mxu0 0.0
        %543 = vmatpush.msra.mxu0 0.0
        %544 = vmatpush.msra.mxu0 0.0
        %545 = vmatpush.msra.mxu0 0.0
        %546 = vmatpush.msra.mxu0 0.0
        %547 = vmatpush.msra.mxu0 0.0
        %548 = vmatpush.msra.mxu0 0.0
        %549 = vmatpush.msra.mxu0 0.0
        %550 = vmatpush.msra.mxu0 0.0
        %551 = vmatpush.msra.mxu0 0.0
        %552 = vmatpush.msra.mxu0 0.0
        %553 = vmatpush.msra.mxu0 %v340
        %554 = vmatmul.f32.gmra.mxu0 %v534
        %v555 = vpop.f32.mrf.mxu0
        %v556 = vadd.f32 0.0, %v555
        %557 = vmatmul.f32.gmra.mxu0 %v536
        %v558 = vpop.f32.mrf.mxu0
        %v559 = vadd.f32 0.0, %v558
        %560 = vdwg.mxu0
        %562 = vrot.lane.b32.xlu0 %v525, 96
        %v563 = vpop.permute.xlu0 %562
        %564 = vrot.lane.b32.xlu0 %v526, 96
        %v565 = vpop.permute.xlu0 %564
        %v566 = vsel %vm240, %v563, 0
        %v568 = vsel %vm240, %v565, 0
        %570 = vmatpush.msra.mxu0 0.0
        %571 = vmatpush.msra.mxu0 0.0
        %572 = vmatpush.msra.mxu0 0.0
        %573 = vmatpush.msra.mxu0 0.0
        %574 = vmatpush.msra.mxu0 0.0
        %575 = vmatpush.msra.mxu0 0.0
        %576 = vmatpush.msra.mxu0 0.0
        %577 = vmatpush.msra.mxu0 0.0
        %578 = vmatpush.msra.mxu0 0.0
        %579 = vmatpush.msra.mxu0 0.0
        %580 = vmatpush.msra.mxu0 0.0
        %581 = vmatpush.msra.mxu0 0.0
        %582 = vmatpush.msra.mxu0 0.0
        %583 = vmatpush.msra.mxu0 0.0
        %584 = vmatpush.msra.mxu0 %v221
        %585 = vmatpush.msra.mxu0 %v218
        %586 = vmatmul.f32.gmra.mxu0 %v566
        %v587 = vpop.f32.mrf.mxu0
        %v588 = vadd.f32 %v556, %v587
        %589 = vmatmul.f32.gmra.mxu0 %v568
        %v590 = vpop.f32.mrf.mxu0
        %v591 = vadd.f32 %v559, %v590
        %592 = vdwg.mxu0
        %593 = vrot.lane.b32.xlu0 %v526, 32
        %v594 = vpop.permute.xlu0 %593
        %595 = vrot.lane.b32.xlu0 %v527, 32
        %v596 = vpop.permute.xlu0 %595
        %v597 = vsel %vm234, %v594, 0
        %v599 = vsel %vm234, %v596, 0
        %601 = vmatpush.msra.mxu0 0.0
        %602 = vmatpush.msra.mxu0 0.0
        %603 = vmatpush.msra.mxu0 0.0
        %604 = vmatpush.msra.mxu0 0.0
        %605 = vmatpush.msra.mxu0 0.0
        %606 = vmatpush.msra.mxu0 0.0
        %607 = vmatpush.msra.mxu0 0.0
        %608 = vmatpush.msra.mxu0 0.0
        %609 = vmatpush.msra.mxu0 0.0
        %610 = vmatpush.msra.mxu0 0.0
        %611 = vmatpush.msra.mxu0 0.0
        %612 = vmatpush.msra.mxu0 0.0
        %613 = vmatpush.msra.mxu0 0.0
        %614 = vmatpush.msra.mxu0 0.0
        %615 = vmatpush.msra.mxu0 0.0
        %616 = vmatpush.msra.mxu0 %v438
        %617 = vmatmul.f32.gmra.mxu0 %v597
        %v618 = vpop.f32.mrf.mxu0
        %v619 = vadd.f32 0.0, %v618
        %620 = vmatmul.f32.gmra.mxu0 %v599
        %v621 = vpop.f32.mrf.mxu0
        %v622 = vadd.f32 0.0, %v621
        %623 = vdwg.mxu0
        %v624 = vadd.f32 %v588, %v619
        %v625 = vadd.f32 %v591, %v622
        %v626 = vld [vmem:[#allocation6 + $0x58] sm:$0xff]
        %v627 = vld [vmem:[#allocation6 + $0x60] sm:$0xff]
        %630 = vrot.lane.b32.xlu0 %v626, 96
        %v631 = vpop.permute.xlu0 %630
        %632 = vrot.lane.b32.xlu0 %v627, 96
        %v633 = vpop.permute.xlu0 %632
        %v634 = vsel %vm234, %v631, 0
        %v636 = vsel %vm234, %v633, 0
        %v639 = vsel %vm339, %v524, 0
        %641 = vmatpush.msra.mxu0 0.0
        %642 = vmatpush.msra.mxu0 0.0
        %643 = vmatpush.msra.mxu0 0.0
        %644 = vmatpush.msra.mxu0 0.0
        %645 = vmatpush.msra.mxu0 0.0
        %646 = vmatpush.msra.mxu0 0.0
        %647 = vmatpush.msra.mxu0 0.0
        %648 = vmatpush.msra.mxu0 0.0
        %649 = vmatpush.msra.mxu0 0.0
        %650 = vmatpush.msra.mxu0 0.0
        %651 = vmatpush.msra.mxu0 0.0
        %652 = vmatpush.msra.mxu0 0.0
        %653 = vmatpush.msra.mxu0 0.0
        %654 = vmatpush.msra.mxu0 0.0
        %655 = vmatpush.msra.mxu0 0.0
        %656 = vmatpush.msra.mxu0 %v639
        %657 = vmatmul.f32.gmra.mxu0 %v634
        %v658 = vpop.f32.mrf.mxu0
        %v659 = vadd.f32 0.0, %v658
        %660 = vmatmul.f32.gmra.mxu0 %v636
        %v661 = vpop.f32.mrf.mxu0
        %v662 = vadd.f32 0.0, %v661
        %663 = vdwg.mxu0
        %v664 = vadd.f32 %v624, %v659
        %v665 = vadd.f32 %v625, %v662
        %v666 = vld [vmem:[#allocation6 + $0x60] sm:$0xff]
        %v667 = vld [vmem:[#allocation6 + $0x68] sm:$0xff]
        %669 = vset.pattern.permute.xlu0 0
        %670 = vperm.xlu0 %669, %v666
        %v671 = vpop.permute.xlu0 %670
        %674 = vset.pattern.permute.xlu0 0
        %675 = vperm.xlu0 %674, %v667
        %v676 = vpop.permute.xlu0 %675
        %v678 = vadd.f32 %v664, %v671
        %v679 = vadd.f32 %v665, %v676
        %v680 = vld [vmem:[#allocation6] sm:$0xff]
        %v681 = vld [vmem:[#allocation6 + $0x8] sm:$0xff]
        %v682 = vld [vmem:[#allocation6 + $0x10] sm:$0xff]
        %v683 = vld [vmem:[#allocation6 + $0x18] sm:$0xff]
        %v684 = vld [vmem:[#allocation6 + $0x20] sm:$0xff]
        %v685 = vld [vmem:[#allocation6 + $0x28] sm:$0xff]
        %v686 = vld [vmem:[#allocation6 + $0x30] sm:$0xff]
        %v687 = vld [vmem:[#allocation6 + $0x38] sm:$0xff]
        %v689 = vsel %vm240, %v680, 0
        %v692 = vsel %vm240, %v681, 0
        %v695 = vsel %vm240, %v682, 0
        %v698 = vsel %vm240, %v683, 0
        %v701 = vsel %vm240, %v684, 0
        %v704 = vsel %vm240, %v685, 0
        %v707 = vsel %vm240, %v686, 0
        %v710 = vsel %vm240, %v687, 0
        %712 = vmatpush.msra.mxu0 0.0
        %713 = vmatpush.msra.mxu0 0.0
        %714 = vmatpush.msra.mxu0 0.0
        %715 = vmatpush.msra.mxu0 0.0
        %716 = vmatpush.msra.mxu0 0.0
        %717 = vmatpush.msra.mxu0 0.0
        %718 = vmatpush.msra.mxu0 0.0
        %719 = vmatpush.msra.mxu0 0.0
        %720 = vmatpush.msra.mxu0 0.0
        %721 = vmatpush.msra.mxu0 0.0
        %722 = vmatpush.msra.mxu0 0.0
        %723 = vmatpush.msra.mxu0 0.0
        %724 = vmatpush.msra.mxu0 0.0
        %725 = vmatpush.msra.mxu0 0.0
        %726 = vmatpush.msra.mxu0 %v679
        %727 = vmatpush.msra.mxu0 %v678
        %728 = vmatmul.f32.gmra.mxu0 %v689
        %v729 = vpop.f32.mrf.mxu0
        %v730 = vadd.f32 0.0, %v729
        %731 = vmatmul.f32.gmra.mxu0 %v692
        %v732 = vpop.f32.mrf.mxu0
        %v733 = vadd.f32 0.0, %v732
        %734 = vmatmul.f32.gmra.mxu0 %v695
        %v735 = vpop.f32.mrf.mxu0
        %v736 = vadd.f32 0.0, %v735
        %737 = vmatmul.f32.gmra.mxu0 %v698
        %v738 = vpop.f32.mrf.mxu0
        %v739 = vadd.f32 0.0, %v738
        %740 = vmatmul.f32.gmra.mxu0 %v701
        %v741 = vpop.f32.mrf.mxu0
        %v742 = vadd.f32 0.0, %v741
        %743 = vmatmul.f32.gmra.mxu0 %v704
        %v744 = vpop.f32.mrf.mxu0
        %v745 = vadd.f32 0.0, %v744
        %746 = vmatmul.f32.gmra.mxu0 %v707
        %v747 = vpop.f32.mrf.mxu0
        %v748 = vadd.f32 0.0, %v747
        %749 = vmatmul.f32.gmra.mxu0 %v710
        %v750 = vpop.f32.mrf.mxu0
        %v751 = vadd.f32 0.0, %v750
        %752 = vdwg.mxu0
        %v753 = vld [vmem:[#allocation6] sm:$0xff]
        %v754 = vld [vmem:[#allocation6 + $0x8] sm:$0xff]
        %v755 = vld [vmem:[#allocation6 + $0x10] sm:$0xff]
        %v756 = vld [vmem:[#allocation6 + $0x18] sm:$0xff]
        %758 = vset.pattern.permute.xlu0 67
        %759 = vperm.xlu0 %758, %v753
        %v760 = vpop.permute.xlu0 %759
        %763 = vset.pattern.permute.xlu0 67
        %764 = vperm.xlu0 %763, %v754
        %v765 = vpop.permute.xlu0 %764
        %768 = vset.pattern.permute.xlu0 67
        %769 = vperm.xlu0 %768, %v755
        %v770 = vpop.permute.xlu0 %769
        %773 = vset.pattern.permute.xlu0 67
        %774 = vperm.xlu0 %773, %v756
        %v775 = vpop.permute.xlu0 %774
        %v777 = vmul.f32 %v760, %v730
        %v778 = vmul.f32 %v765, %v733
        %v779 = vmul.f32 %v770, %v736
        %v780 = vmul.f32 %v775, %v739
        %785 = vrot.lane.b32.xlu0 %v730, 3
        %v786 = vpop.permute.xlu0 %785
        %787 = vrot.lane.b32.xlu0 %v733, 3
        %v788 = vpop.permute.xlu0 %787
        %789 = vrot.lane.b32.xlu0 %v736, 3
        %v790 = vpop.permute.xlu0 %789
        %791 = vrot.lane.b32.xlu0 %v739, 3
        %v792 = vpop.permute.xlu0 %791
        %vm797 = vcmask 23552
        %v798 = vsel %vm797, 0.0, %v786
        %v799 = vsel %vm797, 0.0, %v788
        %v800 = vsel %vm797, 0.0, %v790
        %v801 = vsel %vm797, 0.0, %v792
        %802 = vset.pattern.permute.xlu0 64
        %803 = vperm.xlu0 %802, %v753
        %v804 = vpop.permute.xlu0 %803
        %806 = vset.pattern.permute.xlu0 64
        %807 = vperm.xlu0 %806, %v754
        %v808 = vpop.permute.xlu0 %807
        %810 = vset.pattern.permute.xlu0 64
        %811 = vperm.xlu0 %810, %v755
        %v812 = vpop.permute.xlu0 %811
        %814 = vset.pattern.permute.xlu0 64
        %815 = vperm.xlu0 %814, %v756
        %v816 = vpop.permute.xlu0 %815
        %v818 = vmul.f32 %v804, %v798
        %v819 = vmul.f32 %v808, %v799
        %v820 = vmul.f32 %v812, %v800
        %v821 = vmul.f32 %v816, %v801
        %v822 = vadd.f32 %v777, %v818
        %v823 = vadd.f32 %v778, %v819
        %v824 = vadd.f32 %v779, %v820
        %v825 = vadd.f32 %v780, %v821
        %826 = vrot.lane.b32.xlu0 %v730, 2
        %v827 = vpop.permute.xlu0 %826
        %828 = vrot.lane.b32.xlu0 %v733, 2
        %v829 = vpop.permute.xlu0 %828
        %830 = vrot.lane.b32.xlu0 %v736, 2
        %v831 = vpop.permute.xlu0 %830
        %832 = vrot.lane.b32.xlu0 %v739, 2
        %v833 = vpop.permute.xlu0 %832
        %v838 = vsel %vm234, 0.0, %v827
        %v839 = vsel %vm234, 0.0, %v829
        %v840 = vsel %vm234, 0.0, %v831
        %v841 = vsel %vm234, 0.0, %v833
        %842 = vset.pattern.permute.xlu0 65
        %843 = vperm.xlu0 %842, %v753
        %v844 = vpop.permute.xlu0 %843
        %846 = vset.pattern.permute.xlu0 65
        %847 = vperm.xlu0 %846, %v754
        %v848 = vpop.permute.xlu0 %847
        %850 = vset.pattern.permute.xlu0 65
        %851 = vperm.xlu0 %850, %v755
        %v852 = vpop.permute.xlu0 %851
        %854 = vset.pattern.permute.xlu0 65
        %855 = vperm.xlu0 %854, %v756
        %v856 = vpop.permute.xlu0 %855
        %v858 = vmul.f32 %v844, %v838
        %v859 = vmul.f32 %v848, %v839
        %v860 = vmul.f32 %v852, %v840
        %v861 = vmul.f32 %v856, %v841
        %v862 = vadd.f32 %v822, %v858
        %v863 = vadd.f32 %v823, %v859
        %v864 = vadd.f32 %v824, %v860
        %v865 = vadd.f32 %v825, %v861
        %866 = vrot.lane.b32.xlu0 %v730, 1
        %v867 = vpop.permute.xlu0 %866
        %868 = vrot.lane.b32.xlu0 %v733, 1
        %v869 = vpop.permute.xlu0 %868
        %870 = vrot.lane.b32.xlu0 %v736, 1
        %v871 = vpop.permute.xlu0 %870
        %872 = vrot.lane.b32.xlu0 %v739, 1
        %v873 = vpop.permute.xlu0 %872
        %vm878 = vcmask 7168
        %v879 = vsel %vm878, 0.0, %v867
        %v880 = vsel %vm878, 0.0, %v869
        %v881 = vsel %vm878, 0.0, %v871
        %v882 = vsel %vm878, 0.0, %v873
        %883 = vset.pattern.permute.xlu0 66
        %884 = vperm.xlu0 %883, %v753
        %v885 = vpop.permute.xlu0 %884
        %887 = vset.pattern.permute.xlu0 66
        %888 = vperm.xlu0 %887, %v754
        %v889 = vpop.permute.xlu0 %888
        %891 = vset.pattern.permute.xlu0 66
        %892 = vperm.xlu0 %891, %v755
        %v893 = vpop.permute.xlu0 %892
        %895 = vset.pattern.permute.xlu0 66
        %896 = vperm.xlu0 %895, %v756
        %v897 = vpop.permute.xlu0 %896
        %v899 = vmul.f32 %v885, %v879
        %v900 = vmul.f32 %v889, %v880
        %v901 = vmul.f32 %v893, %v881
        %v902 = vmul.f32 %v897, %v882
        %v903 = vadd.f32 %v862, %v899
        %v904 = vadd.f32 %v863, %v900
        %v905 = vadd.f32 %v864, %v901
        %v906 = vadd.f32 %v865, %v902
        %907 = vset.pattern.permute.xlu0 96
        %908 = vperm.xlu0 %907, %v753
        %v909 = vpop.permute.xlu0 %908
        %911 = vset.pattern.permute.xlu0 96
        %912 = vperm.xlu0 %911, %v754
        %v913 = vpop.permute.xlu0 %912
        %915 = vset.pattern.permute.xlu0 96
        %916 = vperm.xlu0 %915, %v755
        %v917 = vpop.permute.xlu0 %916
        %919 = vset.pattern.permute.xlu0 96
        %920 = vperm.xlu0 %919, %v756
        %v921 = vpop.permute.xlu0 %920
        %v923 = vadd.f32 %v903, %v909
        %v924 = vadd.f32 %v904, %v913
        %v925 = vadd.f32 %v905, %v917
        %v926 = vadd.f32 %v906, %v921
        %v927 = vsub.f32 0.0, %v923
        %v928 = vsub.f32 0.0, %v924
        %v929 = vsub.f32 0.0, %v925
        %v930 = vsub.f32 0.0, %v926
        %v931 = vmul.f32 %v927, 1.442695
        %v932 = vpow.pop %v931
        %v933 = vmul.f32 %v928, 1.442695
        %v934 = vpow.pop %v933
        %v935 = vmul.f32 %v929, 1.442695
        %v936 = vpow.pop %v935
        %v937 = vmul.f32 %v930, 1.442695
        %v938 = vpow.pop %v937
        %v939 = vadd.f32 %v932, 1.0
        %v940 = vadd.f32 %v934, 1.0
        %v941 = vadd.f32 %v936, 1.0
        %v942 = vadd.f32 %v938, 1.0
        %v943 = vrcp.pop %v939
        %v944 = vmul.f32 %v939, %v943
        %v945 = vsub.f32 1.0, %v944
        %v946 = vmul.f32 %v943, %v945
        %v947 = vadd.f32 %v943, %v946
        %vm948 = vweird.f32 %v939
        %vm949 = vweird.f32 %v943
        %vm950 = vmor %vm948, %vm949
        %v951 = vsel %vm950, %v943, %v947
        %v952 = vand.u32 2147483647, %v939
        %vm953 = vcmp.eq.f32.partialorder %v952, 8.507059e+37
        %v954 = vand.u32 %v939, 2147483648
        %v955 = vor.u32 1.1754944e-38, %v954
        %v956 = vsel %vm953, %v955, %v951
        %v957 = vmul.f32 1.0, %v956
        %v958 = vrcp.pop %v940
        %v959 = vmul.f32 %v940, %v958
        %v960 = vsub.f32 1.0, %v959
        %v961 = vmul.f32 %v958, %v960
        %v962 = vadd.f32 %v958, %v961
        %vm963 = vweird.f32 %v940
        %vm964 = vweird.f32 %v958
        %vm965 = vmor %vm963, %vm964
        %v966 = vsel %vm965, %v958, %v962
        %v967 = vand.u32 2147483647, %v940
        %vm968 = vcmp.eq.f32.partialorder %v967, 8.507059e+37
        %v969 = vand.u32 %v940, 2147483648
        %v970 = vor.u32 1.1754944e-38, %v969
        %v971 = vsel %vm968, %v970, %v966
        %v972 = vmul.f32 1.0, %v971
        %v973 = vrcp.pop %v941
        %v974 = vmul.f32 %v941, %v973
        %v975 = vsub.f32 1.0, %v974
        %v976 = vmul.f32 %v973, %v975
        %v977 = vadd.f32 %v973, %v976
        %vm978 = vweird.f32 %v941
        %vm979 = vweird.f32 %v973
        %vm980 = vmor %vm978, %vm979
        %v981 = vsel %vm980, %v973, %v977
        %v982 = vand.u32 2147483647, %v941
        %vm983 = vcmp.eq.f32.partialorder %v982, 8.507059e+37
        %v984 = vand.u32 %v941, 2147483648
        %v985 = vor.u32 1.1754944e-38, %v984
        %v986 = vsel %vm983, %v985, %v981
        %v987 = vmul.f32 1.0, %v986
        %v988 = vrcp.pop %v942
        %v989 = vmul.f32 %v942, %v988
        %v990 = vsub.f32 1.0, %v989
        %v991 = vmul.f32 %v988, %v990
        %v992 = vadd.f32 %v988, %v991
        %vm993 = vweird.f32 %v942
        %vm994 = vweird.f32 %v988
        %vm995 = vmor %vm993, %vm994
        %v996 = vsel %vm995, %v988, %v992
        %v997 = vand.u32 2147483647, %v942
        %vm998 = vcmp.eq.f32.partialorder %v997, 8.507059e+37
        %v999 = vand.u32 %v942, 2147483648
        %v1000 = vor.u32 1.1754944e-38, %v999
        %v1001 = vsel %vm998, %v1000, %v996
        %v1002 = vmul.f32 1.0, %v1001
        %v1003 = vmul.f32 %v923, %v957
        %v1004 = vmul.f32 %v924, %v972
        %v1005 = vmul.f32 %v925, %v987
        %v1006 = vmul.f32 %v926, %v1002
        %v1007 = vld [vmem:[#allocation6] sm:$0xff]
        %v1008 = vld [vmem:[#allocation6 + $0x8] sm:$0xff]
        %v1009 = vld [vmem:[#allocation6 + $0x10] sm:$0xff]
        %v1010 = vld [vmem:[#allocation6 + $0x18] sm:$0xff]
        %v1011 = vld [vmem:[#allocation6 + $0x20] sm:$0x1]
        %1017 = vrot.lane.b32.xlu0 %v1007, 96
        %v1018 = vpop.permute.xlu0 %1017
        %1019 = vrot.lane.b32.xlu0 %v1008, 96
        %v1020 = vpop.permute.xlu0 %1019
        %1021 = vrot.lane.b32.xlu0 %v1009, 96
        %v1022 = vpop.permute.xlu0 %1021
        %1023 = vrot.lane.b32.xlu0 %v1010, 96
        %v1024 = vpop.permute.xlu0 %1023
        %1025 = vrot.lane.b32.xlu0 %v1011, 96
        %v1026 = vpop.permute.xlu0 %1025
        %vm1027 = vcmask 261120
        %v1028 = vsel %vm1027, %v1018, 0
        %v1030 = vsel %vm1027, %v1020, 0
        %v1032 = vsel %vm1027, %v1022, 0
        %v1034 = vsel %vm1027, %v1024, 0
        %v1036 = vsel %vm1027, %v1026, 0
        %1038 = vmatpush.msra.mxu0 0.0
        %1039 = vmatpush.msra.mxu0 0.0
        %1040 = vmatpush.msra.mxu0 0.0
        %1041 = vmatpush.msra.mxu0 0.0
        %1042 = vmatpush.msra.mxu0 0.0
        %1043 = vmatpush.msra.mxu0 0.0
        %1044 = vmatpush.msra.mxu0 0.0
        %1045 = vmatpush.msra.mxu0 0.0
        %1046 = vmatpush.msra.mxu0 0.0
        %1047 = vmatpush.msra.mxu0 0.0
        %1048 = vmatpush.msra.mxu0 0.0
        %1049 = vmatpush.msra.mxu0 0.0
        %1050 = vmatpush.msra.mxu0 %v1006
        %1051 = vmatpush.msra.mxu0 %v1005
        %1052 = vmatpush.msra.mxu0 %v1004
        %1053 = vmatpush.msra.mxu0 %v1003
        %1054 = vmatmul.f32.gmra.mxu0 %v1028
        %v1055 = vpop.f32.mrf.mxu0
        %v1056 = vadd.f32 0.0, %v1055
        %1057 = vmatmul.f32.gmra.mxu0 %v1030
        %v1058 = vpop.f32.mrf.mxu0
        %v1059 = vadd.f32 0.0, %v1058
        %1060 = vmatmul.f32.gmra.mxu0 %v1032
        %v1061 = vpop.f32.mrf.mxu0
        %v1062 = vadd.f32 0.0, %v1061
        %1063 = vmatmul.f32.gmra.mxu0 %v1034
        %v1064 = vpop.f32.mrf.mxu0
        %v1065 = vadd.f32 0.0, %v1064
        %1066 = vmatmul.f32.gmra.mxu0 %v1036
        %v1067 = vpop.f32.mrf.mxu0
        %v1068 = vadd.f32 0.0, %v1067
        %1069 = vdwg.mxu0
        %1070 = vset.pattern.permute.xlu0 64
        %1071 = vperm.xlu0 %1070, %v684
        %v1072 = vpop.permute.xlu0 %1071
        %1074 = vset.pattern.permute.xlu0 64
        %1075 = vperm.xlu0 %1074, %v685
        %v1076 = vpop.permute.xlu0 %1075
        %1078 = vset.pattern.permute.xlu0 64
        %1079 = vperm.xlu0 %1078, %v686
        %v1080 = vpop.permute.xlu0 %1079
        %1082 = vset.pattern.permute.xlu0 64
        %1083 = vperm.xlu0 %1082, %v687
        %v1084 = vpop.permute.xlu0 %1083
        %v1086 = vperm.slane %v1068, 0
        %v1087 = vmul.f32 %v1072, %v1086
        %v1088 = vmul.f32 %v1076, %v1086
        %v1089 = vmul.f32 %v1080, %v1086
        %v1090 = vmul.f32 %v1084, %v1086
        %1091 = vset.pattern.permute.xlu0 96
        %1092 = vperm.xlu0 %1091, %v684
        %v1093 = vpop.permute.xlu0 %1092
        %1095 = vset.pattern.permute.xlu0 96
        %1096 = vperm.xlu0 %1095, %v685
        %v1097 = vpop.permute.xlu0 %1096
        %1099 = vset.pattern.permute.xlu0 96
        %1100 = vperm.xlu0 %1099, %v686
        %v1101 = vpop.permute.xlu0 %1100
        %1103 = vset.pattern.permute.xlu0 96
        %1104 = vperm.xlu0 %1103, %v687
        %v1105 = vpop.permute.xlu0 %1104
        %v1107 = vadd.f32 %v1087, %v1093
        %v1108 = vadd.f32 %v1088, %v1097
        %v1109 = vadd.f32 %v1089, %v1101
        %v1110 = vadd.f32 %v1090, %v1105
        %v1111 = vmax.f32 %v1107, 0.0
        %v1112 = vmax.f32 %v1108, 0.0
        %v1113 = vmax.f32 %v1109, 0.0
        %v1114 = vmax.f32 %v1110, 0.0
        %v1115 = vand.u32 2147483647, %v1107
        %v1116 = vand.u32 2147483647, %v1108
        %v1117 = vand.u32 2147483647, %v1109
        %v1118 = vand.u32 2147483647, %v1110
        %v1119 = vsub.f32 0.0, %v1115
        %v1120 = vsub.f32 0.0, %v1116
        %v1121 = vsub.f32 0.0, %v1117
        %v1122 = vsub.f32 0.0, %v1118
        %v1123 = vmul.f32 %v1119, 1.442695
        %v1124 = vpow.pop %v1123
        %v1125 = vmul.f32 %v1120, 1.442695
        %v1126 = vpow.pop %v1125
        %v1127 = vmul.f32 %v1121, 1.442695
        %v1128 = vpow.pop %v1127
        %v1129 = vmul.f32 %v1122, 1.442695
        %v1130 = vpow.pop %v1129
        %v1131 = vadd.f32 %v1124, 1.0
        %v1132 = vadd.f32 %v1126, 1.0
        %v1133 = vadd.f32 %v1128, 1.0
        %v1134 = vadd.f32 %v1130, 1.0
        %v1135 = vlog2.pop %v1131
        %v1136 = vmul.f32 %v1135, 0.6931472
        %v1137 = vlog2.pop %v1132
        %v1138 = vmul.f32 %v1137, 0.6931472
        %v1139 = vlog2.pop %v1133
        %v1140 = vmul.f32 %v1139, 0.6931472
        %v1141 = vlog2.pop %v1134
        %v1142 = vmul.f32 %v1141, 0.6931472
        %v1143 = vadd.f32 %v1111, %v1136
        %v1144 = vadd.f32 %v1112, %v1138
        %v1145 = vadd.f32 %v1113, %v1140
        %v1146 = vadd.f32 %v1114, %v1142
        %v1147 = vld [vmem:[#allocation6 + $0x28] sm:$0xff]
        %v1148 = vld [vmem:[#allocation6 + $0x30] sm:$0xff]
        %v1149 = vld [vmem:[#allocation6 + $0x38] sm:$0xff]
        %v1150 = vld [vmem:[#allocation6 + $0x40] sm:$0xff]
        %v1151 = vmul.f32 %v1143, %v1003
        %v1152 = vmul.f32 %v1144, %v1004
        %v1153 = vmul.f32 %v1145, %v1005
        %v1154 = vmul.f32 %v1146, %v1006
        %1155 = vxpose.xlu0.b32.start [1/16] %v1056, 128
        %1156 = vxpose.xlu0.b32.cont [2/16] %v1059, 128
        %1157 = vxpose.xlu0.b32.cont [3/16] 0.0, 128
        %1158 = vxpose.xlu0.b32.cont [4/16] 0.0, 128
        %1159 = vxpose.xlu0.b32.cont [5/16] 0.0, 128
        %1160 = vxpose.xlu0.b32.cont [6/16] 0.0, 128
        %1161 = vxpose.xlu0.b32.cont [7/16] 0.0, 128
        %1162 = vxpose.xlu0.b32.cont [8/16] 0.0, 128
        %1163 = vxpose.xlu0.b32.cont [9/16] 0.0, 128
        %1164 = vxpose.xlu0.b32.cont [10/16] 0.0, 128
        %1165 = vxpose.xlu0.b32.cont [11/16] 0.0, 128
        %1166 = vxpose.xlu0.b32.cont [12/16] 0.0, 128
        %1167 = vxpose.xlu0.b32.cont [13/16] 0.0, 128
        %1168 = vxpose.xlu0.b32.cont [14/16] 0.0, 128
        %1169 = vxpose.xlu0.b32.cont [15/16] 0.0, 128
        %1170 = vxpose.xlu0.b32.end [16/16] 0.0, 128
        %v1171 = vpop.trf.xlu0
        %v1172 = vpop.trf.xlu0
        %v1173 = vpop.trf.xlu0
        %v1174 = vpop.trf.xlu0
        %v1175 = vpop.trf.xlu0
        %v1176 = vpop.trf.xlu0
        %v1177 = vpop.trf.xlu0
        %v1178 = vpop.trf.xlu0
        %v1179 = vpop.trf.xlu0
        %v1180 = vpop.trf.xlu0
        %v1181 = vpop.trf.xlu0
        %v1182 = vpop.trf.xlu0
        %v1183 = vpop.trf.xlu0
        %v1184 = vpop.trf.xlu0
        %v1185 = vpop.trf.xlu0
        %v1186 = vpop.trf.xlu0
        %1187 = vxpose.xlu0.b32.start [1/16] %v1062, 128
        %1188 = vxpose.xlu0.b32.cont [2/16] %v1065, 128
        %1189 = vxpose.xlu0.b32.cont [3/16] 0.0, 128
        %1190 = vxpose.xlu0.b32.cont [4/16] 0.0, 128
        %1191 = vxpose.xlu0.b32.cont [5/16] 0.0, 128
        %1192 = vxpose.xlu0.b32.cont [6/16] 0.0, 128
        %1193 = vxpose.xlu0.b32.cont [7/16] 0.0, 128
        %1194 = vxpose.xlu0.b32.cont [8/16] 0.0, 128
        %1195 = vxpose.xlu0.b32.cont [9/16] 0.0, 128
        %1196 = vxpose.xlu0.b32.cont [10/16] 0.0, 128
        %1197 = vxpose.xlu0.b32.cont [11/16] 0.0, 128
        %1198 = vxpose.xlu0.b32.cont [12/16] 0.0, 128
        %1199 = vxpose.xlu0.b32.cont [13/16] 0.0, 128
        %1200 = vxpose.xlu0.b32.cont [14/16] 0.0, 128
        %1201 = vxpose.xlu0.b32.cont [15/16] 0.0, 128
        %1202 = vxpose.xlu0.b32.end [16/16] 0.0, 128
        %v1203 = vpop.trf.xlu0
        %v1204 = vpop.trf.xlu0
        %v1205 = vpop.trf.xlu0
        %v1206 = vpop.trf.xlu0
        %v1207 = vpop.trf.xlu0
        %v1208 = vpop.trf.xlu0
        %v1209 = vpop.trf.xlu0
        %v1210 = vpop.trf.xlu0
        %v1211 = vpop.trf.xlu0
        %v1212 = vpop.trf.xlu0
        %v1213 = vpop.trf.xlu0
        %v1214 = vpop.trf.xlu0
        %v1215 = vpop.trf.xlu0
        %v1216 = vpop.trf.xlu0
        %v1217 = vpop.trf.xlu0
        %v1218 = vpop.trf.xlu0
        %1220 = vset.pattern.permute.xlu0 0
        %1221 = vperm.xlu0 %1220, %v1143
        %v1222 = vpop.permute.xlu0 %1221
        %1225 = vset.pattern.permute.xlu0 0
        %1226 = vperm.xlu0 %1225, %v1144
        %v1227 = vpop.permute.xlu0 %1226
        %1230 = vset.pattern.permute.xlu0 0
        %1231 = vperm.xlu0 %1230, %v1145
        %v1232 = vpop.permute.xlu0 %1231
        %1235 = vset.pattern.permute.xlu0 0
        %1236 = vperm.xlu0 %1235, %v1146
        %v1237 = vpop.permute.xlu0 %1236
        %v1239 = vmul.f32 %v1222, %v1147
        %v1240 = vmul.f32 %v1227, %v1148
        %v1241 = vmul.f32 %v1232, %v1149
        %v1242 = vmul.f32 %v1237, %v1150
        %v1243 = vmul.f32 %v1239, 1.442695
        %v1244 = vpow.pop %v1243
        %v1245 = vmul.f32 %v1240, 1.442695
        %v1246 = vpow.pop %v1245
        %v1247 = vmul.f32 %v1241, 1.442695
        %v1248 = vpow.pop %v1247
        %v1249 = vmul.f32 %v1242, 1.442695
        %v1250 = vpow.pop %v1249
        %1255 = vrot.lane.b32.xlu0 %v1244, 96
        %v1256 = vpop.permute.xlu0 %1255
        %1257 = vrot.lane.b32.xlu0 %v1246, 96
        %v1258 = vpop.permute.xlu0 %1257
        %1259 = vrot.lane.b32.xlu0 %v1248, 96
        %v1260 = vpop.permute.xlu0 %1259
        %1261 = vrot.lane.b32.xlu0 %v1250, 96
        %v1262 = vpop.permute.xlu0 %1261
        %1267 = vst.msk [vmem:[#allocation2] sm:$0xff] %vm240, %v1256
        %1268 = vst.msk [vmem:[#allocation2 + $0x8] sm:$0xff] %vm240, %v1258
        %1269 = vst.msk [vmem:[#allocation2 + $0x10] sm:$0xff] %vm240, %v1260
        %1270 = vst.msk [vmem:[#allocation2 + $0x18] sm:$0xff] %vm240, %v1262
        %1271 = vset.pattern.permute.xlu0 1
        %1272 = vperm.xlu0 %1271, %v1143
        %v1273 = vpop.permute.xlu0 %1272
        %1275 = vset.pattern.permute.xlu0 1
        %1276 = vperm.xlu0 %1275, %v1144
        %v1277 = vpop.permute.xlu0 %1276
        %1279 = vset.pattern.permute.xlu0 1
        %1280 = vperm.xlu0 %1279, %v1145
        %v1281 = vpop.permute.xlu0 %1280
        %1283 = vset.pattern.permute.xlu0 1
        %1284 = vperm.xlu0 %1283, %v1146
        %v1285 = vpop.permute.xlu0 %1284
        %v1287 = vmul.f32 %v1273, %v1147
        %v1288 = vmul.f32 %v1277, %v1148
        %v1289 = vmul.f32 %v1281, %v1149
        %v1290 = vmul.f32 %v1285, %v1150
        %v1291 = vmul.f32 %v1287, 1.442695
        %v1292 = vpow.pop %v1291
        %v1293 = vmul.f32 %v1288, 1.442695
        %v1294 = vpow.pop %v1293
        %v1295 = vmul.f32 %v1289, 1.442695
        %v1296 = vpow.pop %v1295
        %v1297 = vmul.f32 %v1290, 1.442695
        %v1298 = vpow.pop %v1297
        %1303 = vrot.lane.b32.xlu0 %v1292, 96
        %v1304 = vpop.permute.xlu0 %1303
        %1305 = vrot.lane.b32.xlu0 %v1294, 96
        %v1306 = vpop.permute.xlu0 %1305
        %1307 = vrot.lane.b32.xlu0 %v1296, 96
        %v1308 = vpop.permute.xlu0 %1307
        %1309 = vrot.lane.b32.xlu0 %v1298, 96
        %v1310 = vpop.permute.xlu0 %1309
        %s1315 = scalar_lea.vmem [#allocation2], 32
        %1316 = vst.msk [vmem:[%s1315] sm:$0xff] %vm240, %v1304
        %1317 = vst.msk [vmem:[%s1315 + $0x8] sm:$0xff] %vm240, %v1306
        %1318 = vst.msk [vmem:[%s1315 + $0x10] sm:$0xff] %vm240, %v1308
        %1319 = vst.msk [vmem:[%s1315 + $0x18] sm:$0xff] %vm240, %v1310
        %1320 = vset.pattern.permute.xlu0 2
        %1321 = vperm.xlu0 %1320, %v1143
        %v1322 = vpop.permute.xlu0 %1321
        %1324 = vset.pattern.permute.xlu0 2
        %1325 = vperm.xlu0 %1324, %v1144
        %v1326 = vpop.permute.xlu0 %1325
        %1328 = vset.pattern.permute.xlu0 2
        %1329 = vperm.xlu0 %1328, %v1145
        %v1330 = vpop.permute.xlu0 %1329
        %1332 = vset.pattern.permute.xlu0 2
        %1333 = vperm.xlu0 %1332, %v1146
        %v1334 = vpop.permute.xlu0 %1333
        %v1336 = vmul.f32 %v1322, %v1147
        %v1337 = vmul.f32 %v1326, %v1148
        %v1338 = vmul.f32 %v1330, %v1149
        %v1339 = vmul.f32 %v1334, %v1150
        %v1340 = vmul.f32 %v1336, 1.442695
        %v1341 = vpow.pop %v1340
        %v1342 = vmul.f32 %v1337, 1.442695
        %v1343 = vpow.pop %v1342
        %v1344 = vmul.f32 %v1338, 1.442695
        %v1345 = vpow.pop %v1344
        %v1346 = vmul.f32 %v1339, 1.442695
        %v1347 = vpow.pop %v1346
        %1352 = vrot.lane.b32.xlu0 %v1341, 96
        %v1353 = vpop.permute.xlu0 %1352
        %1354 = vrot.lane.b32.xlu0 %v1343, 96
        %v1355 = vpop.permute.xlu0 %1354
        %1356 = vrot.lane.b32.xlu0 %v1345, 96
        %v1357 = vpop.permute.xlu0 %1356
        %1358 = vrot.lane.b32.xlu0 %v1347, 96
        %v1359 = vpop.permute.xlu0 %1358
        %s1364 = scalar_lea.vmem [#allocation2], 64
        %1365 = vst.msk [vmem:[%s1364] sm:$0xff] %vm240, %v1353
        %1366 = vst.msk [vmem:[%s1364 + $0x8] sm:$0xff] %vm240, %v1355
        %1367 = vst.msk [vmem:[%s1364 + $0x10] sm:$0xff] %vm240, %v1357
        %1368 = vst.msk [vmem:[%s1364 + $0x18] sm:$0xff] %vm240, %v1359
        %1369 = vset.pattern.permute.xlu0 3
        %1370 = vperm.xlu0 %1369, %v1143
        %v1371 = vpop.permute.xlu0 %1370
        %1373 = vset.pattern.permute.xlu0 3
        %1374 = vperm.xlu0 %1373, %v1144
        %v1375 = vpop.permute.xlu0 %1374
        %1377 = vset.pattern.permute.xlu0 3
        %1378 = vperm.xlu0 %1377, %v1145
        %v1379 = vpop.permute.xlu0 %1378
        %1381 = vset.pattern.permute.xlu0 3
        %1382 = vperm.xlu0 %1381, %v1146
        %v1383 = vpop.permute.xlu0 %1382
        %v1385 = vmul.f32 %v1371, %v1147
        %v1386 = vmul.f32 %v1375, %v1148
        %v1387 = vmul.f32 %v1379, %v1149
        %v1388 = vmul.f32 %v1383, %v1150
        %v1389 = vmul.f32 %v1385, 1.442695
        %v1390 = vpow.pop %v1389
        %v1391 = vmul.f32 %v1386, 1.442695
        %v1392 = vpow.pop %v1391
        %v1393 = vmul.f32 %v1387, 1.442695
        %v1394 = vpow.pop %v1393
        %v1395 = vmul.f32 %v1388, 1.442695
        %v1396 = vpow.pop %v1395
        %1401 = vrot.lane.b32.xlu0 %v1390, 96
        %v1402 = vpop.permute.xlu0 %1401
        %1403 = vrot.lane.b32.xlu0 %v1392, 96
        %v1404 = vpop.permute.xlu0 %1403
        %1405 = vrot.lane.b32.xlu0 %v1394, 96
        %v1406 = vpop.permute.xlu0 %1405
        %1407 = vrot.lane.b32.xlu0 %v1396, 96
        %v1408 = vpop.permute.xlu0 %1407
        %s1413 = scalar_lea.vmem [#allocation2], 96
        %1414 = vst.msk [vmem:[%s1413] sm:$0xff] %vm240, %v1402
        %1415 = vst.msk [vmem:[%s1413 + $0x8] sm:$0xff] %vm240, %v1404
        %1416 = vst.msk [vmem:[%s1413 + $0x10] sm:$0xff] %vm240, %v1406
        %1417 = vst.msk [vmem:[%s1413 + $0x18] sm:$0xff] %vm240, %v1408
        %1418 = vset.pattern.permute.xlu0 4
        %1419 = vperm.xlu0 %1418, %v1143
        %v1420 = vpop.permute.xlu0 %1419
        %1422 = vset.pattern.permute.xlu0 4
        %1423 = vperm.xlu0 %1422, %v1144
        %v1424 = vpop.permute.xlu0 %1423
        %1426 = vset.pattern.permute.xlu0 4
        %1427 = vperm.xlu0 %1426, %v1145
        %v1428 = vpop.permute.xlu0 %1427
        %1430 = vset.pattern.permute.xlu0 4
        %1431 = vperm.xlu0 %1430, %v1146
        %v1432 = vpop.permute.xlu0 %1431
        %v1434 = vmul.f32 %v1420, %v1147
        %v1435 = vmul.f32 %v1424, %v1148
        %v1436 = vmul.f32 %v1428, %v1149
        %v1437 = vmul.f32 %v1432, %v1150
        %v1438 = vmul.f32 %v1434, 1.442695
        %v1439 = vpow.pop %v1438
        %v1440 = vmul.f32 %v1435, 1.442695
        %v1441 = vpow.pop %v1440
        %v1442 = vmul.f32 %v1436, 1.442695
        %v1443 = vpow.pop %v1442
        %v1444 = vmul.f32 %v1437, 1.442695
        %v1445 = vpow.pop %v1444
        %1450 = vrot.lane.b32.xlu0 %v1439, 96
        %v1451 = vpop.permute.xlu0 %1450
        %1452 = vrot.lane.b32.xlu0 %v1441, 96
        %v1453 = vpop.permute.xlu0 %1452
        %1454 = vrot.lane.b32.xlu0 %v1443, 96
        %v1455 = vpop.permute.xlu0 %1454
        %1456 = vrot.lane.b32.xlu0 %v1445, 96
        %v1457 = vpop.permute.xlu0 %1456
        %s1462 = scalar_lea.vmem [#allocation2], 128
        %1463 = vst.msk [vmem:[%s1462] sm:$0xff] %vm240, %v1451
        %1464 = vst.msk [vmem:[%s1462 + $0x8] sm:$0xff] %vm240, %v1453
        %1465 = vst.msk [vmem:[%s1462 + $0x10] sm:$0xff] %vm240, %v1455
        %1466 = vst.msk [vmem:[%s1462 + $0x18] sm:$0xff] %vm240, %v1457
        %1467 = vset.pattern.permute.xlu0 5
        %1468 = vperm.xlu0 %1467, %v1143
        %v1469 = vpop.permute.xlu0 %1468
        %1471 = vset.pattern.permute.xlu0 5
        %1472 = vperm.xlu0 %1471, %v1144
        %v1473 = vpop.permute.xlu0 %1472
        %1475 = vset.pattern.permute.xlu0 5
        %1476 = vperm.xlu0 %1475, %v1145
        %v1477 = vpop.permute.xlu0 %1476
        %1479 = vset.pattern.permute.xlu0 5
        %1480 = vperm.xlu0 %1479, %v1146
        %v1481 = vpop.permute.xlu0 %1480
        %v1483 = vmul.f32 %v1469, %v1147
        %v1484 = vmul.f32 %v1473, %v1148
        %v1485 = vmul.f32 %v1477, %v1149
        %v1486 = vmul.f32 %v1481, %v1150
        %v1487 = vmul.f32 %v1483, 1.442695
        %v1488 = vpow.pop %v1487
        %v1489 = vmul.f32 %v1484, 1.442695
        %v1490 = vpow.pop %v1489
        %v1491 = vmul.f32 %v1485, 1.442695
        %v1492 = vpow.pop %v1491
        %v1493 = vmul.f32 %v1486, 1.442695
        %v1494 = vpow.pop %v1493
        %1499 = vrot.lane.b32.xlu0 %v1488, 96
        %v1500 = vpop.permute.xlu0 %1499
        %1501 = vrot.lane.b32.xlu0 %v1490, 96
        %v1502 = vpop.permute.xlu0 %1501
        %1503 = vrot.lane.b32.xlu0 %v1492, 96
        %v1504 = vpop.permute.xlu0 %1503
        %1505 = vrot.lane.b32.xlu0 %v1494, 96
        %v1506 = vpop.permute.xlu0 %1505
        %s1511 = scalar_lea.vmem [#allocation2], 160
        %1512 = vst.msk [vmem:[%s1511] sm:$0xff] %vm240, %v1500
        %1513 = vst.msk [vmem:[%s1511 + $0x8] sm:$0xff] %vm240, %v1502
        %1514 = vst.msk [vmem:[%s1511 + $0x10] sm:$0xff] %vm240, %v1504
        %1515 = vst.msk [vmem:[%s1511 + $0x18] sm:$0xff] %vm240, %v1506
        %1516 = vset.pattern.permute.xlu0 6
        %1517 = vperm.xlu0 %1516, %v1143
        %v1518 = vpop.permute.xlu0 %1517
        %1520 = vset.pattern.permute.xlu0 6
        %1521 = vperm.xlu0 %1520, %v1144
        %v1522 = vpop.permute.xlu0 %1521
        %1524 = vset.pattern.permute.xlu0 6
        %1525 = vperm.xlu0 %1524, %v1145
        %v1526 = vpop.permute.xlu0 %1525
        %1528 = vset.pattern.permute.xlu0 6
        %1529 = vperm.xlu0 %1528, %v1146
        %v1530 = vpop.permute.xlu0 %1529
        %v1532 = vmul.f32 %v1518, %v1147
        %v1533 = vmul.f32 %v1522, %v1148
        %v1534 = vmul.f32 %v1526, %v1149
        %v1535 = vmul.f32 %v1530, %v1150
        %v1536 = vmul.f32 %v1532, 1.442695
        %v1537 = vpow.pop %v1536
        %v1538 = vmul.f32 %v1533, 1.442695
        %v1539 = vpow.pop %v1538
        %v1540 = vmul.f32 %v1534, 1.442695
        %v1541 = vpow.pop %v1540
        %v1542 = vmul.f32 %v1535, 1.442695
        %v1543 = vpow.pop %v1542
        %1548 = vrot.lane.b32.xlu0 %v1537, 96
        %v1549 = vpop.permute.xlu0 %1548
        %1550 = vrot.lane.b32.xlu0 %v1539, 96
        %v1551 = vpop.permute.xlu0 %1550
        %1552 = vrot.lane.b32.xlu0 %v1541, 96
        %v1553 = vpop.permute.xlu0 %1552
        %1554 = vrot.lane.b32.xlu0 %v1543, 96
        %v1555 = vpop.permute.xlu0 %1554
        %s1560 = scalar_lea.vmem [#allocation2], 192
        %1561 = vst.msk [vmem:[%s1560] sm:$0xff] %vm240, %v1549
        %1562 = vst.msk [vmem:[%s1560 + $0x8] sm:$0xff] %vm240, %v1551
        %1563 = vst.msk [vmem:[%s1560 + $0x10] sm:$0xff] %vm240, %v1553
        %1564 = vst.msk [vmem:[%s1560 + $0x18] sm:$0xff] %vm240, %v1555
        %1565 = vset.pattern.permute.xlu0 7
        %1566 = vperm.xlu0 %1565, %v1143
        %v1567 = vpop.permute.xlu0 %1566
        %1569 = vset.pattern.permute.xlu0 7
        %1570 = vperm.xlu0 %1569, %v1144
        %v1571 = vpop.permute.xlu0 %1570
        %1573 = vset.pattern.permute.xlu0 7
        %1574 = vperm.xlu0 %1573, %v1145
        %v1575 = vpop.permute.xlu0 %1574
        %1577 = vset.pattern.permute.xlu0 7
        %1578 = vperm.xlu0 %1577, %v1146
        %v1579 = vpop.permute.xlu0 %1578
        %v1581 = vmul.f32 %v1567, %v1147
        %v1582 = vmul.f32 %v1571, %v1148
        %v1583 = vmul.f32 %v1575, %v1149
        %v1584 = vmul.f32 %v1579, %v1150
        %v1585 = vmul.f32 %v1581, 1.442695
        %v1586 = vpow.pop %v1585
        %v1587 = vmul.f32 %v1582, 1.442695
        %v1588 = vpow.pop %v1587
        %v1589 = vmul.f32 %v1583, 1.442695
        %v1590 = vpow.pop %v1589
        %v1591 = vmul.f32 %v1584, 1.442695
        %v1592 = vpow.pop %v1591
        %1597 = vrot.lane.b32.xlu0 %v1586, 96
        %v1598 = vpop.permute.xlu0 %1597
        %1599 = vrot.lane.b32.xlu0 %v1588, 96
        %v1600 = vpop.permute.xlu0 %1599
        %1601 = vrot.lane.b32.xlu0 %v1590, 96
        %v1602 = vpop.permute.xlu0 %1601
        %1603 = vrot.lane.b32.xlu0 %v1592, 96
        %v1604 = vpop.permute.xlu0 %1603
        %s1609 = scalar_lea.vmem [#allocation2], 224
        %1610 = vst.msk [vmem:[%s1609] sm:$0xff] %vm240, %v1598
        %1611 = vst.msk [vmem:[%s1609 + $0x8] sm:$0xff] %vm240, %v1600
        %1612 = vst.msk [vmem:[%s1609 + $0x10] sm:$0xff] %vm240, %v1602
        %1613 = vst.msk [vmem:[%s1609 + $0x18] sm:$0xff] %vm240, %v1604
        %1614 = vset.pattern.permute.xlu0 8
        %1615 = vperm.xlu0 %1614, %v1143
        %v1616 = vpop.permute.xlu0 %1615
        %1618 = vset.pattern.permute.xlu0 8
        %1619 = vperm.xlu0 %1618, %v1144
        %v1620 = vpop.permute.xlu0 %1619
        %1622 = vset.pattern.permute.xlu0 8
        %1623 = vperm.xlu0 %1622, %v1145
        %v1624 = vpop.permute.xlu0 %1623
        %1626 = vset.pattern.permute.xlu0 8
        %1627 = vperm.xlu0 %1626, %v1146
        %v1628 = vpop.permute.xlu0 %1627
        %v1630 = vmul.f32 %v1616, %v1147
        %v1631 = vmul.f32 %v1620, %v1148
        %v1632 = vmul.f32 %v1624, %v1149
        %v1633 = vmul.f32 %v1628, %v1150
        %v1634 = vmul.f32 %v1630, 1.442695
        %v1635 = vpow.pop %v1634
        %v1636 = vmul.f32 %v1631, 1.442695
        %v1637 = vpow.pop %v1636
        %v1638 = vmul.f32 %v1632, 1.442695
        %v1639 = vpow.pop %v1638
        %v1640 = vmul.f32 %v1633, 1.442695
        %v1641 = vpow.pop %v1640
        %1646 = vrot.lane.b32.xlu0 %v1635, 96
        %v1647 = vpop.permute.xlu0 %1646
        %1648 = vrot.lane.b32.xlu0 %v1637, 96
        %v1649 = vpop.permute.xlu0 %1648
        %1650 = vrot.lane.b32.xlu0 %v1639, 96
        %v1651 = vpop.permute.xlu0 %1650
        %1652 = vrot.lane.b32.xlu0 %v1641, 96
        %v1653 = vpop.permute.xlu0 %1652
        %s1658 = scalar_lea.vmem [#allocation2], 256
        %1659 = vst.msk [vmem:[%s1658] sm:$0xff] %vm240, %v1647
        %1660 = vst.msk [vmem:[%s1658 + $0x8] sm:$0xff] %vm240, %v1649
        %1661 = vst.msk [vmem:[%s1658 + $0x10] sm:$0xff] %vm240, %v1651
        %1662 = vst.msk [vmem:[%s1658 + $0x18] sm:$0xff] %vm240, %v1653
        %1663 = vset.pattern.permute.xlu0 9
        %1664 = vperm.xlu0 %1663, %v1143
        %v1665 = vpop.permute.xlu0 %1664
        %1667 = vset.pattern.permute.xlu0 9
        %1668 = vperm.xlu0 %1667, %v1144
        %v1669 = vpop.permute.xlu0 %1668
        %1671 = vset.pattern.permute.xlu0 9
        %1672 = vperm.xlu0 %1671, %v1145
        %v1673 = vpop.permute.xlu0 %1672
        %1675 = vset.pattern.permute.xlu0 9
        %1676 = vperm.xlu0 %1675, %v1146
        %v1677 = vpop.permute.xlu0 %1676
        %v1679 = vmul.f32 %v1665, %v1147
        %v1680 = vmul.f32 %v1669, %v1148
        %v1681 = vmul.f32 %v1673, %v1149
        %v1682 = vmul.f32 %v1677, %v1150
        %v1683 = vmul.f32 %v1679, 1.442695
        %v1684 = vpow.pop %v1683
        %v1685 = vmul.f32 %v1680, 1.442695
        %v1686 = vpow.pop %v1685
        %v1687 = vmul.f32 %v1681, 1.442695
        %v1688 = vpow.pop %v1687
        %v1689 = vmul.f32 %v1682, 1.442695
        %v1690 = vpow.pop %v1689
        %1695 = vrot.lane.b32.xlu0 %v1684, 96
        %v1696 = vpop.permute.xlu0 %1695
        %1697 = vrot.lane.b32.xlu0 %v1686, 96
        %v1698 = vpop.permute.xlu0 %1697
        %1699 = vrot.lane.b32.xlu0 %v1688, 96
        %v1700 = vpop.permute.xlu0 %1699
        %1701 = vrot.lane.b32.xlu0 %v1690, 96
        %v1702 = vpop.permute.xlu0 %1701
        %s1707 = scalar_lea.vmem [#allocation2], 288
        %1708 = vst.msk [vmem:[%s1707] sm:$0xff] %vm240, %v1696
        %1709 = vst.msk [vmem:[%s1707 + $0x8] sm:$0xff] %vm240, %v1698
        %1710 = vst.msk [vmem:[%s1707 + $0x10] sm:$0xff] %vm240, %v1700
        %1711 = vst.msk [vmem:[%s1707 + $0x18] sm:$0xff] %vm240, %v1702
        %1712 = vset.pattern.permute.xlu0 10
        %1713 = vperm.xlu0 %1712, %v1143
        %v1714 = vpop.permute.xlu0 %1713
        %1716 = vset.pattern.permute.xlu0 10
        %1717 = vperm.xlu0 %1716, %v1144
        %v1718 = vpop.permute.xlu0 %1717
        %1720 = vset.pattern.permute.xlu0 10
        %1721 = vperm.xlu0 %1720, %v1145
        %v1722 = vpop.permute.xlu0 %1721
        %1724 = vset.pattern.permute.xlu0 10
        %1725 = vperm.xlu0 %1724, %v1146
        %v1726 = vpop.permute.xlu0 %1725
        %v1728 = vmul.f32 %v1714, %v1147
        %v1729 = vmul.f32 %v1718, %v1148
        %v1730 = vmul.f32 %v1722, %v1149
        %v1731 = vmul.f32 %v1726, %v1150
        %v1732 = vmul.f32 %v1728, 1.442695
        %v1733 = vpow.pop %v1732
        %v1734 = vmul.f32 %v1729, 1.442695
        %v1735 = vpow.pop %v1734
        %v1736 = vmul.f32 %v1730, 1.442695
        %v1737 = vpow.pop %v1736
        %v1738 = vmul.f32 %v1731, 1.442695
        %v1739 = vpow.pop %v1738
        %1744 = vrot.lane.b32.xlu0 %v1733, 96
        %v1745 = vpop.permute.xlu0 %1744
        %1746 = vrot.lane.b32.xlu0 %v1735, 96
        %v1747 = vpop.permute.xlu0 %1746
        %1748 = vrot.lane.b32.xlu0 %v1737, 96
        %v1749 = vpop.permute.xlu0 %1748
        %1750 = vrot.lane.b32.xlu0 %v1739, 96
        %v1751 = vpop.permute.xlu0 %1750
        %s1756 = scalar_lea.vmem [#allocation2], 320
        %1757 = vst.msk [vmem:[%s1756] sm:$0xff] %vm240, %v1745
        %1758 = vst.msk [vmem:[%s1756 + $0x8] sm:$0xff] %vm240, %v1747
        %1759 = vst.msk [vmem:[%s1756 + $0x10] sm:$0xff] %vm240, %v1749
        %1760 = vst.msk [vmem:[%s1756 + $0x18] sm:$0xff] %vm240, %v1751
        %1761 = vset.pattern.permute.xlu0 11
        %1762 = vperm.xlu0 %1761, %v1143
        %v1763 = vpop.permute.xlu0 %1762
        %1765 = vset.pattern.permute.xlu0 11
        %1766 = vperm.xlu0 %1765, %v1144
        %v1767 = vpop.permute.xlu0 %1766
        %1769 = vset.pattern.permute.xlu0 11
        %1770 = vperm.xlu0 %1769, %v1145
        %v1771 = vpop.permute.xlu0 %1770
        %1773 = vset.pattern.permute.xlu0 11
        %1774 = vperm.xlu0 %1773, %v1146
        %v1775 = vpop.permute.xlu0 %1774
        %v1777 = vmul.f32 %v1763, %v1147
        %v1778 = vmul.f32 %v1767, %v1148
        %v1779 = vmul.f32 %v1771, %v1149
        %v1780 = vmul.f32 %v1775, %v1150
        %v1781 = vmul.f32 %v1777, 1.442695
        %v1782 = vpow.pop %v1781
        %v1783 = vmul.f32 %v1778, 1.442695
        %v1784 = vpow.pop %v1783
        %v1785 = vmul.f32 %v1779, 1.442695
        %v1786 = vpow.pop %v1785
        %v1787 = vmul.f32 %v1780, 1.442695
        %v1788 = vpow.pop %v1787
        %1793 = vrot.lane.b32.xlu0 %v1782, 96
        %v1794 = vpop.permute.xlu0 %1793
        %1795 = vrot.lane.b32.xlu0 %v1784, 96
        %v1796 = vpop.permute.xlu0 %1795
        %1797 = vrot.lane.b32.xlu0 %v1786, 96
        %v1798 = vpop.permute.xlu0 %1797
        %1799 = vrot.lane.b32.xlu0 %v1788, 96
        %v1800 = vpop.permute.xlu0 %1799
        %s1805 = scalar_lea.vmem [#allocation2], 352
        %1806 = vst.msk [vmem:[%s1805] sm:$0xff] %vm240, %v1794
        %1807 = vst.msk [vmem:[%s1805 + $0x8] sm:$0xff] %vm240, %v1796
        %1808 = vst.msk [vmem:[%s1805 + $0x10] sm:$0xff] %vm240, %v1798
        %1809 = vst.msk [vmem:[%s1805 + $0x18] sm:$0xff] %vm240, %v1800
        %1810 = vset.pattern.permute.xlu0 12
        %1811 = vperm.xlu0 %1810, %v1143
        %v1812 = vpop.permute.xlu0 %1811
        %1814 = vset.pattern.permute.xlu0 12
        %1815 = vperm.xlu0 %1814, %v1144
        %v1816 = vpop.permute.xlu0 %1815
        %1818 = vset.pattern.permute.xlu0 12
        %1819 = vperm.xlu0 %1818, %v1145
        %v1820 = vpop.permute.xlu0 %1819
        %1822 = vset.pattern.permute.xlu0 12
        %1823 = vperm.xlu0 %1822, %v1146
        %v1824 = vpop.permute.xlu0 %1823
        %v1826 = vmul.f32 %v1812, %v1147
        %v1827 = vmul.f32 %v1816, %v1148
        %v1828 = vmul.f32 %v1820, %v1149
        %v1829 = vmul.f32 %v1824, %v1150
        %v1830 = vmul.f32 %v1826, 1.442695
        %v1831 = vpow.pop %v1830
        %v1832 = vmul.f32 %v1827, 1.442695
        %v1833 = vpow.pop %v1832
        %v1834 = vmul.f32 %v1828, 1.442695
        %v1835 = vpow.pop %v1834
        %v1836 = vmul.f32 %v1829, 1.442695
        %v1837 = vpow.pop %v1836
        %1842 = vrot.lane.b32.xlu0 %v1831, 96
        %v1843 = vpop.permute.xlu0 %1842
        %1844 = vrot.lane.b32.xlu0 %v1833, 96
        %v1845 = vpop.permute.xlu0 %1844
        %1846 = vrot.lane.b32.xlu0 %v1835, 96
        %v1847 = vpop.permute.xlu0 %1846
        %1848 = vrot.lane.b32.xlu0 %v1837, 96
        %v1849 = vpop.permute.xlu0 %1848
        %s1854 = scalar_lea.vmem [#allocation2], 384
        %1855 = vst.msk [vmem:[%s1854] sm:$0xff] %vm240, %v1843
        %1856 = vst.msk [vmem:[%s1854 + $0x8] sm:$0xff] %vm240, %v1845
        %1857 = vst.msk [vmem:[%s1854 + $0x10] sm:$0xff] %vm240, %v1847
        %1858 = vst.msk [vmem:[%s1854 + $0x18] sm:$0xff] %vm240, %v1849
        %1859 = vset.pattern.permute.xlu0 13
        %1860 = vperm.xlu0 %1859, %v1143
        %v1861 = vpop.permute.xlu0 %1860
        %1863 = vset.pattern.permute.xlu0 13
        %1864 = vperm.xlu0 %1863, %v1144
        %v1865 = vpop.permute.xlu0 %1864
        %1867 = vset.pattern.permute.xlu0 13
        %1868 = vperm.xlu0 %1867, %v1145
        %v1869 = vpop.permute.xlu0 %1868
        %1871 = vset.pattern.permute.xlu0 13
        %1872 = vperm.xlu0 %1871, %v1146
        %v1873 = vpop.permute.xlu0 %1872
        %v1875 = vmul.f32 %v1861, %v1147
        %v1876 = vmul.f32 %v1865, %v1148
        %v1877 = vmul.f32 %v1869, %v1149
        %v1878 = vmul.f32 %v1873, %v1150
        %v1879 = vmul.f32 %v1875, 1.442695
        %v1880 = vpow.pop %v1879
        %v1881 = vmul.f32 %v1876, 1.442695
        %v1882 = vpow.pop %v1881
        %v1883 = vmul.f32 %v1877, 1.442695
        %v1884 = vpow.pop %v1883
        %v1885 = vmul.f32 %v1878, 1.442695
        %v1886 = vpow.pop %v1885
        %1891 = vrot.lane.b32.xlu0 %v1880, 96
        %v1892 = vpop.permute.xlu0 %1891
        %1893 = vrot.lane.b32.xlu0 %v1882, 96
        %v1894 = vpop.permute.xlu0 %1893
        %1895 = vrot.lane.b32.xlu0 %v1884, 96
        %v1896 = vpop.permute.xlu0 %1895
        %1897 = vrot.lane.b32.xlu0 %v1886, 96
        %v1898 = vpop.permute.xlu0 %1897
        %s1903 = scalar_lea.vmem [#allocation2], 416
        %1904 = vst.msk [vmem:[%s1903] sm:$0xff] %vm240, %v1892
        %1905 = vst.msk [vmem:[%s1903 + $0x8] sm:$0xff] %vm240, %v1894
        %1906 = vst.msk [vmem:[%s1903 + $0x10] sm:$0xff] %vm240, %v1896
        %1907 = vst.msk [vmem:[%s1903 + $0x18] sm:$0xff] %vm240, %v1898
        %1908 = vset.pattern.permute.xlu0 14
        %1909 = vperm.xlu0 %1908, %v1143
        %v1910 = vpop.permute.xlu0 %1909
        %1912 = vset.pattern.permute.xlu0 14
        %1913 = vperm.xlu0 %1912, %v1144
        %v1914 = vpop.permute.xlu0 %1913
        %1916 = vset.pattern.permute.xlu0 14
        %1917 = vperm.xlu0 %1916, %v1145
        %v1918 = vpop.permute.xlu0 %1917
        %1920 = vset.pattern.permute.xlu0 14
        %1921 = vperm.xlu0 %1920, %v1146
        %v1922 = vpop.permute.xlu0 %1921
        %v1924 = vmul.f32 %v1910, %v1147
        %v1925 = vmul.f32 %v1914, %v1148
        %v1926 = vmul.f32 %v1918, %v1149
        %v1927 = vmul.f32 %v1922, %v1150
        %v1928 = vmul.f32 %v1924, 1.442695
        %v1929 = vpow.pop %v1928
        %v1930 = vmul.f32 %v1925, 1.442695
        %v1931 = vpow.pop %v1930
        %v1932 = vmul.f32 %v1926, 1.442695
        %v1933 = vpow.pop %v1932
        %v1934 = vmul.f32 %v1927, 1.442695
        %v1935 = vpow.pop %v1934
        %1940 = vrot.lane.b32.xlu0 %v1929, 96
        %v1941 = vpop.permute.xlu0 %1940
        %1942 = vrot.lane.b32.xlu0 %v1931, 96
        %v1943 = vpop.permute.xlu0 %1942
        %1944 = vrot.lane.b32.xlu0 %v1933, 96
        %v1945 = vpop.permute.xlu0 %1944
        %1946 = vrot.lane.b32.xlu0 %v1935, 96
        %v1947 = vpop.permute.xlu0 %1946
        %s1952 = scalar_lea.vmem [#allocation2], 448
        %1953 = vst.msk [vmem:[%s1952] sm:$0xff] %vm240, %v1941
        %1954 = vst.msk [vmem:[%s1952 + $0x8] sm:$0xff] %vm240, %v1943
        %1955 = vst.msk [vmem:[%s1952 + $0x10] sm:$0xff] %vm240, %v1945
        %1956 = vst.msk [vmem:[%s1952 + $0x18] sm:$0xff] %vm240, %v1947
        %1957 = vset.pattern.permute.xlu0 15
        %1958 = vperm.xlu0 %1957, %v1143
        %v1959 = vpop.permute.xlu0 %1958
        %1961 = vset.pattern.permute.xlu0 15
        %1962 = vperm.xlu0 %1961, %v1144
        %v1963 = vpop.permute.xlu0 %1962
        %1965 = vset.pattern.permute.xlu0 15
        %1966 = vperm.xlu0 %1965, %v1145
        %v1967 = vpop.permute.xlu0 %1966
        %1969 = vset.pattern.permute.xlu0 15
        %1970 = vperm.xlu0 %1969, %v1146
        %v1971 = vpop.permute.xlu0 %1970
        %v1973 = vmul.f32 %v1959, %v1147
        %v1974 = vmul.f32 %v1963, %v1148
        %v1975 = vmul.f32 %v1967, %v1149
        %v1976 = vmul.f32 %v1971, %v1150
        %v1977 = vmul.f32 %v1973, 1.442695
        %v1978 = vpow.pop %v1977
        %v1979 = vmul.f32 %v1974, 1.442695
        %v1980 = vpow.pop %v1979
        %v1981 = vmul.f32 %v1975, 1.442695
        %v1982 = vpow.pop %v1981
        %v1983 = vmul.f32 %v1976, 1.442695
        %v1984 = vpow.pop %v1983
        %1989 = vrot.lane.b32.xlu0 %v1978, 96
        %v1990 = vpop.permute.xlu0 %1989
        %1991 = vrot.lane.b32.xlu0 %v1980, 96
        %v1992 = vpop.permute.xlu0 %1991
        %1993 = vrot.lane.b32.xlu0 %v1982, 96
        %v1994 = vpop.permute.xlu0 %1993
        %1995 = vrot.lane.b32.xlu0 %v1984, 96
        %v1996 = vpop.permute.xlu0 %1995
        %s2001 = scalar_lea.vmem [#allocation2], 480
        %2002 = vst.msk [vmem:[%s2001] sm:$0xff] %vm240, %v1990
        %2003 = vst.msk [vmem:[%s2001 + $0x8] sm:$0xff] %vm240, %v1992
        %2004 = vst.msk [vmem:[%s2001 + $0x10] sm:$0xff] %vm240, %v1994
        %2005 = vst.msk [vmem:[%s2001 + $0x18] sm:$0xff] %vm240, %v1996
        %v2006 = vlaneseq
        %v2007 = vand.u32 %v2006, 127
        %2009 = vset.pattern.permute.xlu0 0
        %2010 = vperm.xlu0 %2009, %v1151
        %v2011 = vpop.permute.xlu0 %2010
        %2014 = vset.pattern.permute.xlu0 0
        %2015 = vperm.xlu0 %2014, %v1152
        %v2016 = vpop.permute.xlu0 %2015
        %2019 = vset.pattern.permute.xlu0 0
        %2020 = vperm.xlu0 %2019, %v1153
        %v2021 = vpop.permute.xlu0 %2020
        %2024 = vset.pattern.permute.xlu0 0
        %2025 = vperm.xlu0 %2024, %v1154
        %v2026 = vpop.permute.xlu0 %2025
        %v2028 = vperm.slane %v1171, 0
        %v2029 = vmul.f32 %v2011, %v2028
        %v2030 = vmul.f32 %v2016, %v2028
        %v2031 = vmul.f32 %v2021, %v2028
        %v2032 = vmul.f32 %v2026, %v2028
        %v2033 = vld [vmem:[#allocation2] sm:$0xff]
        %v2034 = vld [vmem:[#allocation2 + $0x8] sm:$0xff]
        %v2035 = vld [vmem:[#allocation2 + $0x10] sm:$0xff]
        %v2036 = vld [vmem:[#allocation2 + $0x18] sm:$0xff]
        %v2037 = vmul.f32 %v2033, 0.0
        %v2038 = vmul.f32 %v2034, 0.0
        %v2039 = vmul.f32 %v2035, 0.0
        %v2040 = vmul.f32 %v2036, 0.0
        %v2041 = vadd.f32 %v2037, %v2029
        %v2042 = vadd.f32 %v2038, %v2030
        %v2043 = vadd.f32 %v2039, %v2031
        %v2044 = vadd.f32 %v2040, %v2032
        %v2045 = vperm.slane %v1203, 0
        %v2046 = vmul.f32 %v2041, %v2045
        %v2047 = vmul.f32 %v2042, %v2045
        %v2048 = vmul.f32 %v2043, %v2045
        %v2049 = vmul.f32 %v2044, %v2045
        %v2050 = vsel %vm240, %v2046, 0.0
        %2051 = vadd.xlane.f32.xlu0 %v2050
        %v2052 = vpop.xlane.xlu0 %2051
        %v2053 = vsel %vm240, %v2047, 0.0
        %2054 = vadd.xlane.f32.xlu0 %v2053
        %v2055 = vpop.xlane.xlu0 %2054
        %v2056 = vsel %vm240, %v2048, 0.0
        %2057 = vadd.xlane.f32.xlu0 %v2056
        %v2058 = vpop.xlane.xlu0 %2057
        %v2059 = vsel %vm240, %v2049, 0.0
        %2060 = vadd.xlane.f32.xlu0 %v2059
        %v2061 = vpop.xlane.xlu0 %2060
        %vm2062 = vcmp.eq.s32.totalorder %v2007, 0
        %v2063 = vsel %vm2062, 1, 0
        %vm2064 = vcmp.eq.s32.totalorder %v2063, 1
        %v2065 = vsel %vm2064, %v2052, 0.0
        %v2066 = vsel %vm2064, %v2055, 0.0
        %v2067 = vsel %vm2064, %v2058, 0.0
        %v2068 = vsel %vm2064, %v2061, 0.0
        %2069 = vset.pattern.permute.xlu0 1
        %2070 = vperm.xlu0 %2069, %v1151
        %v2071 = vpop.permute.xlu0 %2070
        %2073 = vset.pattern.permute.xlu0 1
        %2074 = vperm.xlu0 %2073, %v1152
        %v2075 = vpop.permute.xlu0 %2074
        %2077 = vset.pattern.permute.xlu0 1
        %2078 = vperm.xlu0 %2077, %v1153
        %v2079 = vpop.permute.xlu0 %2078
        %2081 = vset.pattern.permute.xlu0 1
        %2082 = vperm.xlu0 %2081, %v1154
        %v2083 = vpop.permute.xlu0 %2082
        %v2085 = vperm.slane %v1171, 1
        %v2086 = vmul.f32 %v2071, %v2085
        %v2087 = vmul.f32 %v2075, %v2085
        %v2088 = vmul.f32 %v2079, %v2085
        %v2089 = vmul.f32 %v2083, %v2085
        %v2090 = vld [vmem:[%s1315] sm:$0xff]
        %v2091 = vld [vmem:[%s1315 + $0x8] sm:$0xff]
        %v2092 = vld [vmem:[%s1315 + $0x10] sm:$0xff]
        %v2093 = vld [vmem:[%s1315 + $0x18] sm:$0xff]
        %v2094 = vmul.f32 %v2090, %v2041
        %v2095 = vmul.f32 %v2091, %v2042
        %v2096 = vmul.f32 %v2092, %v2043
        %v2097 = vmul.f32 %v2093, %v2044
        %v2098 = vadd.f32 %v2094, %v2086
        %v2099 = vadd.f32 %v2095, %v2087
        %v2100 = vadd.f32 %v2096, %v2088
        %v2101 = vadd.f32 %v2097, %v2089
        %v2102 = vperm.slane %v1203, 1
        %v2103 = vmul.f32 %v2098, %v2102
        %v2104 = vmul.f32 %v2099, %v2102
        %v2105 = vmul.f32 %v2100, %v2102
        %v2106 = vmul.f32 %v2101, %v2102
        %v2107 = vsel %vm240, %v2103, 0.0
        %2108 = vadd.xlane.f32.xlu0 %v2107
        %v2109 = vpop.xlane.xlu0 %2108
        %v2110 = vsel %vm240, %v2104, 0.0
        %2111 = vadd.xlane.f32.xlu0 %v2110
        %v2112 = vpop.xlane.xlu0 %2111
        %v2113 = vsel %vm240, %v2105, 0.0
        %2114 = vadd.xlane.f32.xlu0 %v2113
        %v2115 = vpop.xlane.xlu0 %2114
        %v2116 = vsel %vm240, %v2106, 0.0
        %2117 = vadd.xlane.f32.xlu0 %v2116
        %v2118 = vpop.xlane.xlu0 %2117
        %vm2119 = vcmp.eq.s32.totalorder %v2007, 1
        %v2120 = vsel %vm2119, 1, 0
        %vm2121 = vcmp.eq.s32.totalorder %v2120, 1
        %v2122 = vsel %vm2121, %v2109, %v2065
        %v2123 = vsel %vm2121, %v2112, %v2066
        %v2124 = vsel %vm2121, %v2115, %v2067
        %v2125 = vsel %vm2121, %v2118, %v2068
        %2126 = vset.pattern.permute.xlu0 2
        %2127 = vperm.xlu0 %2126, %v1151
        %v2128 = vpop.permute.xlu0 %2127
        %2130 = vset.pattern.permute.xlu0 2
        %2131 = vperm.xlu0 %2130, %v1152
        %v2132 = vpop.permute.xlu0 %2131
        %2134 = vset.pattern.permute.xlu0 2
        %2135 = vperm.xlu0 %2134, %v1153
        %v2136 = vpop.permute.xlu0 %2135
        %2138 = vset.pattern.permute.xlu0 2
        %2139 = vperm.xlu0 %2138, %v1154
        %v2140 = vpop.permute.xlu0 %2139
        %v2142 = vperm.slane %v1171, 2
        %v2143 = vmul.f32 %v2128, %v2142
        %v2144 = vmul.f32 %v2132, %v2142
        %v2145 = vmul.f32 %v2136, %v2142
        %v2146 = vmul.f32 %v2140, %v2142
        %v2147 = vld [vmem:[%s1364] sm:$0xff]
        %v2148 = vld [vmem:[%s1364 + $0x8] sm:$0xff]
        %v2149 = vld [vmem:[%s1364 + $0x10] sm:$0xff]
        %v2150 = vld [vmem:[%s1364 + $0x18] sm:$0xff]
        %v2151 = vmul.f32 %v2147, %v2098
        %v2152 = vmul.f32 %v2148, %v2099
        %v2153 = vmul.f32 %v2149, %v2100
        %v2154 = vmul.f32 %v2150, %v2101
        %v2155 = vadd.f32 %v2151, %v2143
        %v2156 = vadd.f32 %v2152, %v2144
        %v2157 = vadd.f32 %v2153, %v2145
        %v2158 = vadd.f32 %v2154, %v2146
        %v2159 = vperm.slane %v1203, 2
        %v2160 = vmul.f32 %v2155, %v2159
        %v2161 = vmul.f32 %v2156, %v2159
        %v2162 = vmul.f32 %v2157, %v2159
        %v2163 = vmul.f32 %v2158, %v2159
        %v2164 = vsel %vm240, %v2160, 0.0
        %2165 = vadd.xlane.f32.xlu0 %v2164
        %v2166 = vpop.xlane.xlu0 %2165
        %v2167 = vsel %vm240, %v2161, 0.0
        %2168 = vadd.xlane.f32.xlu0 %v2167
        %v2169 = vpop.xlane.xlu0 %2168
        %v2170 = vsel %vm240, %v2162, 0.0
        %2171 = vadd.xlane.f32.xlu0 %v2170
        %v2172 = vpop.xlane.xlu0 %2171
        %v2173 = vsel %vm240, %v2163, 0.0
        %2174 = vadd.xlane.f32.xlu0 %v2173
        %v2175 = vpop.xlane.xlu0 %2174
        %vm2176 = vcmp.eq.s32.totalorder %v2007, 2
        %v2177 = vsel %vm2176, 1, 0
        %vm2178 = vcmp.eq.s32.totalorder %v2177, 1
        %v2179 = vsel %vm2178, %v2166, %v2122
        %v2180 = vsel %vm2178, %v2169, %v2123
        %v2181 = vsel %vm2178, %v2172, %v2124
        %v2182 = vsel %vm2178, %v2175, %v2125
        %2183 = vset.pattern.permute.xlu0 3
        %2184 = vperm.xlu0 %2183, %v1151
        %v2185 = vpop.permute.xlu0 %2184
        %2187 = vset.pattern.permute.xlu0 3
        %2188 = vperm.xlu0 %2187, %v1152
        %v2189 = vpop.permute.xlu0 %2188
        %2191 = vset.pattern.permute.xlu0 3
        %2192 = vperm.xlu0 %2191, %v1153
        %v2193 = vpop.permute.xlu0 %2192
        %2195 = vset.pattern.permute.xlu0 3
        %2196 = vperm.xlu0 %2195, %v1154
        %v2197 = vpop.permute.xlu0 %2196
        %v2199 = vperm.slane %v1171, 3
        %v2200 = vmul.f32 %v2185, %v2199
        %v2201 = vmul.f32 %v2189, %v2199
        %v2202 = vmul.f32 %v2193, %v2199
        %v2203 = vmul.f32 %v2197, %v2199
        %v2204 = vld [vmem:[%s1413] sm:$0xff]
        %v2205 = vld [vmem:[%s1413 + $0x8] sm:$0xff]
        %v2206 = vld [vmem:[%s1413 + $0x10] sm:$0xff]
        %v2207 = vld [vmem:[%s1413 + $0x18] sm:$0xff]
        %v2208 = vmul.f32 %v2204, %v2155
        %v2209 = vmul.f32 %v2205, %v2156
        %v2210 = vmul.f32 %v2206, %v2157
        %v2211 = vmul.f32 %v2207, %v2158
        %v2212 = vadd.f32 %v2208, %v2200
        %v2213 = vadd.f32 %v2209, %v2201
        %v2214 = vadd.f32 %v2210, %v2202
        %v2215 = vadd.f32 %v2211, %v2203
        %v2216 = vperm.slane %v1203, 3
        %v2217 = vmul.f32 %v2212, %v2216
        %v2218 = vmul.f32 %v2213, %v2216
        %v2219 = vmul.f32 %v2214, %v2216
        %v2220 = vmul.f32 %v2215, %v2216
        %v2221 = vsel %vm240, %v2217, 0.0
        %2222 = vadd.xlane.f32.xlu0 %v2221
        %v2223 = vpop.xlane.xlu0 %2222
        %v2224 = vsel %vm240, %v2218, 0.0
        %2225 = vadd.xlane.f32.xlu0 %v2224
        %v2226 = vpop.xlane.xlu0 %2225
        %v2227 = vsel %vm240, %v2219, 0.0
        %2228 = vadd.xlane.f32.xlu0 %v2227
        %v2229 = vpop.xlane.xlu0 %2228
        %v2230 = vsel %vm240, %v2220, 0.0
        %2231 = vadd.xlane.f32.xlu0 %v2230
        %v2232 = vpop.xlane.xlu0 %2231
        %vm2233 = vcmp.eq.s32.totalorder %v2007, 3
        %v2234 = vsel %vm2233, 1, 0
        %vm2235 = vcmp.eq.s32.totalorder %v2234, 1
        %v2236 = vsel %vm2235, %v2223, %v2179
        %v2237 = vsel %vm2235, %v2226, %v2180
        %v2238 = vsel %vm2235, %v2229, %v2181
        %v2239 = vsel %vm2235, %v2232, %v2182
        %2240 = vset.pattern.permute.xlu0 4
        %2241 = vperm.xlu0 %2240, %v1151
        %v2242 = vpop.permute.xlu0 %2241
        %2244 = vset.pattern.permute.xlu0 4
        %2245 = vperm.xlu0 %2244, %v1152
        %v2246 = vpop.permute.xlu0 %2245
        %2248 = vset.pattern.permute.xlu0 4
        %2249 = vperm.xlu0 %2248, %v1153
        %v2250 = vpop.permute.xlu0 %2249
        %2252 = vset.pattern.permute.xlu0 4
        %2253 = vperm.xlu0 %2252, %v1154
        %v2254 = vpop.permute.xlu0 %2253
        %v2256 = vperm.slane %v1171, 4
        %v2257 = vmul.f32 %v2242, %v2256
        %v2258 = vmul.f32 %v2246, %v2256
        %v2259 = vmul.f32 %v2250, %v2256
        %v2260 = vmul.f32 %v2254, %v2256
        %v2261 = vld [vmem:[%s1462] sm:$0xff]
        %v2262 = vld [vmem:[%s1462 + $0x8] sm:$0xff]
        %v2263 = vld [vmem:[%s1462 + $0x10] sm:$0xff]
        %v2264 = vld [vmem:[%s1462 + $0x18] sm:$0xff]
        %v2265 = vmul.f32 %v2261, %v2212
        %v2266 = vmul.f32 %v2262, %v2213
        %v2267 = vmul.f32 %v2263, %v2214
        %v2268 = vmul.f32 %v2264, %v2215
        %v2269 = vadd.f32 %v2265, %v2257
        %v2270 = vadd.f32 %v2266, %v2258
        %v2271 = vadd.f32 %v2267, %v2259
        %v2272 = vadd.f32 %v2268, %v2260
        %v2273 = vperm.slane %v1203, 4
        %v2274 = vmul.f32 %v2269, %v2273
        %v2275 = vmul.f32 %v2270, %v2273
        %v2276 = vmul.f32 %v2271, %v2273
        %v2277 = vmul.f32 %v2272, %v2273
        %v2278 = vsel %vm240, %v2274, 0.0
        %2279 = vadd.xlane.f32.xlu0 %v2278
        %v2280 = vpop.xlane.xlu0 %2279
        %v2281 = vsel %vm240, %v2275, 0.0
        %2282 = vadd.xlane.f32.xlu0 %v2281
        %v2283 = vpop.xlane.xlu0 %2282
        %v2284 = vsel %vm240, %v2276, 0.0
        %2285 = vadd.xlane.f32.xlu0 %v2284
        %v2286 = vpop.xlane.xlu0 %2285
        %v2287 = vsel %vm240, %v2277, 0.0
        %2288 = vadd.xlane.f32.xlu0 %v2287
        %v2289 = vpop.xlane.xlu0 %2288
        %vm2290 = vcmp.eq.s32.totalorder %v2007, 4
        %v2291 = vsel %vm2290, 1, 0
        %vm2292 = vcmp.eq.s32.totalorder %v2291, 1
        %v2293 = vsel %vm2292, %v2280, %v2236
        %v2294 = vsel %vm2292, %v2283, %v2237
        %v2295 = vsel %vm2292, %v2286, %v2238
        %v2296 = vsel %vm2292, %v2289, %v2239
        %2297 = vset.pattern.permute.xlu0 5
        %2298 = vperm.xlu0 %2297, %v1151
        %v2299 = vpop.permute.xlu0 %2298
        %2301 = vset.pattern.permute.xlu0 5
        %2302 = vperm.xlu0 %2301, %v1152
        %v2303 = vpop.permute.xlu0 %2302
        %2305 = vset.pattern.permute.xlu0 5
        %2306 = vperm.xlu0 %2305, %v1153
        %v2307 = vpop.permute.xlu0 %2306
        %2309 = vset.pattern.permute.xlu0 5
        %2310 = vperm.xlu0 %2309, %v1154
        %v2311 = vpop.permute.xlu0 %2310
        %v2313 = vperm.slane %v1171, 5
        %v2314 = vmul.f32 %v2299, %v2313
        %v2315 = vmul.f32 %v2303, %v2313
        %v2316 = vmul.f32 %v2307, %v2313
        %v2317 = vmul.f32 %v2311, %v2313
        %v2318 = vld [vmem:[%s1511] sm:$0xff]
        %v2319 = vld [vmem:[%s1511 + $0x8] sm:$0xff]
        %v2320 = vld [vmem:[%s1511 + $0x10] sm:$0xff]
        %v2321 = vld [vmem:[%s1511 + $0x18] sm:$0xff]
        %v2322 = vmul.f32 %v2318, %v2269
        %v2323 = vmul.f32 %v2319, %v2270
        %v2324 = vmul.f32 %v2320, %v2271
        %v2325 = vmul.f32 %v2321, %v2272
        %v2326 = vadd.f32 %v2322, %v2314
        %v2327 = vadd.f32 %v2323, %v2315
        %v2328 = vadd.f32 %v2324, %v2316
        %v2329 = vadd.f32 %v2325, %v2317
        %v2330 = vperm.slane %v1203, 5
        %v2331 = vmul.f32 %v2326, %v2330
        %v2332 = vmul.f32 %v2327, %v2330
        %v2333 = vmul.f32 %v2328, %v2330
        %v2334 = vmul.f32 %v2329, %v2330
        %v2335 = vsel %vm240, %v2331, 0.0
        %2336 = vadd.xlane.f32.xlu0 %v2335
        %v2337 = vpop.xlane.xlu0 %2336
        %v2338 = vsel %vm240, %v2332, 0.0
        %2339 = vadd.xlane.f32.xlu0 %v2338
        %v2340 = vpop.xlane.xlu0 %2339
        %v2341 = vsel %vm240, %v2333, 0.0
        %2342 = vadd.xlane.f32.xlu0 %v2341
        %v2343 = vpop.xlane.xlu0 %2342
        %v2344 = vsel %vm240, %v2334, 0.0
        %2345 = vadd.xlane.f32.xlu0 %v2344
        %v2346 = vpop.xlane.xlu0 %2345
        %vm2347 = vcmp.eq.s32.totalorder %v2007, 5
        %v2348 = vsel %vm2347, 1, 0
        %vm2349 = vcmp.eq.s32.totalorder %v2348, 1
        %v2350 = vsel %vm2349, %v2337, %v2293
        %v2351 = vsel %vm2349, %v2340, %v2294
        %v2352 = vsel %vm2349, %v2343, %v2295
        %v2353 = vsel %vm2349, %v2346, %v2296
        %2354 = vset.pattern.permute.xlu0 6
        %2355 = vperm.xlu0 %2354, %v1151
        %v2356 = vpop.permute.xlu0 %2355
        %2358 = vset.pattern.permute.xlu0 6
        %2359 = vperm.xlu0 %2358, %v1152
        %v2360 = vpop.permute.xlu0 %2359
        %2362 = vset.pattern.permute.xlu0 6
        %2363 = vperm.xlu0 %2362, %v1153
        %v2364 = vpop.permute.xlu0 %2363
        %2366 = vset.pattern.permute.xlu0 6
        %2367 = vperm.xlu0 %2366, %v1154
        %v2368 = vpop.permute.xlu0 %2367
        %v2370 = vperm.slane %v1171, 6
        %v2371 = vmul.f32 %v2356, %v2370
        %v2372 = vmul.f32 %v2360, %v2370
        %v2373 = vmul.f32 %v2364, %v2370
        %v2374 = vmul.f32 %v2368, %v2370
        %v2375 = vld [vmem:[%s1560] sm:$0xff]
        %v2376 = vld [vmem:[%s1560 + $0x8] sm:$0xff]
        %v2377 = vld [vmem:[%s1560 + $0x10] sm:$0xff]
        %v2378 = vld [vmem:[%s1560 + $0x18] sm:$0xff]
        %v2379 = vmul.f32 %v2375, %v2326
        %v2380 = vmul.f32 %v2376, %v2327
        %v2381 = vmul.f32 %v2377, %v2328
        %v2382 = vmul.f32 %v2378, %v2329
        %v2383 = vadd.f32 %v2379, %v2371
        %v2384 = vadd.f32 %v2380, %v2372
        %v2385 = vadd.f32 %v2381, %v2373
        %v2386 = vadd.f32 %v2382, %v2374
        %v2387 = vperm.slane %v1203, 6
        %v2388 = vmul.f32 %v2383, %v2387
        %v2389 = vmul.f32 %v2384, %v2387
        %v2390 = vmul.f32 %v2385, %v2387
        %v2391 = vmul.f32 %v2386, %v2387
        %v2392 = vsel %vm240, %v2388, 0.0
        %2393 = vadd.xlane.f32.xlu0 %v2392
        %v2394 = vpop.xlane.xlu0 %2393
        %v2395 = vsel %vm240, %v2389, 0.0
        %2396 = vadd.xlane.f32.xlu0 %v2395
        %v2397 = vpop.xlane.xlu0 %2396
        %v2398 = vsel %vm240, %v2390, 0.0
        %2399 = vadd.xlane.f32.xlu0 %v2398
        %v2400 = vpop.xlane.xlu0 %2399
        %v2401 = vsel %vm240, %v2391, 0.0
        %2402 = vadd.xlane.f32.xlu0 %v2401
        %v2403 = vpop.xlane.xlu0 %2402
        %vm2404 = vcmp.eq.s32.totalorder %v2007, 6
        %v2405 = vsel %vm2404, 1, 0
        %vm2406 = vcmp.eq.s32.totalorder %v2405, 1
        %v2407 = vsel %vm2406, %v2394, %v2350
        %v2408 = vsel %vm2406, %v2397, %v2351
        %v2409 = vsel %vm2406, %v2400, %v2352
        %v2410 = vsel %vm2406, %v2403, %v2353
        %2411 = vset.pattern.permute.xlu0 7
        %2412 = vperm.xlu0 %2411, %v1151
        %v2413 = vpop.permute.xlu0 %2412
        %2415 = vset.pattern.permute.xlu0 7
        %2416 = vperm.xlu0 %2415, %v1152
        %v2417 = vpop.permute.xlu0 %2416
        %2419 = vset.pattern.permute.xlu0 7
        %2420 = vperm.xlu0 %2419, %v1153
        %v2421 = vpop.permute.xlu0 %2420
        %2423 = vset.pattern.permute.xlu0 7
        %2424 = vperm.xlu0 %2423, %v1154
        %v2425 = vpop.permute.xlu0 %2424
        %v2427 = vperm.slane %v1171, 7
        %v2428 = vmul.f32 %v2413, %v2427
        %v2429 = vmul.f32 %v2417, %v2427
        %v2430 = vmul.f32 %v2421, %v2427
        %v2431 = vmul.f32 %v2425, %v2427
        %v2432 = vld [vmem:[%s1609] sm:$0xff]
        %v2433 = vld [vmem:[%s1609 + $0x8] sm:$0xff]
        %v2434 = vld [vmem:[%s1609 + $0x10] sm:$0xff]
        %v2435 = vld [vmem:[%s1609 + $0x18] sm:$0xff]
        %v2436 = vmul.f32 %v2432, %v2383
        %v2437 = vmul.f32 %v2433, %v2384
        %v2438 = vmul.f32 %v2434, %v2385
        %v2439 = vmul.f32 %v2435, %v2386
        %v2440 = vadd.f32 %v2436, %v2428
        %v2441 = vadd.f32 %v2437, %v2429
        %v2442 = vadd.f32 %v2438, %v2430
        %v2443 = vadd.f32 %v2439, %v2431
        %v2444 = vperm.slane %v1203, 7
        %v2445 = vmul.f32 %v2440, %v2444
        %v2446 = vmul.f32 %v2441, %v2444
        %v2447 = vmul.f32 %v2442, %v2444
        %v2448 = vmul.f32 %v2443, %v2444
        %v2449 = vsel %vm240, %v2445, 0.0
        %2450 = vadd.xlane.f32.xlu0 %v2449
        %v2451 = vpop.xlane.xlu0 %2450
        %v2452 = vsel %vm240, %v2446, 0.0
        %2453 = vadd.xlane.f32.xlu0 %v2452
        %v2454 = vpop.xlane.xlu0 %2453
        %v2455 = vsel %vm240, %v2447, 0.0
        %2456 = vadd.xlane.f32.xlu0 %v2455
        %v2457 = vpop.xlane.xlu0 %2456
        %v2458 = vsel %vm240, %v2448, 0.0
        %2459 = vadd.xlane.f32.xlu0 %v2458
        %v2460 = vpop.xlane.xlu0 %2459
        %vm2461 = vcmp.eq.s32.totalorder %v2007, 7
        %v2462 = vsel %vm2461, 1, 0
        %vm2463 = vcmp.eq.s32.totalorder %v2462, 1
        %v2464 = vsel %vm2463, %v2451, %v2407
        %v2465 = vsel %vm2463, %v2454, %v2408
        %v2466 = vsel %vm2463, %v2457, %v2409
        %v2467 = vsel %vm2463, %v2460, %v2410
        %2468 = vset.pattern.permute.xlu0 8
        %2469 = vperm.xlu0 %2468, %v1151
        %v2470 = vpop.permute.xlu0 %2469
        %2472 = vset.pattern.permute.xlu0 8
        %2473 = vperm.xlu0 %2472, %v1152
        %v2474 = vpop.permute.xlu0 %2473
        %2476 = vset.pattern.permute.xlu0 8
        %2477 = vperm.xlu0 %2476, %v1153
        %v2478 = vpop.permute.xlu0 %2477
        %2480 = vset.pattern.permute.xlu0 8
        %2481 = vperm.xlu0 %2480, %v1154
        %v2482 = vpop.permute.xlu0 %2481
        %v2484 = vperm.slane %v1172, 0
        %v2485 = vmul.f32 %v2470, %v2484
        %v2486 = vmul.f32 %v2474, %v2484
        %v2487 = vmul.f32 %v2478, %v2484
        %v2488 = vmul.f32 %v2482, %v2484
        %v2489 = vld [vmem:[%s1658] sm:$0xff]
        %v2490 = vld [vmem:[%s1658 + $0x8] sm:$0xff]
        %v2491 = vld [vmem:[%s1658 + $0x10] sm:$0xff]
        %v2492 = vld [vmem:[%s1658 + $0x18] sm:$0xff]
        %v2493 = vmul.f32 %v2489, %v2440
        %v2494 = vmul.f32 %v2490, %v2441
        %v2495 = vmul.f32 %v2491, %v2442
        %v2496 = vmul.f32 %v2492, %v2443
        %v2497 = vadd.f32 %v2493, %v2485
        %v2498 = vadd.f32 %v2494, %v2486
        %v2499 = vadd.f32 %v2495, %v2487
        %v2500 = vadd.f32 %v2496, %v2488
        %v2501 = vperm.slane %v1204, 0
        %v2502 = vmul.f32 %v2497, %v2501
        %v2503 = vmul.f32 %v2498, %v2501
        %v2504 = vmul.f32 %v2499, %v2501
        %v2505 = vmul.f32 %v2500, %v2501
        %v2506 = vsel %vm240, %v2502, 0.0
        %2507 = vadd.xlane.f32.xlu0 %v2506
        %v2508 = vpop.xlane.xlu0 %2507
        %v2509 = vsel %vm240, %v2503, 0.0
        %2510 = vadd.xlane.f32.xlu0 %v2509
        %v2511 = vpop.xlane.xlu0 %2510
        %v2512 = vsel %vm240, %v2504, 0.0
        %2513 = vadd.xlane.f32.xlu0 %v2512
        %v2514 = vpop.xlane.xlu0 %2513
        %v2515 = vsel %vm240, %v2505, 0.0
        %2516 = vadd.xlane.f32.xlu0 %v2515
        %v2517 = vpop.xlane.xlu0 %2516
        %vm2518 = vcmp.eq.s32.totalorder %v2007, 8
        %v2519 = vsel %vm2518, 1, 0
        %vm2520 = vcmp.eq.s32.totalorder %v2519, 1
        %v2521 = vsel %vm2520, %v2508, %v2464
        %v2522 = vsel %vm2520, %v2511, %v2465
        %v2523 = vsel %vm2520, %v2514, %v2466
        %v2524 = vsel %vm2520, %v2517, %v2467
        %2525 = vset.pattern.permute.xlu0 9
        %2526 = vperm.xlu0 %2525, %v1151
        %v2527 = vpop.permute.xlu0 %2526
        %2529 = vset.pattern.permute.xlu0 9
        %2530 = vperm.xlu0 %2529, %v1152
        %v2531 = vpop.permute.xlu0 %2530
        %2533 = vset.pattern.permute.xlu0 9
        %2534 = vperm.xlu0 %2533, %v1153
        %v2535 = vpop.permute.xlu0 %2534
        %2537 = vset.pattern.permute.xlu0 9
        %2538 = vperm.xlu0 %2537, %v1154
        %v2539 = vpop.permute.xlu0 %2538
        %v2541 = vperm.slane %v1172, 1
        %v2542 = vmul.f32 %v2527, %v2541
        %v2543 = vmul.f32 %v2531, %v2541
        %v2544 = vmul.f32 %v2535, %v2541
        %v2545 = vmul.f32 %v2539, %v2541
        %v2546 = vld [vmem:[%s1707] sm:$0xff]
        %v2547 = vld [vmem:[%s1707 + $0x8] sm:$0xff]
        %v2548 = vld [vmem:[%s1707 + $0x10] sm:$0xff]
        %v2549 = vld [vmem:[%s1707 + $0x18] sm:$0xff]
        %v2550 = vmul.f32 %v2546, %v2497
        %v2551 = vmul.f32 %v2547, %v2498
        %v2552 = vmul.f32 %v2548, %v2499
        %v2553 = vmul.f32 %v2549, %v2500
        %v2554 = vadd.f32 %v2550, %v2542
        %v2555 = vadd.f32 %v2551, %v2543
        %v2556 = vadd.f32 %v2552, %v2544
        %v2557 = vadd.f32 %v2553, %v2545
        %v2558 = vperm.slane %v1204, 1
        %v2559 = vmul.f32 %v2554, %v2558
        %v2560 = vmul.f32 %v2555, %v2558
        %v2561 = vmul.f32 %v2556, %v2558
        %v2562 = vmul.f32 %v2557, %v2558
        %v2563 = vsel %vm240, %v2559, 0.0
        %2564 = vadd.xlane.f32.xlu0 %v2563
        %v2565 = vpop.xlane.xlu0 %2564
        %v2566 = vsel %vm240, %v2560, 0.0
        %2567 = vadd.xlane.f32.xlu0 %v2566
        %v2568 = vpop.xlane.xlu0 %2567
        %v2569 = vsel %vm240, %v2561, 0.0
        %2570 = vadd.xlane.f32.xlu0 %v2569
        %v2571 = vpop.xlane.xlu0 %2570
        %v2572 = vsel %vm240, %v2562, 0.0
        %2573 = vadd.xlane.f32.xlu0 %v2572
        %v2574 = vpop.xlane.xlu0 %2573
        %vm2575 = vcmp.eq.s32.totalorder %v2007, 9
        %v2576 = vsel %vm2575, 1, 0
        %vm2577 = vcmp.eq.s32.totalorder %v2576, 1
        %v2578 = vsel %vm2577, %v2565, %v2521
        %v2579 = vsel %vm2577, %v2568, %v2522
        %v2580 = vsel %vm2577, %v2571, %v2523
        %v2581 = vsel %vm2577, %v2574, %v2524
        %2582 = vset.pattern.permute.xlu0 10
        %2583 = vperm.xlu0 %2582, %v1151
        %v2584 = vpop.permute.xlu0 %2583
        %2586 = vset.pattern.permute.xlu0 10
        %2587 = vperm.xlu0 %2586, %v1152
        %v2588 = vpop.permute.xlu0 %2587
        %2590 = vset.pattern.permute.xlu0 10
        %2591 = vperm.xlu0 %2590, %v1153
        %v2592 = vpop.permute.xlu0 %2591
        %2594 = vset.pattern.permute.xlu0 10
        %2595 = vperm.xlu0 %2594, %v1154
        %v2596 = vpop.permute.xlu0 %2595
        %v2598 = vperm.slane %v1172, 2
        %v2599 = vmul.f32 %v2584, %v2598
        %v2600 = vmul.f32 %v2588, %v2598
        %v2601 = vmul.f32 %v2592, %v2598
        %v2602 = vmul.f32 %v2596, %v2598
        %v2603 = vld [vmem:[%s1756] sm:$0xff]
        %v2604 = vld [vmem:[%s1756 + $0x8] sm:$0xff]
        %v2605 = vld [vmem:[%s1756 + $0x10] sm:$0xff]
        %v2606 = vld [vmem:[%s1756 + $0x18] sm:$0xff]
        %v2607 = vmul.f32 %v2603, %v2554
        %v2608 = vmul.f32 %v2604, %v2555
        %v2609 = vmul.f32 %v2605, %v2556
        %v2610 = vmul.f32 %v2606, %v2557
        %v2611 = vadd.f32 %v2607, %v2599
        %v2612 = vadd.f32 %v2608, %v2600
        %v2613 = vadd.f32 %v2609, %v2601
        %v2614 = vadd.f32 %v2610, %v2602
        %v2615 = vperm.slane %v1204, 2
        %v2616 = vmul.f32 %v2611, %v2615
        %v2617 = vmul.f32 %v2612, %v2615
        %v2618 = vmul.f32 %v2613, %v2615
        %v2619 = vmul.f32 %v2614, %v2615
        %v2620 = vsel %vm240, %v2616, 0.0
        %2621 = vadd.xlane.f32.xlu0 %v2620
        %v2622 = vpop.xlane.xlu0 %2621
        %v2623 = vsel %vm240, %v2617, 0.0
        %2624 = vadd.xlane.f32.xlu0 %v2623
        %v2625 = vpop.xlane.xlu0 %2624
        %v2626 = vsel %vm240, %v2618, 0.0
        %2627 = vadd.xlane.f32.xlu0 %v2626
        %v2628 = vpop.xlane.xlu0 %2627
        %v2629 = vsel %vm240, %v2619, 0.0
        %2630 = vadd.xlane.f32.xlu0 %v2629
        %v2631 = vpop.xlane.xlu0 %2630
        %vm2632 = vcmp.eq.s32.totalorder %v2007, 10
        %v2633 = vsel %vm2632, 1, 0
        %vm2634 = vcmp.eq.s32.totalorder %v2633, 1
        %v2635 = vsel %vm2634, %v2622, %v2578
        %v2636 = vsel %vm2634, %v2625, %v2579
        %v2637 = vsel %vm2634, %v2628, %v2580
        %v2638 = vsel %vm2634, %v2631, %v2581
        %2639 = vset.pattern.permute.xlu0 11
        %2640 = vperm.xlu0 %2639, %v1151
        %v2641 = vpop.permute.xlu0 %2640
        %2643 = vset.pattern.permute.xlu0 11
        %2644 = vperm.xlu0 %2643, %v1152
        %v2645 = vpop.permute.xlu0 %2644
        %2647 = vset.pattern.permute.xlu0 11
        %2648 = vperm.xlu0 %2647, %v1153
        %v2649 = vpop.permute.xlu0 %2648
        %2651 = vset.pattern.permute.xlu0 11
        %2652 = vperm.xlu0 %2651, %v1154
        %v2653 = vpop.permute.xlu0 %2652
        %v2655 = vperm.slane %v1172, 3
        %v2656 = vmul.f32 %v2641, %v2655
        %v2657 = vmul.f32 %v2645, %v2655
        %v2658 = vmul.f32 %v2649, %v2655
        %v2659 = vmul.f32 %v2653, %v2655
        %v2660 = vld [vmem:[%s1805] sm:$0xff]
        %v2661 = vld [vmem:[%s1805 + $0x8] sm:$0xff]
        %v2662 = vld [vmem:[%s1805 + $0x10] sm:$0xff]
        %v2663 = vld [vmem:[%s1805 + $0x18] sm:$0xff]
        %v2664 = vmul.f32 %v2660, %v2611
        %v2665 = vmul.f32 %v2661, %v2612
        %v2666 = vmul.f32 %v2662, %v2613
        %v2667 = vmul.f32 %v2663, %v2614
        %v2668 = vadd.f32 %v2664, %v2656
        %v2669 = vadd.f32 %v2665, %v2657
        %v2670 = vadd.f32 %v2666, %v2658
        %v2671 = vadd.f32 %v2667, %v2659
        %v2672 = vperm.slane %v1204, 3
        %v2673 = vmul.f32 %v2668, %v2672
        %v2674 = vmul.f32 %v2669, %v2672
        %v2675 = vmul.f32 %v2670, %v2672
        %v2676 = vmul.f32 %v2671, %v2672
        %v2677 = vsel %vm240, %v2673, 0.0
        %2678 = vadd.xlane.f32.xlu0 %v2677
        %v2679 = vpop.xlane.xlu0 %2678
        %v2680 = vsel %vm240, %v2674, 0.0
        %2681 = vadd.xlane.f32.xlu0 %v2680
        %v2682 = vpop.xlane.xlu0 %2681
        %v2683 = vsel %vm240, %v2675, 0.0
        %2684 = vadd.xlane.f32.xlu0 %v2683
        %v2685 = vpop.xlane.xlu0 %2684
        %v2686 = vsel %vm240, %v2676, 0.0
        %2687 = vadd.xlane.f32.xlu0 %v2686
        %v2688 = vpop.xlane.xlu0 %2687
        %vm2689 = vcmp.eq.s32.totalorder %v2007, 11
        %v2690 = vsel %vm2689, 1, 0
        %vm2691 = vcmp.eq.s32.totalorder %v2690, 1
        %v2692 = vsel %vm2691, %v2679, %v2635
        %v2693 = vsel %vm2691, %v2682, %v2636
        %v2694 = vsel %vm2691, %v2685, %v2637
        %v2695 = vsel %vm2691, %v2688, %v2638
        %2696 = vset.pattern.permute.xlu0 12
        %2697 = vperm.xlu0 %2696, %v1151
        %v2698 = vpop.permute.xlu0 %2697
        %2700 = vset.pattern.permute.xlu0 12
        %2701 = vperm.xlu0 %2700, %v1152
        %v2702 = vpop.permute.xlu0 %2701
        %2704 = vset.pattern.permute.xlu0 12
        %2705 = vperm.xlu0 %2704, %v1153
        %v2706 = vpop.permute.xlu0 %2705
        %2708 = vset.pattern.permute.xlu0 12
        %2709 = vperm.xlu0 %2708, %v1154
        %v2710 = vpop.permute.xlu0 %2709
        %v2712 = vperm.slane %v1172, 4
        %v2713 = vmul.f32 %v2698, %v2712
        %v2714 = vmul.f32 %v2702, %v2712
        %v2715 = vmul.f32 %v2706, %v2712
        %v2716 = vmul.f32 %v2710, %v2712
        %v2717 = vld [vmem:[%s1854] sm:$0xff]
        %v2718 = vld [vmem:[%s1854 + $0x8] sm:$0xff]
        %v2719 = vld [vmem:[%s1854 + $0x10] sm:$0xff]
        %v2720 = vld [vmem:[%s1854 + $0x18] sm:$0xff]
        %v2721 = vmul.f32 %v2717, %v2668
        %v2722 = vmul.f32 %v2718, %v2669
        %v2723 = vmul.f32 %v2719, %v2670
        %v2724 = vmul.f32 %v2720, %v2671
        %v2725 = vadd.f32 %v2721, %v2713
        %v2726 = vadd.f32 %v2722, %v2714
        %v2727 = vadd.f32 %v2723, %v2715
        %v2728 = vadd.f32 %v2724, %v2716
        %v2729 = vperm.slane %v1204, 4
        %v2730 = vmul.f32 %v2725, %v2729
        %v2731 = vmul.f32 %v2726, %v2729
        %v2732 = vmul.f32 %v2727, %v2729
        %v2733 = vmul.f32 %v2728, %v2729
        %v2734 = vsel %vm240, %v2730, 0.0
        %2735 = vadd.xlane.f32.xlu0 %v2734
        %v2736 = vpop.xlane.xlu0 %2735
        %v2737 = vsel %vm240, %v2731, 0.0
        %2738 = vadd.xlane.f32.xlu0 %v2737
        %v2739 = vpop.xlane.xlu0 %2738
        %v2740 = vsel %vm240, %v2732, 0.0
        %2741 = vadd.xlane.f32.xlu0 %v2740
        %v2742 = vpop.xlane.xlu0 %2741
        %v2743 = vsel %vm240, %v2733, 0.0
        %2744 = vadd.xlane.f32.xlu0 %v2743
        %v2745 = vpop.xlane.xlu0 %2744
        %vm2746 = vcmp.eq.s32.totalorder %v2007, 12
        %v2747 = vsel %vm2746, 1, 0
        %vm2748 = vcmp.eq.s32.totalorder %v2747, 1
        %v2749 = vsel %vm2748, %v2736, %v2692
        %v2750 = vsel %vm2748, %v2739, %v2693
        %v2751 = vsel %vm2748, %v2742, %v2694
        %v2752 = vsel %vm2748, %v2745, %v2695
        %2753 = vset.pattern.permute.xlu0 13
        %2754 = vperm.xlu0 %2753, %v1151
        %v2755 = vpop.permute.xlu0 %2754
        %2757 = vset.pattern.permute.xlu0 13
        %2758 = vperm.xlu0 %2757, %v1152
        %v2759 = vpop.permute.xlu0 %2758
        %2761 = vset.pattern.permute.xlu0 13
        %2762 = vperm.xlu0 %2761, %v1153
        %v2763 = vpop.permute.xlu0 %2762
        %2765 = vset.pattern.permute.xlu0 13
        %2766 = vperm.xlu0 %2765, %v1154
        %v2767 = vpop.permute.xlu0 %2766
        %v2769 = vperm.slane %v1172, 5
        %v2770 = vmul.f32 %v2755, %v2769
        %v2771 = vmul.f32 %v2759, %v2769
        %v2772 = vmul.f32 %v2763, %v2769
        %v2773 = vmul.f32 %v2767, %v2769
        %v2774 = vld [vmem:[%s1903] sm:$0xff]
        %v2775 = vld [vmem:[%s1903 + $0x8] sm:$0xff]
        %v2776 = vld [vmem:[%s1903 + $0x10] sm:$0xff]
        %v2777 = vld [vmem:[%s1903 + $0x18] sm:$0xff]
        %v2778 = vmul.f32 %v2774, %v2725
        %v2779 = vmul.f32 %v2775, %v2726
        %v2780 = vmul.f32 %v2776, %v2727
        %v2781 = vmul.f32 %v2777, %v2728
        %v2782 = vadd.f32 %v2778, %v2770
        %v2783 = vadd.f32 %v2779, %v2771
        %v2784 = vadd.f32 %v2780, %v2772
        %v2785 = vadd.f32 %v2781, %v2773
        %v2786 = vperm.slane %v1204, 5
        %v2787 = vmul.f32 %v2782, %v2786
        %v2788 = vmul.f32 %v2783, %v2786
        %v2789 = vmul.f32 %v2784, %v2786
        %v2790 = vmul.f32 %v2785, %v2786
        %v2791 = vsel %vm240, %v2787, 0.0
        %2792 = vadd.xlane.f32.xlu0 %v2791
        %v2793 = vpop.xlane.xlu0 %2792
        %v2794 = vsel %vm240, %v2788, 0.0
        %2795 = vadd.xlane.f32.xlu0 %v2794
        %v2796 = vpop.xlane.xlu0 %2795
        %v2797 = vsel %vm240, %v2789, 0.0
        %2798 = vadd.xlane.f32.xlu0 %v2797
        %v2799 = vpop.xlane.xlu0 %2798
        %v2800 = vsel %vm240, %v2790, 0.0
        %2801 = vadd.xlane.f32.xlu0 %v2800
        %v2802 = vpop.xlane.xlu0 %2801
        %vm2803 = vcmp.eq.s32.totalorder %v2007, 13
        %v2804 = vsel %vm2803, 1, 0
        %vm2805 = vcmp.eq.s32.totalorder %v2804, 1
        %v2806 = vsel %vm2805, %v2793, %v2749
        %v2807 = vsel %vm2805, %v2796, %v2750
        %v2808 = vsel %vm2805, %v2799, %v2751
        %v2809 = vsel %vm2805, %v2802, %v2752
        %2810 = vset.pattern.permute.xlu0 14
        %2811 = vperm.xlu0 %2810, %v1151
        %v2812 = vpop.permute.xlu0 %2811
        %2814 = vset.pattern.permute.xlu0 14
        %2815 = vperm.xlu0 %2814, %v1152
        %v2816 = vpop.permute.xlu0 %2815
        %2818 = vset.pattern.permute.xlu0 14
        %2819 = vperm.xlu0 %2818, %v1153
        %v2820 = vpop.permute.xlu0 %2819
        %2822 = vset.pattern.permute.xlu0 14
        %2823 = vperm.xlu0 %2822, %v1154
        %v2824 = vpop.permute.xlu0 %2823
        %v2826 = vperm.slane %v1172, 6
        %v2827 = vmul.f32 %v2812, %v2826
        %v2828 = vmul.f32 %v2816, %v2826
        %v2829 = vmul.f32 %v2820, %v2826
        %v2830 = vmul.f32 %v2824, %v2826
        %v2831 = vld [vmem:[%s1952] sm:$0xff]
        %v2832 = vld [vmem:[%s1952 + $0x8] sm:$0xff]
        %v2833 = vld [vmem:[%s1952 + $0x10] sm:$0xff]
        %v2834 = vld [vmem:[%s1952 + $0x18] sm:$0xff]
        %v2835 = vmul.f32 %v2831, %v2782
        %v2836 = vmul.f32 %v2832, %v2783
        %v2837 = vmul.f32 %v2833, %v2784
        %v2838 = vmul.f32 %v2834, %v2785
        %v2839 = vadd.f32 %v2835, %v2827
        %v2840 = vadd.f32 %v2836, %v2828
        %v2841 = vadd.f32 %v2837, %v2829
        %v2842 = vadd.f32 %v2838, %v2830
        %v2843 = vperm.slane %v1204, 6
        %v2844 = vmul.f32 %v2839, %v2843
        %v2845 = vmul.f32 %v2840, %v2843
        %v2846 = vmul.f32 %v2841, %v2843
        %v2847 = vmul.f32 %v2842, %v2843
        %v2848 = vsel %vm240, %v2844, 0.0
        %2849 = vadd.xlane.f32.xlu0 %v2848
        %v2850 = vpop.xlane.xlu0 %2849
        %v2851 = vsel %vm240, %v2845, 0.0
        %2852 = vadd.xlane.f32.xlu0 %v2851
        %v2853 = vpop.xlane.xlu0 %2852
        %v2854 = vsel %vm240, %v2846, 0.0
        %2855 = vadd.xlane.f32.xlu0 %v2854
        %v2856 = vpop.xlane.xlu0 %2855
        %v2857 = vsel %vm240, %v2847, 0.0
        %2858 = vadd.xlane.f32.xlu0 %v2857
        %v2859 = vpop.xlane.xlu0 %2858
        %vm2860 = vcmp.eq.s32.totalorder %v2007, 14
        %v2861 = vsel %vm2860, 1, 0
        %vm2862 = vcmp.eq.s32.totalorder %v2861, 1
        %v2863 = vsel %vm2862, %v2850, %v2806
        %v2864 = vsel %vm2862, %v2853, %v2807
        %v2865 = vsel %vm2862, %v2856, %v2808
        %v2866 = vsel %vm2862, %v2859, %v2809
        %2867 = vset.pattern.permute.xlu0 15
        %2868 = vperm.xlu0 %2867, %v1151
        %v2869 = vpop.permute.xlu0 %2868
        %2871 = vset.pattern.permute.xlu0 15
        %2872 = vperm.xlu0 %2871, %v1152
        %v2873 = vpop.permute.xlu0 %2872
        %2875 = vset.pattern.permute.xlu0 15
        %2876 = vperm.xlu0 %2875, %v1153
        %v2877 = vpop.permute.xlu0 %2876
        %2879 = vset.pattern.permute.xlu0 15
        %2880 = vperm.xlu0 %2879, %v1154
        %v2881 = vpop.permute.xlu0 %2880
        %v2883 = vperm.slane %v1172, 7
        %v2884 = vmul.f32 %v2869, %v2883
        %v2885 = vmul.f32 %v2873, %v2883
        %v2886 = vmul.f32 %v2877, %v2883
        %v2887 = vmul.f32 %v2881, %v2883
        %v2888 = vld [vmem:[%s2001] sm:$0xff]
        %v2889 = vld [vmem:[%s2001 + $0x8] sm:$0xff]
        %v2890 = vld [vmem:[%s2001 + $0x10] sm:$0xff]
        %v2891 = vld [vmem:[%s2001 + $0x18] sm:$0xff]
        %v2892 = vmul.f32 %v2888, %v2839
        %v2893 = vmul.f32 %v2889, %v2840
        %v2894 = vmul.f32 %v2890, %v2841
        %v2895 = vmul.f32 %v2891, %v2842
        %v2896 = vadd.f32 %v2892, %v2884
        %v2897 = vadd.f32 %v2893, %v2885
        %v2898 = vadd.f32 %v2894, %v2886
        %v2899 = vadd.f32 %v2895, %v2887
        %v2900 = vperm.slane %v1204, 7
        %v2901 = vmul.f32 %v2896, %v2900
        %v2902 = vmul.f32 %v2897, %v2900
        %v2903 = vmul.f32 %v2898, %v2900
        %v2904 = vmul.f32 %v2899, %v2900
        %v2905 = vsel %vm240, %v2901, 0.0
        %2906 = vadd.xlane.f32.xlu0 %v2905
        %v2907 = vpop.xlane.xlu0 %2906
        %v2908 = vsel %vm240, %v2902, 0.0
        %2909 = vadd.xlane.f32.xlu0 %v2908
        %v2910 = vpop.xlane.xlu0 %2909
        %v2911 = vsel %vm240, %v2903, 0.0
        %2912 = vadd.xlane.f32.xlu0 %v2911
        %v2913 = vpop.xlane.xlu0 %2912
        %v2914 = vsel %vm240, %v2904, 0.0
        %2915 = vadd.xlane.f32.xlu0 %v2914
        %v2916 = vpop.xlane.xlu0 %2915
        %vm2917 = vcmp.eq.s32.totalorder %v2007, 15
        %v2918 = vsel %vm2917, 1, 0
        %vm2919 = vcmp.eq.s32.totalorder %v2918, 1
        %v2920 = vsel %vm2919, %v2907, %v2863
        %v2921 = vsel %vm2919, %v2910, %v2864
        %v2922 = vsel %vm2919, %v2913, %v2865
        %v2923 = vsel %vm2919, %v2916, %v2866
        %v2924 = vld [vmem:[#allocation6 + $0x40] sm:$0xff]
        %v2925 = vld [vmem:[#allocation6 + $0x48] sm:$0xff]
        %v2926 = vld [vmem:[#allocation6 + $0x50] sm:$0xff]
        %v2927 = vld [vmem:[#allocation6 + $0x58] sm:$0xff]
        %2929 = vset.pattern.permute.xlu0 0
        %2930 = vperm.xlu0 %2929, %v2924
        %v2931 = vpop.permute.xlu0 %2930
        %2934 = vset.pattern.permute.xlu0 0
        %2935 = vperm.xlu0 %2934, %v2925
        %v2936 = vpop.permute.xlu0 %2935
        %2939 = vset.pattern.permute.xlu0 0
        %2940 = vperm.xlu0 %2939, %v2926
        %v2941 = vpop.permute.xlu0 %2940
        %2944 = vset.pattern.permute.xlu0 0
        %2945 = vperm.xlu0 %2944, %v2927
        %v2946 = vpop.permute.xlu0 %2945
        %v2948 = vmul.f32 %v2931, %v1003
        %v2949 = vmul.f32 %v2936, %v1004
        %v2950 = vmul.f32 %v2941, %v1005
        %v2951 = vmul.f32 %v2946, %v1006
        %v2952 = vadd.f32 %v2920, %v2948
        %v2953 = vadd.f32 %v2921, %v2949
        %v2954 = vadd.f32 %v2922, %v2950
        %v2955 = vadd.f32 %v2923, %v2951
        %v2956 = vsub.f32 0.0, %v742
        %v2957 = vsub.f32 0.0, %v745
        %v2958 = vsub.f32 0.0, %v748
        %v2959 = vsub.f32 0.0, %v751
        %v2960 = vmul.f32 %v2956, 1.442695
        %v2961 = vpow.pop %v2960
        %v2962 = vmul.f32 %v2957, 1.442695
        %v2963 = vpow.pop %v2962
        %v2964 = vmul.f32 %v2958, 1.442695
        %v2965 = vpow.pop %v2964
        %v2966 = vmul.f32 %v2959, 1.442695
        %v2967 = vpow.pop %v2966
        %v2968 = vadd.f32 %v2961, 1.0
        %v2969 = vadd.f32 %v2963, 1.0
        %v2970 = vadd.f32 %v2965, 1.0
        %v2971 = vadd.f32 %v2967, 1.0
        %v2972 = vrcp.pop %v2968
        %v2973 = vmul.f32 %v2968, %v2972
        %v2974 = vsub.f32 1.0, %v2973
        %v2975 = vmul.f32 %v2972, %v2974
        %v2976 = vadd.f32 %v2972, %v2975
        %vm2977 = vweird.f32 %v2968
        %vm2978 = vweird.f32 %v2972
        %vm2979 = vmor %vm2977, %vm2978
        %v2980 = vsel %vm2979, %v2972, %v2976
        %v2981 = vand.u32 2147483647, %v2968
        %vm2982 = vcmp.eq.f32.partialorder %v2981, 8.507059e+37
        %v2983 = vand.u32 %v2968, 2147483648
        %v2984 = vor.u32 1.1754944e-38, %v2983
        %v2985 = vsel %vm2982, %v2984, %v2980
        %v2986 = vmul.f32 1.0, %v2985
        %v2987 = vrcp.pop %v2969
        %v2988 = vmul.f32 %v2969, %v2987
        %v2989 = vsub.f32 1.0, %v2988
        %v2990 = vmul.f32 %v2987, %v2989
        %v2991 = vadd.f32 %v2987, %v2990
        %vm2992 = vweird.f32 %v2969
        %vm2993 = vweird.f32 %v2987
        %vm2994 = vmor %vm2992, %vm2993
        %v2995 = vsel %vm2994, %v2987, %v2991
        %v2996 = vand.u32 2147483647, %v2969
        %vm2997 = vcmp.eq.f32.partialorder %v2996, 8.507059e+37
        %v2998 = vand.u32 %v2969, 2147483648
        %v2999 = vor.u32 1.1754944e-38, %v2998
        %v3000 = vsel %vm2997, %v2999, %v2995
        %v3001 = vmul.f32 1.0, %v3000
        %v3002 = vrcp.pop %v2970
        %v3003 = vmul.f32 %v2970, %v3002
        %v3004 = vsub.f32 1.0, %v3003
        %v3005 = vmul.f32 %v3002, %v3004
        %v3006 = vadd.f32 %v3002, %v3005
        %vm3007 = vweird.f32 %v2970
        %vm3008 = vweird.f32 %v3002
        %vm3009 = vmor %vm3007, %vm3008
        %v3010 = vsel %vm3009, %v3002, %v3006
        %v3011 = vand.u32 2147483647, %v2970
        %vm3012 = vcmp.eq.f32.partialorder %v3011, 8.507059e+37
        %v3013 = vand.u32 %v2970, 2147483648
        %v3014 = vor.u32 1.1754944e-38, %v3013
        %v3015 = vsel %vm3012, %v3014, %v3010
        %v3016 = vmul.f32 1.0, %v3015
        %v3017 = vrcp.pop %v2971
        %v3018 = vmul.f32 %v2971, %v3017
        %v3019 = vsub.f32 1.0, %v3018
        %v3020 = vmul.f32 %v3017, %v3019
        %v3021 = vadd.f32 %v3017, %v3020
        %vm3022 = vweird.f32 %v2971
        %vm3023 = vweird.f32 %v3017
        %vm3024 = vmor %vm3022, %vm3023
        %v3025 = vsel %vm3024, %v3017, %v3021
        %v3026 = vand.u32 2147483647, %v2971
        %vm3027 = vcmp.eq.f32.partialorder %v3026, 8.507059e+37
        %v3028 = vand.u32 %v2971, 2147483648
        %v3029 = vor.u32 1.1754944e-38, %v3028
        %v3030 = vsel %vm3027, %v3029, %v3025
        %v3031 = vmul.f32 1.0, %v3030
        %v3032 = vmul.f32 %v742, %v2986
        %v3033 = vmul.f32 %v745, %v3001
        %v3034 = vmul.f32 %v748, %v3016
        %v3035 = vmul.f32 %v751, %v3031
        %v3036 = vmul.f32 %v2952, %v3032
        %v3037 = vmul.f32 %v2953, %v3033
        %v3038 = vmul.f32 %v2954, %v3034
        %v3039 = vmul.f32 %v2955, %v3035
        %v3040 = vld [vmem:[#allocation6 + $0x60] sm:$0xff]
        %v3041 = vld [vmem:[#allocation6 + $0x68] sm:$0xff]
        %3044 = vrot.lane.b32.xlu0 %v3040, 64
        %v3045 = vpop.permute.xlu0 %3044
        %3046 = vrot.lane.b32.xlu0 %v3041, 64
        %v3047 = vpop.permute.xlu0 %3046
        %v3048 = vsel %vm1027, %v3045, 0
        %v3050 = vsel %vm1027, %v3047, 0
        %3052 = vmatpush.msra.mxu0 0.0
        %3053 = vmatpush.msra.mxu0 0.0
        %3054 = vmatpush.msra.mxu0 0.0
        %3055 = vmatpush.msra.mxu0 0.0
        %3056 = vmatpush.msra.mxu0 0.0
        %3057 = vmatpush.msra.mxu0 0.0
        %3058 = vmatpush.msra.mxu0 0.0
        %3059 = vmatpush.msra.mxu0 0.0
        %3060 = vmatpush.msra.mxu0 0.0
        %3061 = vmatpush.msra.mxu0 0.0
        %3062 = vmatpush.msra.mxu0 0.0
        %3063 = vmatpush.msra.mxu0 0.0
        %3064 = vmatpush.msra.mxu0 %v3039
        %3065 = vmatpush.msra.mxu0 %v3038
        %3066 = vmatpush.msra.mxu0 %v3037
        %3067 = vmatpush.msra.mxu0 %v3036
        %3068 = vmatmul.f32.gmra.mxu0 %v3048
        %v3069 = vpop.f32.mrf.mxu0
        %v3070 = vadd.f32 0.0, %v3069
        %3071 = vmatmul.f32.gmra.mxu0 %v3050
        %v3072 = vpop.f32.mrf.mxu0
        %v3073 = vadd.f32 0.0, %v3072
        %3074 = vdwg.mxu0
        %v3075 = vld [vmem:[#allocation6 + $0x80] sm:$0xf]
        %3077 = vset.pattern.permute.xlu0 64
        %3078 = vperm.xlu0 %3077, %v3075
        %v3079 = vpop.permute.xlu0 %3078
        %3081 = vrot.lane.b32.xlu0 %v3075, 96
        %v3082 = vpop.permute.xlu0 %3081
        %v3083 = vsel %vm240, %v3082, 0
        %3085 = vmatpush.msra.mxu0 0.0
        %3086 = vmatpush.msra.mxu0 0.0
        %3087 = vmatpush.msra.mxu0 0.0
        %3088 = vmatpush.msra.mxu0 0.0
        %3089 = vmatpush.msra.mxu0 0.0
        %3090 = vmatpush.msra.mxu0 0.0
        %3091 = vmatpush.msra.mxu0 0.0
        %3092 = vmatpush.msra.mxu0 0.0
        %3093 = vmatpush.msra.mxu0 0.0
        %3094 = vmatpush.msra.mxu0 0.0
        %3095 = vmatpush.msra.mxu0 0.0
        %3096 = vmatpush.msra.mxu0 0.0
        %3097 = vmatpush.msra.mxu0 0.0
        %3098 = vmatpush.msra.mxu0 0.0
        %3099 = vmatpush.msra.mxu0 %v3073
        %3100 = vmatpush.msra.mxu0 %v3070
        %3101 = vmatmul.f32.gmra.mxu0 %v3083
        %v3102 = vpop.f32.mrf.mxu0
        %v3103 = vadd.f32 %v3079, %v3102
        %3104 = vdwg.mxu0
        %vm3105 = vcmask 125952
        %3106 = vst.msk [vmem:[%s177] sm:$0xf] %vm3105, %v3103
        %s3107 = sand.u32 %s75, 1
        %s3108 = scalar_lea.sflag [#allocation5], %s3107
        %s3109 = sand.u32 %s75, 1
        %s3110 = smul.addr %s3109, 4
        %s3111 = scalar_lea.vmem [#allocation8], %s3110
        // Predicated region
        $region37: #{tpu_custom_call.1} parent=27 // pred_check
          %p3112 = pneg %p85
        $region38: #{tpu_custom_call.1} parent=27 // pred_check_branch
          %3114 = sbr.rel (%p3112) target = $region40
        $region39: #{tpu_custom_call.1} parent=27 // pred_region
          %3116 = vsyncadd %s3108, 0
          %s3117 = smul.addr %s20, 4
          %s3118 = scalar_lea.hbm %s2, %s3117
          %s3120 = sshll.u32 %s3111, 4
          %s3121 = int_to_ptr.vmem [resolvable:$true] %s3120
          %s3122 = sshll.u32 %s3118, 4
          %s3123 = int_to_ptr.hbm [resolvable:$true] %s3122
          %3125 = dma.vmem_to_hbm [thread:$0]  %s3121, 64, %s3123, %s3108
        $region40: #{tpu_custom_call.1} parent=27 // pred_fallthru
          _
      $region28: #{tpu_custom_call.1} parent=5 // pred_fallthru
        _
      %p3126 = scmp.le.s32.totalorder 2, %s15
      // Predicated region
      $region41: #{tpu_custom_call.1} parent=5 // pred_check
        %p3127 = pneg %p3126
      $region42: #{tpu_custom_call.1} parent=5 // pred_check_branch
        %3129 = sbr.rel (%p3127) target = $region44
      $region43: #{tpu_custom_call.1} parent=5 // pred_region
        %s3130 = ssub.s32 %s15, 2
        // Predicated region
        $region45: #{tpu_custom_call.1} parent=43 // pred_check
          %p3131 = pneg %p91
        $region46: #{tpu_custom_call.1} parent=43 // pred_check_branch
          %3133 = sbr.rel (%p3131) target = $region48
        $region47: #{tpu_custom_call.1} parent=43 // pred_region
          %s3134 = sand.u32 %s76, 1
          %s3135 = scalar_lea.sflag [#allocation5], %s3134
          %s3136 = sand.u32 %s76, 1
          %s3137 = smul.addr %s3136, 4
          %s3138 = scalar_lea.vmem [#allocation8], %s3137
          %3140 = dma.done %s3135, 64
        $region48: #{tpu_custom_call.1} parent=43 // pred_fallthru
          _
      $region44: #{tpu_custom_call.1} parent=5 // pred_fallthru
        _
    $region6: #{tpu_custom_call.1} parent=1 // loop_footer
      %s19 = sadd.s32 1, %s15
    $region7: #{tpu_custom_call.1} parent=1 // loop_footer_branch
      %14 = sbr.rel target = $region3
    $region8: #{tpu_custom_call.1} parent=1 // loop_exit
      _
    %3141 = vsyncpa [#allocation4], 1
    %s3142 = scalar_lea.sflag [#allocation4], 1
    %3143 = vsyncpa %s3142, 1
    %3144 = vsyncpa [#allocation7], 1
    %3145 = vsyncpa [#allocation5], 1
    %s3146 = scalar_lea.sflag [#allocation5], 1
    %3147 = vsyncpa %s3146, 1

</llo_original>
